<compile_context>
chip_gen: v7x
topology: tpu7x:2x2x1
jax: 0.10.0
libtpu: 0.0.40
codegen_flags: <defaults>
</compile_context>

<pallas_src>
import functools

import jax
import jax.numpy as jnp
from jax.experimental import pallas as pl
from jax.experimental.pallas import tpu as pltpu

_LANE = 128  # pad every feature dim to a multiple of 128 lanes


def _round_up(x, m):
    return (x + m - 1) // m * m


def _choose_tiles(n):
    """Pick (n_pad, tm, tk) for the A-stream grid.

    tk (contraction) is grown first; tm (rows) stays at 256 unless the graph is
    large, so the 'parallel' row axis keeps >= 2 tiles for v7x's two TCs.
    """
    if n <= 256:
        tk = 256
    elif n <= 512:
        tk = 512
    else:
        tk = 1024
    tm = 512 if n >= 4096 else 256
    n_pad = _round_up(n, max(tm, tk))
    return n_pad, tm, tk


@functools.lru_cache(maxsize=None)
def _vmem_limit_bytes():
    """Generation-aware scoped-VMEM cap (v7x: 64 MiB/TC, v5e/v6e: 128 MiB)."""
    default = 32 * 1024 * 1024
    try:
        cap = int(pltpu.get_tpu_info().vmem_capacity_bytes)
    except Exception:  # no TPU / API drift -> conservative, works everywhere
        return default
    return max(default, min(cap * 3 // 4, 100 * 1024 * 1024))


# ----------------------------------------------------------------------------
# Kernels
# ----------------------------------------------------------------------------
def _scaled_row_linear_kernel(x_ref, w_ref, dinv_ref, o_ref):
    """o[row_tile] = dinv[row_tile] * (x[row_tile] @ w)   (bf16 MXU, f32 acc)."""
    xw = jnp.dot(x_ref[...], w_ref[...], preferred_element_type=jnp.float32)
    o_ref[...] = (dinv_ref[...] * xw).astype(o_ref.dtype)


def _gcn_conv1_fused_kernel(tk, a_ref, act_ref, dinv_ref, b1_ref, w2_ref,
                            o_ref, acc_ref):
    """acc = sum_k (A+I)[i,k] @ act[k]  (act = dinv * (X@W1), VMEM-resident)
    finalize: h1 = relu(dinv*acc + b1); o = (dinv*h1) @ W2  (conv2 activation)."""
    k = pl.program_id(1)

    @pl.when(k == 0)
    def _():
        acc_ref[...] = jnp.zeros_like(acc_ref)

    start = pl.multiple_of(k * tk, tk)
    acc_ref[...] += jnp.dot(a_ref[...], act_ref[pl.ds(start, tk), :],
                            preferred_element_type=jnp.float32)

    @pl.when(k == pl.num_programs(1) - 1)
    def _():
        h1 = jnp.maximum(dinv_ref[...] * acc_ref[...] + b1_ref[...], 0.0)
        # TODO(synk): F.dropout(p=0.5) modelled in eval mode (identity);
        # training-mode dropout would mask h1 here via pltpu.prng_random_bits.
        o_ref[...] = jnp.dot((dinv_ref[...] * h1).astype(jnp.bfloat16),
                             w2_ref[...],
                             preferred_element_type=jnp.float32
                             ).astype(o_ref.dtype)


def _gcn_conv2_blend_kernel(tk, a_ref, act_ref, dinv_ref, b2_ref, kp_ref,
                            wk_ref, bk_ref, alpha_ref, o_ref, acc_ref):
    """acc = sum_k (A+I)[i,k] @ act[k]  (act = dinv * (h1@W2), VMEM-resident)
    finalize: out = alpha*(dinv*acc + b2) + (1-alpha)*(K@Wk + bk)."""
    k = pl.program_id(1)

    @pl.when(k == 0)
    def _():
        acc_ref[...] = jnp.zeros_like(acc_ref)

    start = pl.multiple_of(k * tk, tk)
    acc_ref[...] += jnp.dot(a_ref[...], act_ref[pl.ds(start, tk), :],
                            preferred_element_type=jnp.float32)

    @pl.when(k == pl.num_programs(1) - 1)
    def _():
        x2 = dinv_ref[...] * acc_ref[...] + b2_ref[...]
        kt = jnp.dot(kp_ref[...], wk_ref[...],
                     preferred_element_type=jnp.float32) + bk_ref[...]
        alpha = alpha_ref[0, 0]
        o_ref[...] = (alpha * x2 + (1.0 - alpha) * kt).astype(o_ref.dtype)


# ----------------------------------------------------------------------------
# pallas_call wrappers
# ----------------------------------------------------------------------------
def _scaled_row_linear(x, w, dinv, out_dtype, tm):
    n, d_in = x.shape
    d_out = w.shape[1]
    return pl.pallas_call(
        _scaled_row_linear_kernel,
        out_shape=jax.ShapeDtypeStruct((n, d_out), out_dtype),
        grid_spec=pltpu.PrefetchScalarGridSpec(
            num_scalar_prefetch=0,
            grid=(n // tm,),
            in_specs=[
                pl.BlockSpec((tm, d_in), lambda i: (i, 0)),
                pl.BlockSpec((d_in, d_out), lambda i: (0, 0)),
                pl.BlockSpec((tm, 1), lambda i: (i, 0)),
            ],
            out_specs=pl.BlockSpec((tm, d_out), lambda i: (i, 0)),
        ),
        compiler_params=pltpu.CompilerParams(
            dimension_semantics=("parallel",),
            vmem_limit_bytes=_vmem_limit_bytes()),
    )(x, w, dinv)


def _gcn_conv1_fused(a_raw, act1, dinv, b1, w2, tm, tk):
    n = a_raw.shape[0]
    hid = act1.shape[1]
    d_out = w2.shape[1]
    kernel = functools.partial(_gcn_conv1_fused_kernel, tk)
    return pl.pallas_call(
        kernel,
        out_shape=jax.ShapeDtypeStruct((n, d_out), jnp.bfloat16),
        grid_spec=pltpu.PrefetchScalarGridSpec(
            num_scalar_prefetch=0,
            grid=(n // tm, n // tk),
            in_specs=[
                pl.BlockSpec((tm, tk), lambda i, k: (i, k)),      # (A+I) tile, bf16
                pl.BlockSpec((n, hid), lambda i, k: (0, 0)),      # resident dinv*(X@W1)
                pl.BlockSpec((tm, 1), lambda i, k: (i, 0)),       # dinv rows
                pl.BlockSpec((1, hid), lambda i, k: (0, 0)),      # b1
                pl.BlockSpec((hid, d_out), lambda i, k: (0, 0)),  # W2 (bf16)
            ],
            out_specs=pl.BlockSpec((tm, d_out), lambda i, k: (i, 0)),
            scratch_shapes=[pltpu.VMEM((tm, hid), jnp.float32)],
        ),
        compiler_params=pltpu.CompilerParams(
            dimension_semantics=("parallel", "arbitrary"),
            vmem_limit_bytes=_vmem_limit_bytes()),
    )(a_raw, act1, dinv, b1, w2)


def _gcn_conv2_blend(a_raw, act2, dinv, b2, kp, wk, bk, alpha, tm, tk):
    n = a_raw.shape[0]
    d_out = act2.shape[1]
    k_dim = kp.shape[1]
    kernel = functools.partial(_gcn_conv2_blend_kernel, tk)
    smem = pl.BlockSpec(memory_space=pltpu.MemorySpace.SMEM)
    return pl.pallas_call(
        kernel,
        out_shape=jax.ShapeDtypeStruct((n, d_out), jnp.float32),
        grid_spec=pltpu.PrefetchScalarGridSpec(
            num_scalar_prefetch=0,
            grid=(n // tm, n // tk),
            in_specs=[
                pl.BlockSpec((tm, tk), lambda i, k: (i, k)),       # (A+I) tile, bf16
                pl.BlockSpec((n, d_out), lambda i, k: (0, 0)),     # resident dinv*(h1@W2)
                pl.BlockSpec((tm, 1), lambda i, k: (i, 0)),        # dinv rows
                pl.BlockSpec((1, d_out), lambda i, k: (0, 0)),     # b2
                pl.BlockSpec((tm, k_dim), lambda i, k: (i, 0)),    # k_node_pred rows (bf16)
                pl.BlockSpec((k_dim, d_out), lambda i, k: (0, 0)), # Wk (bf16)
                pl.BlockSpec((1, d_out), lambda i, k: (0, 0)),     # bk
                smem,                                              # alpha scalar
            ],
            out_specs=pl.BlockSpec((tm, d_out), lambda i, k: (i, 0)),
            scratch_shapes=[pltpu.VMEM((tm, d_out), jnp.float32)],
        ),
        compiler_params=pltpu.CompilerParams(
            dimension_semantics=("parallel", "arbitrary"),
            vmem_limit_bytes=_vmem_limit_bytes()),
    )(a_raw, act2, dinv, b2, kp, wk, bk, alpha)


# ----------------------------------------------------------------------------
# Host-side glue
# ----------------------------------------------------------------------------
def _build_adj_and_dinv(edge_index, num_nodes):
    """Raw (A + I) in bf16 plus D^{-1/2}; normalization happens in-kernel.

    # TODO(synk): duplicate edges / pre-existing self-loops are handled
    # slightly differently than PyG's gcn_norm scatter-add (identical for a
    # clean edge list like the ring graph below).
    """
    src, dst = edge_index[0], edge_index[1]
    a = jnp.zeros((num_nodes, num_nodes), jnp.bfloat16)
    a = a.at[dst, src].set(1.0)                        # message j -> i
    a = a + jnp.eye(num_nodes, dtype=jnp.bfloat16)     # self loops
    deg = jnp.sum(a, axis=1, dtype=jnp.float32)        # f32 accumulation
    dinv = jnp.where(deg > 0, 1.0 / jnp.sqrt(deg), 0.0)
    return a, dinv


def _pad2d(x, rows, cols, dtype=None):
    dtype = dtype or x.dtype
    out = jnp.zeros((rows, cols), dtype)
    return out.at[:x.shape[0], :x.shape[1]].set(x.astype(dtype))


@jax.jit
def simple_gcn_encoder(graph_feature, k_node_pred, edge_index, params):
    n, in_dim = graph_feature.shape
    k_dim = k_node_pred.shape[1]
    hid_dim = params["w1"].shape[1]
    out_dim = params["w2"].shape[1]

    n_pad, tm, tk = _choose_tiles(n)
    in_pad = _round_up(in_dim, _LANE)
    hid_pad = _round_up(hid_dim, _LANE)
    out_pad = _round_up(out_dim, _LANE)
    k_pad = _round_up(k_dim, _LANE)

    # Raw (A + I) streamed in bf16; D^{-1/2} applied inside the kernels.
    a_raw, dinv = _build_adj_and_dinv(edge_index, n)
    a_raw = _pad2d(a_raw, n_pad, n_pad, jnp.bfloat16)
    dinv_p = jnp.zeros((n_pad, 1), jnp.float32).at[:n, 0].set(dinv)

    x = _pad2d(graph_feature, n_pad, in_pad, jnp.bfloat16)
    kp = _pad2d(k_node_pred, n_pad, k_pad, jnp.bfloat16)

    w1 = _pad2d(params["w1"], in_pad, hid_pad, jnp.bfloat16)
    b1 = _pad2d(params["b1"], 1, hid_pad, jnp.float32)
    w2 = _pad2d(params["w2"], hid_pad, out_pad, jnp.bfloat16)
    b2 = _pad2d(params["b2"], 1, out_pad, jnp.float32)
    wk = _pad2d(params["wk"], k_pad, out_pad, jnp.bfloat16)
    bk = _pad2d(params["bk"], 1, out_pad, jnp.float32)
    alpha = params["alpha"].reshape(1, 1).astype(jnp.float32)

    # ---- act1 = dinv * (X @ W1)   (column scaling of A_hat folded here) ----
    act1 = _scaled_row_linear(x, w1, dinv_p, jnp.bfloat16, tm)

    # ---- GCNConv1 + fused (dinv*relu(...)) @ W2  -> conv2 activation ----
    act2 = _gcn_conv1_fused(a_raw, act1, dinv_p, b1, w2, tm, tk)

    # ---- GCNConv2 + Linear(k_node_pred) + alpha blend (fused finalize) ----
    out = _gcn_conv2_blend(a_raw, act2, dinv_p, b2, kp, wk, bk, alpha, tm, tk)

    return out[:n, :out_dim]


def init_params(key, input_dim, hidden_dim, output_dim, k_dim):
    ks = jax.random.split(key, 4)
    scale = lambda fan_in: 1.0 / jnp.sqrt(jnp.float32(fan_in))
    return {
        "w1": jax.random.uniform(ks[0], (input_dim, hidden_dim), jnp.float32,
                                 -scale(input_dim), scale(input_dim)),
        "b1": jnp.zeros((1, hidden_dim), jnp.float32),
        "w2": jax.random.uniform(ks[1], (hidden_dim, output_dim), jnp.float32,
                                 -scale(hidden_dim), scale(hidden_dim)),
        "b2": jnp.zeros((1, output_dim), jnp.float32),
        "wk": jax.random.uniform(ks[2], (k_dim, output_dim), jnp.float32,
                                 -scale(k_dim), scale(k_dim)),
        "bk": jax.random.uniform(ks[3], (1, output_dim), jnp.float32,
                                 -scale(k_dim), scale(k_dim)),
        "alpha": jnp.full((1, 1), 0.5, jnp.float32),
    }


def _reference(graph_feature, k_node_pred, edge_index, params):
    """Pure-JAX f32 reference of the forward pass (inference mode)."""
    n = graph_feature.shape[0]
    src, dst = edge_index[0], edge_index[1]
    a = jnp.zeros((n, n), jnp.float32).at[dst, src].set(1.0)
    a = a + jnp.eye(n, dtype=jnp.float32)
    deg = jnp.sum(a, axis=1)
    dinv = jnp.where(deg > 0, 1.0 / jnp.sqrt(deg), 0.0)
    a_hat = dinv[:, None] * a * dinv[None, :]
    h1 = jnp.maximum(a_hat @ (graph_feature @ params["w1"]) + params["b1"], 0.0)
    x2 = a_hat @ (h1 @ params["w2"]) + params["b2"]
    kt = k_node_pred @ params["wk"] + params["bk"]
    alpha = params["alpha"][0, 0]
    return alpha * x2 + (1.0 - alpha) * kt


if __name__ == "__main__":
    N = 512           # nodes -> (2, 1) grid of (256, 512) A tiles, 2 row tiles
    INPUT_DIM = 16
    HIDDEN_DIM = 32
    OUTPUT_DIM = 16
    K_DIM = 8         # k_node_pred feature width

    key = jax.random.PRNGKey(0)
    k_feat, k_knode, k_params = jax.random.split(key, 3)

    graph_feature = jax.random.normal(k_feat, (N, INPUT_DIM), jnp.float32)
    k_node_pred = jax.random.normal(k_knode, (N, K_DIM), jnp.float32)
    # simple ring graph (both directions)
    src = jnp.arange(N, dtype=jnp.int32)
    dst = (src + 1) % N
    edge_index = jnp.stack([jnp.concatenate([src, dst]),
                            jnp.concatenate([dst, src])], axis=0)

    params = init_params(k_params, INPUT_DIM, HIDDEN_DIM, OUTPUT_DIM, K_DIM)

    out = simple_gcn_encoder(graph_feature, k_node_pred, edge_index, params)
    jax.block_until_ready(out)

    assert out.shape == (N, OUTPUT_DIM) and out.dtype == jnp.float32
    assert bool(jnp.all(jnp.isfinite(out)))

    # loose tolerance: A+I / activations / side matmuls run in bf16 by design
    ref = _reference(graph_feature, k_node_pred, edge_index, params)
    max_err = float(jnp.max(jnp.abs(out - ref)))
    assert max_err < 0.1, f"max abs error vs reference too large: {max_err}"

    print("KERNEL_OK")
</pallas_src>

<mosaic_0001>
module attributes {stable_mosaic.version = 11 : i64} {
  func.func @_scaled_row_linear_kernel(%arg0: i32, %arg1: memref<256x128xbf16, #tpu.memory_space<vmem>>, %arg2: memref<128x128xbf16, #tpu.memory_space<vmem>>, %arg3: memref<256x1xf32, #tpu.memory_space<vmem>>, %arg4: memref<256x128xbf16, #tpu.memory_space<vmem>>) attributes {dimension_semantics = [#tpu.dimension_semantics<parallel>], iteration_bounds = array<i64: 2>, scalar_prefetch = 0 : i64, scratch_operands = 0 : i64, tpu.core_type = #tpu.core_type<tc>, window_params = [{transform_indices = @transform_0, window_bounds = array<i64: 256, 128>}, {pipeline_mode = #tpu.pipeline_mode<synchronous>, transform_indices = @transform_1, window_bounds = array<i64: 128, 128>}, {transform_indices = @transform_2, window_bounds = array<i64: 256, 1>}, {transform_indices = @transform_3, window_bounds = array<i64: 256, 128>}]} {
    %c0 = arith.constant 0 : index
    %c0_0 = arith.constant 0 : index
    %0 = vector.load %arg1[%c0, %c0_0] : memref<256x128xbf16, #tpu.memory_space<vmem>>, vector<256x128xbf16>
    %c0_1 = arith.constant 0 : index
    %c0_2 = arith.constant 0 : index
    %1 = vector.load %arg2[%c0_1, %c0_2] : memref<128x128xbf16, #tpu.memory_space<vmem>>, vector<128x128xbf16>
    %cst = arith.constant dense<0.000000e+00> : vector<256x128xf32>
    %2 = tpu.matmul %0, %1, %cst {dimension_numbers = #tpu.dot_dimension_numbers<[1], [0], [0], [1], [0, 0, 1, 1], [], []>} : vector<256x128xbf16>, vector<128x128xbf16>, vector<256x128xf32> -> vector<256x128xf32>
    %c0_3 = arith.constant 0 : index
    %c0_4 = arith.constant 0 : index
    %3 = vector.load %arg3[%c0_3, %c0_4] : memref<256x1xf32, #tpu.memory_space<vmem>>, vector<256x1xf32>
    %4 = vector.broadcast %3 : vector<256x1xf32> to vector<256x128xf32>
    %5 = arith.mulf %4, %2 : vector<256x128xf32>
    %6 = arith.truncf %5 : vector<256x128xf32> to vector<256x128xbf16>
    %c0_5 = arith.constant 0 : index
    %c0_6 = arith.constant 0 : index
    %7 = vector.load %arg4[%c0_5, %c0_6] : memref<256x128xbf16, #tpu.memory_space<vmem>>, vector<256x128xbf16>
    tpu.vector_store %arg4[%c0_5, %c0_6], %6 {strides = array<i32>} : memref<256x128xbf16, #tpu.memory_space<vmem>>, vector<256x128xbf16>,
    return
  }
  func.func @transform_0(%arg0: i32) -> (i32, i32) {
    %c0_i32 = arith.constant 0 : i32
    %c0_i32_0 = arith.constant 0 : i32
    return %arg0, %c0_i32 : i32, i32
  }
  func.func @transform_1(%arg0: i32) -> (i32, i32) {
    %c0_i32 = arith.constant 0 : i32
    %c0_i32_0 = arith.constant 0 : i32
    %c0_i32_1 = arith.constant 0 : i32
    return %c0_i32, %c0_i32_0 : i32, i32
  }
  func.func @transform_2(%arg0: i32) -> (i32, i32) {
    %c0_i32 = arith.constant 0 : i32
    %c0_i32_0 = arith.constant 0 : i32
    return %arg0, %c0_i32 : i32, i32
  }
  func.func @transform_3(%arg0: i32) -> (i32, i32) {
    %c0_i32 = arith.constant 0 : i32
    %c0_i32_0 = arith.constant 0 : i32
    return %arg0, %c0_i32 : i32, i32
  }
}

module attributes {stable_mosaic.version = 11 : i64} {
  func.func @_gcn_conv1_fused_kernel(%arg0: i32, %arg1: i32, %arg2: memref<256x512xbf16, #tpu.memory_space<vmem>>, %arg3: memref<512x128xbf16, #tpu.memory_space<vmem>>, %arg4: memref<256x1xf32, #tpu.memory_space<vmem>>, %arg5: memref<1x128xf32, #tpu.memory_space<vmem>>, %arg6: memref<128x128xbf16, #tpu.memory_space<vmem>>, %arg7: memref<256x128xbf16, #tpu.memory_space<vmem>>, %arg8: memref<256x128xf32, #tpu.memory_space<vmem>>) attributes {dimension_semantics = [#tpu.dimension_semantics<parallel>, #tpu.dimension_semantics<arbitrary>], iteration_bounds = array<i64: 2, 1>, scalar_prefetch = 0 : i64, scratch_operands = 1 : i64, tpu.core_type = #tpu.core_type<tc>, window_params = [{transform_indices = @transform_0, window_bounds = array<i64: 256, 512>}, {pipeline_mode = #tpu.pipeline_mode<synchronous>, transform_indices = @transform_1, window_bounds = array<i64: 512, 128>}, {transform_indices = @transform_2, window_bounds = array<i64: 256, 1>}, {pipeline_mode = #tpu.pipeline_mode<synchronous>, transform_indices = @transform_3, window_bounds = array<i64: 1, 128>}, {pipeline_mode = #tpu.pipeline_mode<synchronous>, transform_indices = @transform_4, window_bounds = array<i64: 128, 128>}, {transform_indices = @transform_5, window_bounds = array<i64: 256, 128>}]} {
    %c0_i32 = arith.constant 0 : i32
    %0 = arith.cmpi eq, %arg1, %c0_i32 : i32
    %1 = arith.extui %0 : i1 to i32
    %c0_i32_0 = arith.constant 0 : i32
    %2 = arith.cmpi ne, %1, %c0_i32_0 : i32
    scf.if %2 {
      %cst_9 = arith.constant 0.000000e+00 : f32
      %15 = vector.broadcast %cst_9 : f32 to vector<256x128xf32>
      %c0_10 = arith.constant 0 : index
      %c0_11 = arith.constant 0 : index
      %16 = vector.load %arg8[%c0_10, %c0_11] : memref<256x128xf32, #tpu.memory_space<vmem>>, vector<256x128xf32>
      tpu.vector_store %arg8[%c0_10, %c0_11], %15 {strides = array<i32>} : memref<256x128xf32, #tpu.memory_space<vmem>>, vector<256x128xf32>,
    } else {
    }
    %c512_i32 = arith.constant 512 : i32
    %3 = arith.muli %arg1, %c512_i32 : i32
    %4 = tpu.assume_multiple %3, 512 : i32
    %c0 = arith.constant 0 : index
    %c0_1 = arith.constant 0 : index
    %5 = vector.load %arg8[%c0, %c0_1] : memref<256x128xf32, #tpu.memory_space<vmem>>, vector<256x128xf32>
    %c0_2 = arith.constant 0 : index
    %c0_3 = arith.constant 0 : index
    %6 = vector.load %arg2[%c0_2, %c0_3] : memref<256x512xbf16, #tpu.memory_space<vmem>>, vector<256x512xbf16>
    %7 = arith.index_cast %4 : i32 to index
    %c0_4 = arith.constant 0 : index
    %8 = vector.load %arg3[%7, %c0_4] : memref<512x128xbf16, #tpu.memory_space<vmem>>, vector<512x128xbf16>
    %cst = arith.constant dense<0.000000e+00> : vector<256x128xf32>
    %9 = tpu.matmul %6, %8, %cst {dimension_numbers = #tpu.dot_dimension_numbers<[1], [0], [0], [1], [0, 0, 1, 1], [], []>} : vector<256x512xbf16>, vector<512x128xbf16>, vector<256x128xf32> -> vector<256x128xf32>
    %10 = arith.addf %5, %9 : vector<256x128xf32>
    %c0_5 = arith.constant 0 : index
    %c0_6 = arith.constant 0 : index
    %11 = vector.load %arg8[%c0_5, %c0_6] : memref<256x128xf32, #tpu.memory_space<vmem>>, vector<256x128xf32>
    tpu.vector_store %arg8[%c0_5, %c0_6], %10 {strides = array<i32>} : memref<256x128xf32, #tpu.memory_space<vmem>>, vector<256x128xf32>,
    %c0_i32_7 = arith.constant 0 : i32
    %12 = arith.cmpi eq, %arg1, %c0_i32_7 : i32
    %13 = arith.extui %12 : i1 to i32
    %c0_i32_8 = arith.constant 0 : i32
    %14 = arith.cmpi ne, %13, %c0_i32_8 : i32
    scf.if %14 {
      %c0_9 = arith.constant 0 : index
      %c0_10 = arith.constant 0 : index
      %15 = vector.load %arg4[%c0_9, %c0_10] : memref<256x1xf32, #tpu.memory_space<vmem>>, vector<256x1xf32>
      %c0_11 = arith.constant 0 : index
      %c0_12 = arith.constant 0 : index
      %16 = vector.load %arg8[%c0_11, %c0_12] : memref<256x128xf32, #tpu.memory_space<vmem>>, vector<256x128xf32>
      %17 = vector.broadcast %15 : vector<256x1xf32> to vector<256x128xf32>
      %18 = arith.mulf %17, %16 : vector<256x128xf32>
      %c0_13 = arith.constant 0 : index
      %c0_14 = arith.constant 0 : index
      %19 = vector.load %arg5[%c0_13, %c0_14] : memref<1x128xf32, #tpu.memory_space<vmem>>, vector<1x128xf32>
      %20 = vector.broadcast %19 : vector<1x128xf32> to vector<256x128xf32>
      %21 = arith.addf %18, %20 : vector<256x128xf32>
      %cst_15 = arith.constant 0.000000e+00 : f32
      %22 = vector.broadcast %cst_15 : f32 to vector<256x128xf32>
      %23 = arith.maximumf %21, %22 : vector<256x128xf32>
      %c0_16 = arith.constant 0 : index
      %c0_17 = arith.constant 0 : index
      %24 = vector.load %arg4[%c0_16, %c0_17] : memref<256x1xf32, #tpu.memory_space<vmem>>, vector<256x1xf32>
      %25 = vector.broadcast %24 : vector<256x1xf32> to vector<256x128xf32>
      %26 = arith.mulf %25, %23 : vector<256x128xf32>
      %27 = arith.truncf %26 : vector<256x128xf32> to vector<256x128xbf16>
      %c0_18 = arith.constant 0 : index
      %c0_19 = arith.constant 0 : index
      %28 = vector.load %arg6[%c0_18, %c0_19] : memref<128x128xbf16, #tpu.memory_space<vmem>>, vector<128x128xbf16>
      %cst_20 = arith.constant dense<0.000000e+00> : vector<256x128xf32>
      %29 = tpu.matmul %27, %28, %cst_20 {dimension_numbers = #tpu.dot_dimension_numbers<[1], [0], [0], [1], [0, 0, 1, 1], [], []>} : vector<256x128xbf16>, vector<128x128xbf16>, vector<256x128xf32> -> vector<256x128xf32>
      %30 = arith.truncf %29 : vector<256x128xf32> to vector<256x128xbf16>
      %c0_21 = arith.constant 0 : index
      %c0_22 = arith.constant 0 : index
      %31 = vector.load %arg7[%c0_21, %c0_22] : memref<256x128xbf16, #tpu.memory_space<vmem>>, vector<256x128xbf16>
      tpu.vector_store %arg7[%c0_21, %c0_22], %30 {strides = array<i32>} : memref<256x128xbf16, #tpu.memory_space<vmem>>, vector<256x128xbf16>,
    } else {
    }
    return
  }
  func.func @transform_0(%arg0: i32, %arg1: i32) -> (i32, i32) {
    %c0_i32 = arith.constant 0 : i32
    return %arg0, %arg1 : i32, i32
  }
  func.func @transform_1(%arg0: i32, %arg1: i32) -> (i32, i32) {
    %c0_i32 = arith.constant 0 : i32
    %c0_i32_0 = arith.constant 0 : i32
    %c0_i32_1 = arith.constant 0 : i32
    return %c0_i32, %c0_i32_0 : i32, i32
  }
  func.func @transform_2(%arg0: i32, %arg1: i32) -> (i32, i32) {
    %c0_i32 = arith.constant 0 : i32
    %c0_i32_0 = arith.constant 0 : i32
    return %arg0, %c0_i32 : i32, i32
  }
  func.func @transform_3(%arg0: i32, %arg1: i32) -> (i32, i32) {
    %c0_i32 = arith.constant 0 : i32
    %c0_i32_0 = arith.constant 0 : i32
    %c0_i32_1 = arith.constant 0 : i32
    return %c0_i32, %c0_i32_0 : i32, i32
  }
  func.func @transform_4(%arg0: i32, %arg1: i32) -> (i32, i32) {
    %c0_i32 = arith.constant 0 : i32
    %c0_i32_0 = arith.constant 0 : i32
    %c0_i32_1 = arith.constant 0 : i32
    return %c0_i32, %c0_i32_0 : i32, i32
  }
  func.func @transform_5(%arg0: i32, %arg1: i32) -> (i32, i32) {
    %c0_i32 = arith.constant 0 : i32
    %c0_i32_0 = arith.constant 0 : i32
    return %arg0, %c0_i32 : i32, i32
  }
}

module attributes {stable_mosaic.version = 11 : i64} {
  func.func @_gcn_conv2_blend_kernel(%arg0: i32, %arg1: i32, %arg2: memref<256x512xbf16, #tpu.memory_space<vmem>>, %arg3: memref<512x128xbf16, #tpu.memory_space<vmem>>, %arg4: memref<256x1xf32, #tpu.memory_space<vmem>>, %arg5: memref<1x128xf32, #tpu.memory_space<vmem>>, %arg6: memref<256x128xbf16, #tpu.memory_space<vmem>>, %arg7: memref<128x128xbf16, #tpu.memory_space<vmem>>, %arg8: memref<1x128xf32, #tpu.memory_space<vmem>>, %arg9: memref<1x1xf32, #tpu.memory_space<smem>>, %arg10: memref<256x128xf32, #tpu.memory_space<vmem>>, %arg11: memref<256x128xf32, #tpu.memory_space<vmem>>) attributes {dimension_semantics = [#tpu.dimension_semantics<parallel>, #tpu.dimension_semantics<arbitrary>], iteration_bounds = array<i64: 2, 1>, scalar_prefetch = 0 : i64, scratch_operands = 1 : i64, tpu.core_type = #tpu.core_type<tc>, window_params = [{transform_indices = @transform_0, window_bounds = array<i64: 256, 512>}, {pipeline_mode = #tpu.pipeline_mode<synchronous>, transform_indices = @transform_1, window_bounds = array<i64: 512, 128>}, {transform_indices = @transform_2, window_bounds = array<i64: 256, 1>}, {pipeline_mode = #tpu.pipeline_mode<synchronous>, transform_indices = @transform_3, window_bounds = array<i64: 1, 128>}, {transform_indices = @transform_4, window_bounds = array<i64: 256, 128>}, {pipeline_mode = #tpu.pipeline_mode<synchronous>, transform_indices = @transform_5, window_bounds = array<i64: 128, 128>}, {pipeline_mode = #tpu.pipeline_mode<synchronous>, transform_indices = @transform_6, window_bounds = array<i64: 1, 128>}, {transform_indices = @transform_7, window_bounds = array<i64: 1, 1>}, {transform_indices = @transform_8, window_bounds = array<i64: 256, 128>}]} {
    %c0_i32 = arith.constant 0 : i32
    %0 = arith.cmpi eq, %arg1, %c0_i32 : i32
    %1 = arith.extui %0 : i1 to i32
    %c0_i32_0 = arith.constant 0 : i32
    %2 = arith.cmpi ne, %1, %c0_i32_0 : i32
    scf.if %2 {
      %cst_9 = arith.constant 0.000000e+00 : f32
      %15 = vector.broadcast %cst_9 : f32 to vector<256x128xf32>
      %c0_10 = arith.constant 0 : index
      %c0_11 = arith.constant 0 : index
      %16 = vector.load %arg11[%c0_10, %c0_11] : memref<256x128xf32, #tpu.memory_space<vmem>>, vector<256x128xf32>
      tpu.vector_store %arg11[%c0_10, %c0_11], %15 {strides = array<i32>} : memref<256x128xf32, #tpu.memory_space<vmem>>, vector<256x128xf32>,
    } else {
    }
    %c512_i32 = arith.constant 512 : i32
    %3 = arith.muli %arg1, %c512_i32 : i32
    %4 = tpu.assume_multiple %3, 512 : i32
    %c0 = arith.constant 0 : index
    %c0_1 = arith.constant 0 : index
    %5 = vector.load %arg11[%c0, %c0_1] : memref<256x128xf32, #tpu.memory_space<vmem>>, vector<256x128xf32>
    %c0_2 = arith.constant 0 : index
    %c0_3 = arith.constant 0 : index
    %6 = vector.load %arg2[%c0_2, %c0_3] : memref<256x512xbf16, #tpu.memory_space<vmem>>, vector<256x512xbf16>
    %7 = arith.index_cast %4 : i32 to index
    %c0_4 = arith.constant 0 : index
    %8 = vector.load %arg3[%7, %c0_4] : memref<512x128xbf16, #tpu.memory_space<vmem>>, vector<512x128xbf16>
    %cst = arith.constant dense<0.000000e+00> : vector<256x128xf32>
    %9 = tpu.matmul %6, %8, %cst {dimension_numbers = #tpu.dot_dimension_numbers<[1], [0], [0], [1], [0, 0, 1, 1], [], []>} : vector<256x512xbf16>, vector<512x128xbf16>, vector<256x128xf32> -> vector<256x128xf32>
    %10 = arith.addf %5, %9 : vector<256x128xf32>
    %c0_5 = arith.constant 0 : index
    %c0_6 = arith.constant 0 : index
    %11 = vector.load %arg11[%c0_5, %c0_6] : memref<256x128xf32, #tpu.memory_space<vmem>>, vector<256x128xf32>
    tpu.vector_store %arg11[%c0_5, %c0_6], %10 {strides = array<i32>} : memref<256x128xf32, #tpu.memory_space<vmem>>, vector<256x128xf32>,
    %c0_i32_7 = arith.constant 0 : i32
    %12 = arith.cmpi eq, %arg1, %c0_i32_7 : i32
    %13 = arith.extui %12 : i1 to i32
    %c0_i32_8 = arith.constant 0 : i32
    %14 = arith.cmpi ne, %13, %c0_i32_8 : i32
    scf.if %14 {
      %c0_9 = arith.constant 0 : index
      %c0_10 = arith.constant 0 : index
      %15 = vector.load %arg4[%c0_9, %c0_10] : memref<256x1xf32, #tpu.memory_space<vmem>>, vector<256x1xf32>
      %c0_11 = arith.constant 0 : index
      %c0_12 = arith.constant 0 : index
      %16 = vector.load %arg11[%c0_11, %c0_12] : memref<256x128xf32, #tpu.memory_space<vmem>>, vector<256x128xf32>
      %17 = vector.broadcast %15 : vector<256x1xf32> to vector<256x128xf32>
      %18 = arith.mulf %17, %16 : vector<256x128xf32>
      %c0_13 = arith.constant 0 : index
      %c0_14 = arith.constant 0 : index
      %19 = vector.load %arg5[%c0_13, %c0_14] : memref<1x128xf32, #tpu.memory_space<vmem>>, vector<1x128xf32>
      %20 = vector.broadcast %19 : vector<1x128xf32> to vector<256x128xf32>
      %21 = arith.addf %18, %20 : vector<256x128xf32>
      %c0_15 = arith.constant 0 : index
      %c0_16 = arith.constant 0 : index
      %22 = vector.load %arg6[%c0_15, %c0_16] : memref<256x128xbf16, #tpu.memory_space<vmem>>, vector<256x128xbf16>
      %c0_17 = arith.constant 0 : index
      %c0_18 = arith.constant 0 : index
      %23 = vector.load %arg7[%c0_17, %c0_18] : memref<128x128xbf16, #tpu.memory_space<vmem>>, vector<128x128xbf16>
      %cst_19 = arith.constant dense<0.000000e+00> : vector<256x128xf32>
      %24 = tpu.matmul %22, %23, %cst_19 {dimension_numbers = #tpu.dot_dimension_numbers<[1], [0], [0], [1], [0, 0, 1, 1], [], []>} : vector<256x128xbf16>, vector<128x128xbf16>, vector<256x128xf32> -> vector<256x128xf32>
      %c0_20 = arith.constant 0 : index
      %c0_21 = arith.constant 0 : index
      %25 = vector.load %arg8[%c0_20, %c0_21] : memref<1x128xf32, #tpu.memory_space<vmem>>, vector<1x128xf32>
      %26 = vector.broadcast %25 : vector<1x128xf32> to vector<256x128xf32>
      %27 = arith.addf %24, %26 : vector<256x128xf32>
      %c0_22 = arith.constant 0 : index
      %c0_23 = arith.constant 0 : index
      %28 = memref.load %arg9[%c0_22, %c0_23] : memref<1x1xf32, #tpu.memory_space<smem>>
      %29 = vector.broadcast %28 : f32 to vector<256x128xf32>
      %30 = arith.mulf %29, %21 : vector<256x128xf32>
      %cst_24 = arith.constant 1.000000e+00 : f32
      %31 = arith.subf %cst_24, %28 : f32
      %32 = vector.broadcast %31 : f32 to vector<256x128xf32>
      %33 = arith.mulf %32, %27 : vector<256x128xf32>
      %34 = arith.addf %30, %33 : vector<256x128xf32>
      %c0_25 = arith.constant 0 : index
      %c0_26 = arith.constant 0 : index
      %35 = vector.load %arg10[%c0_25, %c0_26] : memref<256x128xf32, #tpu.memory_space<vmem>>, vector<256x128xf32>
      tpu.vector_store %arg10[%c0_25, %c0_26], %34 {strides = array<i32>} : memref<256x128xf32, #tpu.memory_space<vmem>>, vector<256x128xf32>,
    } else {
    }
    return
  }
  func.func @transform_0(%arg0: i32, %arg1: i32) -> (i32, i32) {
    %c0_i32 = arith.constant 0 : i32
    return %arg0, %arg1 : i32, i32
  }
  func.func @transform_1(%arg0: i32, %arg1: i32) -> (i32, i32) {
    %c0_i32 = arith.constant 0 : i32
    %c0_i32_0 = arith.constant 0 : i32
    %c0_i32_1 = arith.constant 0 : i32
    return %c0_i32, %c0_i32_0 : i32, i32
  }
  func.func @transform_2(%arg0: i32, %arg1: i32) -> (i32, i32) {
    %c0_i32 = arith.constant 0 : i32
    %c0_i32_0 = arith.constant 0 : i32
    return %arg0, %c0_i32 : i32, i32
  }
  func.func @transform_3(%arg0: i32, %arg1: i32) -> (i32, i32) {
    %c0_i32 = arith.constant 0 : i32
    %c0_i32_0 = arith.constant 0 : i32
    %c0_i32_1 = arith.constant 0 : i32
    return %c0_i32, %c0_i32_0 : i32, i32
  }
  func.func @transform_4(%arg0: i32, %arg1: i32) -> (i32, i32) {
    %c0_i32 = arith.constant 0 : i32
    %c0_i32_0 = arith.constant 0 : i32
    return %arg0, %c0_i32 : i32, i32
  }
  func.func @transform_5(%arg0: i32, %arg1: i32) -> (i32, i32) {
    %c0_i32 = arith.constant 0 : i32
    %c0_i32_0 = arith.constant 0 : i32
    %c0_i32_1 = arith.constant 0 : i32
    return %c0_i32, %c0_i32_0 : i32, i32
  }
  func.func @transform_6(%arg0: i32, %arg1: i32) -> (i32, i32) {
    %c0_i32 = arith.constant 0 : i32
    %c0_i32_0 = arith.constant 0 : i32
    %c0_i32_1 = arith.constant 0 : i32
    return %c0_i32, %c0_i32_0 : i32, i32
  }
  func.func @transform_7(%arg0: i32, %arg1: i32) -> (i32, i32) {
    %c0_i32 = arith.constant 0 : i32
    %c0_i32_0 = arith.constant 0 : i32
    %c0_i32_1 = arith.constant 0 : i32
    return %c0_i32, %c0_i32_0 : i32, i32
  }
  func.func @transform_8(%arg0: i32, %arg1: i32) -> (i32, i32) {
    %c0_i32 = arith.constant 0 : i32
    %c0_i32_0 = arith.constant 0 : i32
    return %arg0, %c0_i32 : i32, i32
  }
}

</mosaic_0001>

<llo_original>
// kernel: simple_gcn_encoder.3
$region0: #{simple_gcn_encoder.3}
  #allocation0 [shape = 'u32[]', space=smem, size = 0x4, offset = 0x4, fixed_abs, tag = 'smem constant byte address 0x4 - core index']
  #allocation1 [shape = 'u32[144,128]{1,0:T(1,128)}', space=vmem, size = 0x12000, scoped, tag = 'internal scratch']
  %s0 = inlined_call_operand.vmem [shape: bf16[512,128], index: 0, kind: input, shape index: {}]
  %s1 = inlined_call_operand.vmem [shape: bf16[128,128], index: 1, kind: input, shape index: {}]
  %s2 = inlined_call_operand.vmem [shape: f32[512,1], index: 2, kind: input, shape index: {}]
  %s3 = inlined_call_operand.vmem [shape: bf16[512,128], index: 3, kind: output, shape index: {}]
  %s4 = sld [smem:[#allocation0]]
  $region45: #{simple_gcn_encoder.3} parent=0
    _
  %s6 = ssub.s32 1, %s4
  %s7 = scalar_select 0, %s6, %s4
  loop: start=0, step=1, limit=4
  $region2: #{simple_gcn_encoder.3} parent=0 // loop_pre_header
    _
  $region3: #{simple_gcn_encoder.3} parent=0 // loop_header
    %s9 = sphi 0, %s13
    %p10 = scmp.ge.s32.totalorder %s9, 4
    %s19 = sphi 0, %s21
    %s22 = sphi 0, %s19
    %s23 = sphi 0, %s22
    %s39 = sphi 0, %s23
    %s43 = sphi 0, %s43
    %s45 = sphi 0, %s43
    %s46 = sphi 0, %s45
    %s60 = sphi 0, %s46
    %s66 = sphi 0, %s68
    %s69 = sphi 0, %s66
    %s70 = sphi 0, %s69
    %s86 = sphi 0, %s70
    %s92 = sphi 0, %s94
    %s95 = sphi 0, %s92
    %s96 = sphi 0, %s95
    %s112 = sphi 0, %s96
  $region4: #{simple_gcn_encoder.3} parent=0 // loop_header_branch
    %12 = sbr.rel (%p10) target = $region8
  $region5: #{simple_gcn_encoder.3} parent=0 // loop_body
    %s14 = ssub.s32 %s9, 1
    %s15 = ssub.s32 %s9, 2
    %s16 = sadd.s32 %s9, 1
    %s17 = ssub.s32 %s9, %s16
    %p18 = scmp.eq.s32.totalorder %s17, 0
    %s20 = sadd.s32 %s19, 1
    %s21 = scalar_select %p18, %s19, %s20
    %p24 = pneg %p18
    %p25 = scmp.eq.s32.totalorder %s9, 1
    %p26 = por %p24, %p25
    %p27 = scmp.ne.s32.totalorder %s19, %s22
    %p28 = scmp.eq.s32.totalorder %s9, 0
    %p29 = por %p27, %p28
    %p30 = scmp.ne.s32.totalorder %s19, %s22
    %p31 = scmp.eq.s32.totalorder %s14, 1
    %p32 = por %p30, %p31
    %p33 = scmp.ne.s32.totalorder %s22, %s23
    %p34 = scmp.eq.s32.totalorder %s14, 0
    %p35 = por %p33, %p34
    %p36 = scmp.ne.s32.totalorder %s22, %s23
    %p37 = scmp.eq.s32.totalorder %s15, 1
    %p38 = por %p36, %p37
    %p40 = scmp.ne.s32.totalorder %s23, %s39
    %p41 = scmp.eq.s32.totalorder %s15, 0
    %p42 = por %p40, %p41
    %s44 = sadd.s32 %s43, 1
    %p47 = scmp.eq.s32.totalorder %s9, 1
    %p48 = scmp.ne.s32.totalorder %s43, %s45
    %p49 = scmp.eq.s32.totalorder %s9, 0
    %p50 = por %p48, %p49
    %p51 = scmp.ne.s32.totalorder %s43, %s45
    %p52 = scmp.eq.s32.totalorder %s14, 1
    %p53 = por %p51, %p52
    %p54 = scmp.ne.s32.totalorder %s45, %s46
    %p55 = scmp.eq.s32.totalorder %s14, 0
    %p56 = por %p54, %p55
    %p57 = scmp.ne.s32.totalorder %s45, %s46
    %p58 = scmp.eq.s32.totalorder %s15, 1
    %p59 = por %p57, %p58
    %p61 = scmp.ne.s32.totalorder %s46, %s60
    %p62 = scmp.eq.s32.totalorder %s15, 0
    %p63 = por %p61, %p62
    %s64 = ssub.s32 %s9, %s16
    %p65 = scmp.eq.s32.totalorder %s64, 0
    %s67 = sadd.s32 %s66, 1
    %s68 = scalar_select %p65, %s66, %s67
    %p71 = pneg %p65
    %p72 = scmp.eq.s32.totalorder %s9, 1
    %p73 = por %p71, %p72
    %p74 = scmp.ne.s32.totalorder %s66, %s69
    %p75 = scmp.eq.s32.totalorder %s9, 0
    %p76 = por %p74, %p75
    %p77 = scmp.ne.s32.totalorder %s66, %s69
    %p78 = scmp.eq.s32.totalorder %s14, 1
    %p79 = por %p77, %p78
    %p80 = scmp.ne.s32.totalorder %s69, %s70
    %p81 = scmp.eq.s32.totalorder %s14, 0
    %p82 = por %p80, %p81
    %p83 = scmp.ne.s32.totalorder %s69, %s70
    %p84 = scmp.eq.s32.totalorder %s15, 1
    %p85 = por %p83, %p84
    %p87 = scmp.ne.s32.totalorder %s70, %s86
    %p88 = scmp.eq.s32.totalorder %s15, 0
    %p89 = por %p87, %p88
    %s90 = ssub.s32 %s9, %s16
    %p91 = scmp.eq.s32.totalorder %s90, 0
    %s93 = sadd.s32 %s92, 1
    %s94 = scalar_select %p91, %s92, %s93
    %p97 = pneg %p91
    %p98 = scmp.eq.s32.totalorder %s9, 1
    %p99 = por %p97, %p98
    %p100 = scmp.ne.s32.totalorder %s92, %s95
    %p101 = scmp.eq.s32.totalorder %s9, 0
    %p102 = por %p100, %p101
    %p103 = scmp.ne.s32.totalorder %s92, %s95
    %p104 = scmp.eq.s32.totalorder %s14, 1
    %p105 = por %p103, %p104
    %p106 = scmp.ne.s32.totalorder %s95, %s96
    %p107 = scmp.eq.s32.totalorder %s14, 0
    %p108 = por %p106, %p107
    %p109 = scmp.ne.s32.totalorder %s95, %s96
    %p110 = scmp.eq.s32.totalorder %s15, 1
    %p111 = por %p109, %p110
    %p113 = scmp.ne.s32.totalorder %s96, %s112
    %p114 = scmp.eq.s32.totalorder %s15, 0
    %p115 = por %p113, %p114
    %p116 = scmp.le.s32.totalorder 1, %s9
    %p117 = scmp.lt.s32.totalorder %s9, 3
    %p118 = pnand %p116, %p117
    %p119 = pneg %p118
    // Predicated region
    $region9: #{simple_gcn_encoder.3} parent=5 // pred_check
      _
    $region10: #{simple_gcn_encoder.3} parent=5 // pred_check_branch
      %121 = sbr.rel (%p118) target = $region12
    $region11: #{simple_gcn_encoder.3} parent=5 // pred_region
      %s122 = ssub.s32 %s9, 1
      // Predicated region
      $region13: #{simple_gcn_encoder.3} parent=11 // pred_check
        %p123 = pneg %p56
      $region14: #{simple_gcn_encoder.3} parent=11 // pred_check_branch
        %125 = sbr.rel (%p123) target = $region16
      $region15: #{simple_gcn_encoder.3} parent=11 // pred_region
        _
      $region16: #{simple_gcn_encoder.3} parent=11 // pred_fallthru
        _
    $region12: #{simple_gcn_encoder.3} parent=5 // pred_fallthru
      _
    %p126 = scmp.lt.s32.totalorder %s9, 2
    // Predicated region
    $region17: #{simple_gcn_encoder.3} parent=5 // pred_check
      %p127 = pneg %p126
    $region18: #{simple_gcn_encoder.3} parent=5 // pred_check_branch
      %129 = sbr.rel (%p127) target = $region20
    $region19: #{simple_gcn_encoder.3} parent=5 // pred_region
      // Predicated region
      $region21: #{simple_gcn_encoder.3} parent=19 // pred_check
        %p130 = pneg %p29
      $region22: #{simple_gcn_encoder.3} parent=19 // pred_check_branch
        %132 = sbr.rel (%p130) target = $region24
      $region23: #{simple_gcn_encoder.3} parent=19 // pred_region
        %s133 = smul.u32 32, %s9
        %p134 = scmp.lt.s32.totalorder %s133, 63
        %s135 = scalar_select %p134, %s133, 63
        %s136 = smul.addr %s135, 4
        %s137 = scalar_lea.vmem %s0, %s136
        %s138 = smul.u32 32, %s9
      $region24: #{simple_gcn_encoder.3} parent=19 // pred_fallthru
        _
      // Predicated region
      $region25: #{simple_gcn_encoder.3} parent=19 // pred_check
        %p139 = pneg %p76
      $region26: #{simple_gcn_encoder.3} parent=19 // pred_check_branch
        %141 = sbr.rel (%p139) target = $region28
      $region27: #{simple_gcn_encoder.3} parent=19 // pred_region
        %s142 = smul.u32 32, %s9
        %p143 = scmp.lt.s32.totalorder %s142, 63
        %s144 = scalar_select %p143, %s142, 63
        %s145 = smul.addr %s144, 8
        %s146 = scalar_lea.vmem %s2, %s145
        %s147 = smul.u32 32, %s9
      $region28: #{simple_gcn_encoder.3} parent=19 // pred_fallthru
        _
    $region20: #{simple_gcn_encoder.3} parent=5 // pred_fallthru
      _
    %p148 = scmp.le.s32.totalorder 1, %s9
    %p149 = scmp.lt.s32.totalorder %s9, 3
    %p150 = pnand %p148, %p149
    %p151 = pneg %p150
    // Predicated region
    $region29: #{simple_gcn_encoder.3} parent=5 // pred_check
      _
    $region30: #{simple_gcn_encoder.3} parent=5 // pred_check_branch
      %153 = sbr.rel (%p150) target = $region32
    $region31: #{simple_gcn_encoder.3} parent=5 // pred_region
      %s154 = ssub.s32 %s9, 1
      %s155 = smul.u32 32, %s14
      %p156 = scmp.lt.s32.totalorder %s155, 63
      %s157 = scalar_select %p156, %s155, 63
      %s158 = smul.addr %s157, 4
      %s159 = scalar_lea.vmem %s0, %s158
      %p160 = pneg %p35
      %p161 = pneg %p32
      %p162 = pneg %p56
      %p163 = pneg %p53
      %s164 = smul.u32 32, %s14
      %p165 = scmp.lt.s32.totalorder %s164, 63
      %s166 = scalar_select %p165, %s164, 63
      %s167 = smul.addr %s166, 8
      %s168 = scalar_lea.vmem %s2, %s167
      %p169 = pneg %p82
      %p170 = pneg %p79
      %p171 = pneg %p108
      %p172 = pneg %p105
      %s173 = smul.u32 32, %s14
      %p174 = scmp.lt.s32.totalorder %s173, 63
      %s175 = scalar_select %p174, %s173, 63
      %s176 = smul.addr %s175, 4
      %s177 = scalar_lea.vmem %s3, %s176
      %s178 = smul.u32 32, %s14
      %p179 = scmp.lt.s32.totalorder %s178, 63
      %s180 = scalar_select %p179, %s178, 63
      %s181 = smul.addr %s180, 4
      %s182 = scalar_lea.vmem %s0, %s181
      %s183 = smul.u32 32, %s14
      %s184 = smul.u32 32, %s14
      %p185 = scmp.lt.s32.totalorder %s184, 63
      %s186 = scalar_select %p185, %s184, 63
      %s187 = smul.addr %s186, 8
      %s188 = scalar_lea.vmem %s2, %s187
      %s189 = smul.u32 32, %s14
      %s190 = smul.u32 32, %s14
      %p191 = scmp.lt.s32.totalorder %s190, 63
      %s192 = scalar_select %p191, %s190, 63
      %s193 = smul.addr %s192, 4
      %s194 = scalar_lea.vmem %s3, %s193
      %s195 = smul.u32 32, %s14
      %v197 = vld [vmem:[%s182] sm:$0xf]
      %v198 = vld [vmem:[%s182 + $0x4] sm:$0xf]
      %v199 = vld [vmem:[%s182 + $0x8] sm:$0xf]
      %v200 = vld [vmem:[%s182 + $0xc] sm:$0xf]
      %v201 = vld [vmem:[%s182 + $0x10] sm:$0xf]
      %v202 = vld [vmem:[%s182 + $0x14] sm:$0xf]
      %v203 = vld [vmem:[%s182 + $0x18] sm:$0xf]
      %v204 = vld [vmem:[%s182 + $0x1c] sm:$0xf]
      %v205 = vld [vmem:[%s182 + $0x20] sm:$0xf]
      %v206 = vld [vmem:[%s182 + $0x24] sm:$0xf]
      %v207 = vld [vmem:[%s182 + $0x28] sm:$0xf]
      %v208 = vld [vmem:[%s182 + $0x2c] sm:$0xf]
      %v209 = vld [vmem:[%s182 + $0x30] sm:$0xf]
      %v210 = vld [vmem:[%s182 + $0x34] sm:$0xf]
      %v211 = vld [vmem:[%s182 + $0x38] sm:$0xf]
      %v212 = vld [vmem:[%s182 + $0x3c] sm:$0xf]
      %v213 = vld [vmem:[%s182 + $0x40] sm:$0xf]
      %v214 = vld [vmem:[%s182 + $0x44] sm:$0xf]
      %v215 = vld [vmem:[%s182 + $0x48] sm:$0xf]
      %v216 = vld [vmem:[%s182 + $0x4c] sm:$0xf]
      %v217 = vld [vmem:[%s182 + $0x50] sm:$0xf]
      %v218 = vld [vmem:[%s182 + $0x54] sm:$0xf]
      %v219 = vld [vmem:[%s182 + $0x58] sm:$0xf]
      %v220 = vld [vmem:[%s182 + $0x5c] sm:$0xf]
      %v221 = vld [vmem:[%s182 + $0x60] sm:$0xf]
      %v222 = vld [vmem:[%s182 + $0x64] sm:$0xf]
      %v223 = vld [vmem:[%s182 + $0x68] sm:$0xf]
      %v224 = vld [vmem:[%s182 + $0x6c] sm:$0xf]
      %v225 = vld [vmem:[%s182 + $0x70] sm:$0xf]
      %v226 = vld [vmem:[%s182 + $0x74] sm:$0xf]
      %v227 = vld [vmem:[%s182 + $0x78] sm:$0xf]
      %v228 = vld [vmem:[%s182 + $0x7c] sm:$0xf]
      %v229 = vld [vmem:[%s1] sm:$0xf]
      %v230 = vld [vmem:[%s1 + $0x4] sm:$0xf]
      %v231 = vld [vmem:[%s1 + $0x8] sm:$0xf]
      %v232 = vld [vmem:[%s1 + $0xc] sm:$0xf]
      %v233 = vld [vmem:[%s1 + $0x10] sm:$0xf]
      %v234 = vld [vmem:[%s1 + $0x14] sm:$0xf]
      %v235 = vld [vmem:[%s1 + $0x18] sm:$0xf]
      %v236 = vld [vmem:[%s1 + $0x1c] sm:$0xf]
      %v237 = vld [vmem:[%s1 + $0x20] sm:$0xf]
      %v238 = vld [vmem:[%s1 + $0x24] sm:$0xf]
      %v239 = vld [vmem:[%s1 + $0x28] sm:$0xf]
      %v240 = vld [vmem:[%s1 + $0x2c] sm:$0xf]
      %v241 = vld [vmem:[%s1 + $0x30] sm:$0xf]
      %v242 = vld [vmem:[%s1 + $0x34] sm:$0xf]
      %v243 = vld [vmem:[%s1 + $0x38] sm:$0xf]
      %v244 = vld [vmem:[%s1 + $0x3c] sm:$0xf]
      %v277 = vunpack.c.l.b16 %v197
      %v278 = vunpack.c.l.b16 %v198
      %v279 = vunpack.c.l.b16 %v199
      %v280 = vunpack.c.l.b16 %v200
      %v281 = vunpack.c.l.b16 %v201
      %v282 = vunpack.c.l.b16 %v202
      %v283 = vunpack.c.l.b16 %v203
      %v284 = vunpack.c.l.b16 %v204
      %v285 = vunpack.c.l.b16 %v205
      %v286 = vunpack.c.l.b16 %v206
      %v287 = vunpack.c.l.b16 %v207
      %v288 = vunpack.c.l.b16 %v208
      %v289 = vunpack.c.l.b16 %v209
      %v290 = vunpack.c.l.b16 %v210
      %v291 = vunpack.c.l.b16 %v211
      %v292 = vunpack.c.l.b16 %v212
      %v293 = vunpack.c.l.b16 %v213
      %v294 = vunpack.c.l.b16 %v214
      %v295 = vunpack.c.l.b16 %v215
      %v296 = vunpack.c.l.b16 %v216
      %v297 = vunpack.c.l.b16 %v217
      %v298 = vunpack.c.l.b16 %v218
      %v299 = vunpack.c.l.b16 %v219
      %v300 = vunpack.c.l.b16 %v220
      %v301 = vunpack.c.l.b16 %v221
      %v302 = vunpack.c.l.b16 %v222
      %v303 = vunpack.c.l.b16 %v223
      %v304 = vunpack.c.l.b16 %v224
      %v305 = vunpack.c.l.b16 %v225
      %v306 = vunpack.c.l.b16 %v226
      %v307 = vunpack.c.l.b16 %v227
      %v308 = vunpack.c.l.b16 %v228
      %v309 = vpack.c.b16 %v278, %v277
      %v310 = vpack.c.b16 %v280, %v279
      %v311 = vpack.c.b16 %v282, %v281
      %v312 = vpack.c.b16 %v284, %v283
      %v313 = vpack.c.b16 %v286, %v285
      %v314 = vpack.c.b16 %v288, %v287
      %v315 = vpack.c.b16 %v290, %v289
      %v316 = vpack.c.b16 %v292, %v291
      %v317 = vpack.c.b16 %v294, %v293
      %v318 = vpack.c.b16 %v296, %v295
      %v319 = vpack.c.b16 %v298, %v297
      %v320 = vpack.c.b16 %v300, %v299
      %v321 = vpack.c.b16 %v302, %v301
      %v322 = vpack.c.b16 %v304, %v303
      %v323 = vpack.c.b16 %v306, %v305
      %v324 = vpack.c.b16 %v308, %v307
      %v357 = vunpack.c.l.b16 %v229
      %v358 = vunpack.c.l.b16 %v230
      %v359 = vunpack.c.l.b16 %v231
      %v360 = vunpack.c.l.b16 %v232
      %v361 = vunpack.c.l.b16 %v233
      %v362 = vunpack.c.l.b16 %v234
      %v363 = vunpack.c.l.b16 %v235
      %v364 = vunpack.c.l.b16 %v236
      %v365 = vunpack.c.l.b16 %v237
      %v366 = vunpack.c.l.b16 %v238
      %v367 = vunpack.c.l.b16 %v239
      %v368 = vunpack.c.l.b16 %v240
      %v369 = vunpack.c.l.b16 %v241
      %v370 = vunpack.c.l.b16 %v242
      %v371 = vunpack.c.l.b16 %v243
      %v372 = vunpack.c.l.b16 %v244
      %v373 = vpack.c.b16 %v358, %v357
      %v374 = vpack.c.b16 %v360, %v359
      %v375 = vpack.c.b16 %v362, %v361
      %v376 = vpack.c.b16 %v364, %v363
      %v377 = vpack.c.b16 %v366, %v365
      %v378 = vpack.c.b16 %v368, %v367
      %v379 = vpack.c.b16 %v370, %v369
      %v380 = vpack.c.b16 %v372, %v371
      %389 = vmatprep.subr.bf16.mxu0 0
      %390 = vmatpush1.bf16.msra.mxu0 %v373
      %391 = vmatprep.subr.bf16.mxu0 0
      %392 = vmatpush1.bf16.msra.mxu0 %v374
      %393 = vmatprep.subr.bf16.mxu0 0
      %394 = vmatpush1.bf16.msra.mxu0 %v375
      %395 = vmatprep.subr.bf16.mxu0 0
      %396 = vmatpush1.bf16.msra.mxu0 %v376
      %397 = vmatprep.subr.bf16.mxu0 0
      %398 = vmatpush1.bf16.msra.mxu0 %v377
      %399 = vmatprep.subr.bf16.mxu0 0
      %400 = vmatpush1.bf16.msra.mxu0 %v378
      %401 = vmatprep.subr.bf16.mxu0 0
      %402 = vmatpush1.bf16.msra.mxu0 %v379
      %403 = vmatprep.subr.bf16.mxu0 0
      %404 = vmatpush1.bf16.msra.mxu0 %v380
      %405 = vmatprep.subr.bf16.mxu0 0
      %406 = vmatpush1.bf16.msra.mxu0 0
      %407 = vmatprep.subr.bf16.mxu0 0
      %408 = vmatpush1.bf16.msra.mxu0 0
      %409 = vmatprep.subr.bf16.mxu0 0
      %410 = vmatpush1.bf16.msra.mxu0 0
      %411 = vmatprep.subr.bf16.mxu0 0
      %412 = vmatpush1.bf16.msra.mxu0 0
      %413 = vmatprep.subr.bf16.mxu0 0
      %414 = vmatpush1.bf16.msra.mxu0 0
      %415 = vmatprep.subr.bf16.mxu0 0
      %416 = vmatpush1.bf16.msra.mxu0 0
      %417 = vmatprep.subr.bf16.mxu0 0
      %418 = vmatpush1.bf16.msra.mxu0 0
      %419 = vmatprep.subr.bf16.mxu0 0
      %420 = vmatpush1.bf16.msra.mxu0 0
      %421 = vmatprep.mubr.bf16.mxu0 0
      %422 = vmatmul.mubr.bf16.gmra.mrb[0].mxu0 %v309
      %v423 = vpop.f32.mrb[0].mxu0
      %v424 = vadd.f32 0.0, %v423
      %v425 = vpop.f32.mrb[0].mxu0
      %v426 = vpop.f32.mrb[0].mxu0
      %v427 = vadd.f32 0.0, %v426
      %v428 = vpop.f32.mrb[0].mxu0
      %429 = vmatprep.mubr.bf16.mxu0 0
      %430 = vmatmul.mubr.bf16.gmra.mrb[0].mxu0 %v310
      %v431 = vpop.f32.mrb[0].mxu0
      %v432 = vadd.f32 0.0, %v431
      %v433 = vpop.f32.mrb[0].mxu0
      %v434 = vpop.f32.mrb[0].mxu0
      %v435 = vadd.f32 0.0, %v434
      %v436 = vpop.f32.mrb[0].mxu0
      %437 = vmatprep.mubr.bf16.mxu0 0
      %438 = vmatmul.mubr.bf16.gmra.mrb[0].mxu0 %v311
      %v439 = vpop.f32.mrb[0].mxu0
      %v440 = vadd.f32 0.0, %v439
      %v441 = vpop.f32.mrb[0].mxu0
      %v442 = vpop.f32.mrb[0].mxu0
      %v443 = vadd.f32 0.0, %v442
      %v444 = vpop.f32.mrb[0].mxu0
      %445 = vmatprep.mubr.bf16.mxu0 0
      %446 = vmatmul.mubr.bf16.gmra.mrb[0].mxu0 %v312
      %v447 = vpop.f32.mrb[0].mxu0
      %v448 = vadd.f32 0.0, %v447
      %v449 = vpop.f32.mrb[0].mxu0
      %v450 = vpop.f32.mrb[0].mxu0
      %v451 = vadd.f32 0.0, %v450
      %v452 = vpop.f32.mrb[0].mxu0
      %453 = vmatprep.mubr.bf16.mxu0 0
      %454 = vmatmul.mubr.bf16.gmra.mrb[0].mxu0 %v313
      %v455 = vpop.f32.mrb[0].mxu0
      %v456 = vadd.f32 0.0, %v455
      %v457 = vpop.f32.mrb[0].mxu0
      %v458 = vpop.f32.mrb[0].mxu0
      %v459 = vadd.f32 0.0, %v458
      %v460 = vpop.f32.mrb[0].mxu0
      %461 = vmatprep.mubr.bf16.mxu0 0
      %462 = vmatmul.mubr.bf16.gmra.mrb[0].mxu0 %v314
      %v463 = vpop.f32.mrb[0].mxu0
      %v464 = vadd.f32 0.0, %v463
      %v465 = vpop.f32.mrb[0].mxu0
      %v466 = vpop.f32.mrb[0].mxu0
      %v467 = vadd.f32 0.0, %v466
      %v468 = vpop.f32.mrb[0].mxu0
      %469 = vmatprep.mubr.bf16.mxu0 0
      %470 = vmatmul.mubr.bf16.gmra.mrb[0].mxu0 %v315
      %v471 = vpop.f32.mrb[0].mxu0
      %v472 = vadd.f32 0.0, %v471
      %v473 = vpop.f32.mrb[0].mxu0
      %v474 = vpop.f32.mrb[0].mxu0
      %v475 = vadd.f32 0.0, %v474
      %v476 = vpop.f32.mrb[0].mxu0
      %477 = vmatprep.mubr.bf16.mxu0 0
      %478 = vmatmul.mubr.bf16.gmra.mrb[0].mxu0 %v316
      %v479 = vpop.f32.mrb[0].mxu0
      %v480 = vadd.f32 0.0, %v479
      %v481 = vpop.f32.mrb[0].mxu0
      %v482 = vpop.f32.mrb[0].mxu0
      %v483 = vadd.f32 0.0, %v482
      %v484 = vpop.f32.mrb[0].mxu0
      %485 = vmatprep.mubr.bf16.mxu0 0
      %486 = vmatmul.mubr.bf16.gmra.mrb[0].mxu0 %v317
      %v487 = vpop.f32.mrb[0].mxu0
      %v488 = vadd.f32 0.0, %v487
      %v489 = vpop.f32.mrb[0].mxu0
      %v490 = vpop.f32.mrb[0].mxu0
      %v491 = vadd.f32 0.0, %v490
      %v492 = vpop.f32.mrb[0].mxu0
      %493 = vmatprep.mubr.bf16.mxu0 0
      %494 = vmatmul.mubr.bf16.gmra.mrb[0].mxu0 %v318
      %v495 = vpop.f32.mrb[0].mxu0
      %v496 = vadd.f32 0.0, %v495
      %v497 = vpop.f32.mrb[0].mxu0
      %v498 = vpop.f32.mrb[0].mxu0
      %v499 = vadd.f32 0.0, %v498
      %v500 = vpop.f32.mrb[0].mxu0
      %501 = vmatprep.mubr.bf16.mxu0 0
      %502 = vmatmul.mubr.bf16.gmra.mrb[0].mxu0 %v319
      %v503 = vpop.f32.mrb[0].mxu0
      %v504 = vadd.f32 0.0, %v503
      %v505 = vpop.f32.mrb[0].mxu0
      %v506 = vpop.f32.mrb[0].mxu0
      %v507 = vadd.f32 0.0, %v506
      %v508 = vpop.f32.mrb[0].mxu0
      %509 = vmatprep.mubr.bf16.mxu0 0
      %510 = vmatmul.mubr.bf16.gmra.mrb[0].mxu0 %v320
      %v511 = vpop.f32.mrb[0].mxu0
      %v512 = vadd.f32 0.0, %v511
      %v513 = vpop.f32.mrb[0].mxu0
      %v514 = vpop.f32.mrb[0].mxu0
      %v515 = vadd.f32 0.0, %v514
      %v516 = vpop.f32.mrb[0].mxu0
      %517 = vmatprep.mubr.bf16.mxu0 0
      %518 = vmatmul.mubr.bf16.gmra.mrb[0].mxu0 %v321
      %v519 = vpop.f32.mrb[0].mxu0
      %v520 = vadd.f32 0.0, %v519
      %v521 = vpop.f32.mrb[0].mxu0
      %v522 = vpop.f32.mrb[0].mxu0
      %v523 = vadd.f32 0.0, %v522
      %v524 = vpop.f32.mrb[0].mxu0
      %525 = vmatprep.mubr.bf16.mxu0 0
      %526 = vmatmul.mubr.bf16.gmra.mrb[0].mxu0 %v322
      %v527 = vpop.f32.mrb[0].mxu0
      %v528 = vadd.f32 0.0, %v527
      %v529 = vpop.f32.mrb[0].mxu0
      %v530 = vpop.f32.mrb[0].mxu0
      %v531 = vadd.f32 0.0, %v530
      %v532 = vpop.f32.mrb[0].mxu0
      %533 = vmatprep.mubr.bf16.mxu0 0
      %534 = vmatmul.mubr.bf16.gmra.mrb[0].mxu0 %v323
      %v535 = vpop.f32.mrb[0].mxu0
      %v536 = vadd.f32 0.0, %v535
      %v537 = vpop.f32.mrb[0].mxu0
      %v538 = vpop.f32.mrb[0].mxu0
      %v539 = vadd.f32 0.0, %v538
      %v540 = vpop.f32.mrb[0].mxu0
      %541 = vmatprep.mubr.bf16.mxu0 0
      %542 = vmatmul.mubr.bf16.gmra.mrb[0].mxu0 %v324
      %v543 = vpop.f32.mrb[0].mxu0
      %v544 = vadd.f32 0.0, %v543
      %v545 = vpop.f32.mrb[0].mxu0
      %v546 = vpop.f32.mrb[0].mxu0
      %v547 = vadd.f32 0.0, %v546
      %v548 = vpop.f32.mrb[0].mxu0
      %549 = vdwg.mxu0
      %v550 = vld [vmem:[%s188] sm:$0xff]
      %v551 = vld [vmem:[%s188 + $0x8] sm:$0xff]
      %v552 = vld [vmem:[%s188 + $0x10] sm:$0xff]
      %v553 = vld [vmem:[%s188 + $0x18] sm:$0xff]
      %v554 = vld [vmem:[%s188 + $0x20] sm:$0xff]
      %v555 = vld [vmem:[%s188 + $0x28] sm:$0xff]
      %v556 = vld [vmem:[%s188 + $0x30] sm:$0xff]
      %v557 = vld [vmem:[%s188 + $0x38] sm:$0xff]
      %v558 = vld [vmem:[%s188 + $0x40] sm:$0xff]
      %v559 = vld [vmem:[%s188 + $0x48] sm:$0xff]
      %v560 = vld [vmem:[%s188 + $0x50] sm:$0xff]
      %v561 = vld [vmem:[%s188 + $0x58] sm:$0xff]
      %v562 = vld [vmem:[%s188 + $0x60] sm:$0xff]
      %v563 = vld [vmem:[%s188 + $0x68] sm:$0xff]
      %v564 = vld [vmem:[%s188 + $0x70] sm:$0xff]
      %v565 = vld [vmem:[%s188 + $0x78] sm:$0xff]
      %v566 = vld [vmem:[%s188 + $0x80] sm:$0xff]
      %v567 = vld [vmem:[%s188 + $0x88] sm:$0xff]
      %v568 = vld [vmem:[%s188 + $0x90] sm:$0xff]
      %v569 = vld [vmem:[%s188 + $0x98] sm:$0xff]
      %v570 = vld [vmem:[%s188 + $0xa0] sm:$0xff]
      %v571 = vld [vmem:[%s188 + $0xa8] sm:$0xff]
      %v572 = vld [vmem:[%s188 + $0xb0] sm:$0xff]
      %v573 = vld [vmem:[%s188 + $0xb8] sm:$0xff]
      %v574 = vld [vmem:[%s188 + $0xc0] sm:$0xff]
      %v575 = vld [vmem:[%s188 + $0xc8] sm:$0xff]
      %v576 = vld [vmem:[%s188 + $0xd0] sm:$0xff]
      %v577 = vld [vmem:[%s188 + $0xd8] sm:$0xff]
      %v578 = vld [vmem:[%s188 + $0xe0] sm:$0xff]
      %v579 = vld [vmem:[%s188 + $0xe8] sm:$0xff]
      %v580 = vld [vmem:[%s188 + $0xf0] sm:$0xff]
      %v581 = vld [vmem:[%s188 + $0xf8] sm:$0xff]
      %583 = vset.pattern.permute.xlu0 0
      %584 = vperm.xlu0 %583, %v550
      %v585 = vpop.permute.xlu0 %584
      %588 = vset.pattern.permute.xlu0 0
      %589 = vperm.xlu0 %588, %v551
      %v590 = vpop.permute.xlu0 %589
      %593 = vset.pattern.permute.xlu0 0
      %594 = vperm.xlu0 %593, %v552
      %v595 = vpop.permute.xlu0 %594
      %598 = vset.pattern.permute.xlu0 0
      %599 = vperm.xlu0 %598, %v553
      %v600 = vpop.permute.xlu0 %599
      %603 = vset.pattern.permute.xlu0 0
      %604 = vperm.xlu0 %603, %v554
      %v605 = vpop.permute.xlu0 %604
      %608 = vset.pattern.permute.xlu0 0
      %609 = vperm.xlu0 %608, %v555
      %v610 = vpop.permute.xlu0 %609
      %613 = vset.pattern.permute.xlu0 0
      %614 = vperm.xlu0 %613, %v556
      %v615 = vpop.permute.xlu0 %614
      %618 = vset.pattern.permute.xlu0 0
      %619 = vperm.xlu0 %618, %v557
      %v620 = vpop.permute.xlu0 %619
      %623 = vset.pattern.permute.xlu0 0
      %624 = vperm.xlu0 %623, %v558
      %v625 = vpop.permute.xlu0 %624
      %628 = vset.pattern.permute.xlu0 0
      %629 = vperm.xlu0 %628, %v559
      %v630 = vpop.permute.xlu0 %629
      %633 = vset.pattern.permute.xlu0 0
      %634 = vperm.xlu0 %633, %v560
      %v635 = vpop.permute.xlu0 %634
      %638 = vset.pattern.permute.xlu0 0
      %639 = vperm.xlu0 %638, %v561
      %v640 = vpop.permute.xlu0 %639
      %643 = vset.pattern.permute.xlu0 0
      %644 = vperm.xlu0 %643, %v562
      %v645 = vpop.permute.xlu0 %644
      %648 = vset.pattern.permute.xlu0 0
      %649 = vperm.xlu0 %648, %v563
      %v650 = vpop.permute.xlu0 %649
      %653 = vset.pattern.permute.xlu0 0
      %654 = vperm.xlu0 %653, %v564
      %v655 = vpop.permute.xlu0 %654
      %658 = vset.pattern.permute.xlu0 0
      %659 = vperm.xlu0 %658, %v565
      %v660 = vpop.permute.xlu0 %659
      %663 = vset.pattern.permute.xlu0 0
      %664 = vperm.xlu0 %663, %v566
      %v665 = vpop.permute.xlu0 %664
      %668 = vset.pattern.permute.xlu0 0
      %669 = vperm.xlu0 %668, %v567
      %v670 = vpop.permute.xlu0 %669
      %673 = vset.pattern.permute.xlu0 0
      %674 = vperm.xlu0 %673, %v568
      %v675 = vpop.permute.xlu0 %674
      %678 = vset.pattern.permute.xlu0 0
      %679 = vperm.xlu0 %678, %v569
      %v680 = vpop.permute.xlu0 %679
      %683 = vset.pattern.permute.xlu0 0
      %684 = vperm.xlu0 %683, %v570
      %v685 = vpop.permute.xlu0 %684
      %688 = vset.pattern.permute.xlu0 0
      %689 = vperm.xlu0 %688, %v571
      %v690 = vpop.permute.xlu0 %689
      %693 = vset.pattern.permute.xlu0 0
      %694 = vperm.xlu0 %693, %v572
      %v695 = vpop.permute.xlu0 %694
      %698 = vset.pattern.permute.xlu0 0
      %699 = vperm.xlu0 %698, %v573
      %v700 = vpop.permute.xlu0 %699
      %703 = vset.pattern.permute.xlu0 0
      %704 = vperm.xlu0 %703, %v574
      %v705 = vpop.permute.xlu0 %704
      %708 = vset.pattern.permute.xlu0 0
      %709 = vperm.xlu0 %708, %v575
      %v710 = vpop.permute.xlu0 %709
      %713 = vset.pattern.permute.xlu0 0
      %714 = vperm.xlu0 %713, %v576
      %v715 = vpop.permute.xlu0 %714
      %718 = vset.pattern.permute.xlu0 0
      %719 = vperm.xlu0 %718, %v577
      %v720 = vpop.permute.xlu0 %719
      %723 = vset.pattern.permute.xlu0 0
      %724 = vperm.xlu0 %723, %v578
      %v725 = vpop.permute.xlu0 %724
      %728 = vset.pattern.permute.xlu0 0
      %729 = vperm.xlu0 %728, %v579
      %v730 = vpop.permute.xlu0 %729
      %733 = vset.pattern.permute.xlu0 0
      %734 = vperm.xlu0 %733, %v580
      %v735 = vpop.permute.xlu0 %734
      %738 = vset.pattern.permute.xlu0 0
      %739 = vperm.xlu0 %738, %v581
      %v740 = vpop.permute.xlu0 %739
      %v742 = vmul.f32 %v585, %v424
      %v743 = vmul.f32 %v590, %v427
      %v744 = vmul.f32 %v595, %v432
      %v745 = vmul.f32 %v600, %v435
      %v746 = vmul.f32 %v605, %v440
      %v747 = vmul.f32 %v610, %v443
      %v748 = vmul.f32 %v615, %v448
      %v749 = vmul.f32 %v620, %v451
      %v750 = vmul.f32 %v625, %v456
      %v751 = vmul.f32 %v630, %v459
      %v752 = vmul.f32 %v635, %v464
      %v753 = vmul.f32 %v640, %v467
      %v754 = vmul.f32 %v645, %v472
      %v755 = vmul.f32 %v650, %v475
      %v756 = vmul.f32 %v655, %v480
      %v757 = vmul.f32 %v660, %v483
      %v758 = vmul.f32 %v665, %v488
      %v759 = vmul.f32 %v670, %v491
      %v760 = vmul.f32 %v675, %v496
      %v761 = vmul.f32 %v680, %v499
      %v762 = vmul.f32 %v685, %v504
      %v763 = vmul.f32 %v690, %v507
      %v764 = vmul.f32 %v695, %v512
      %v765 = vmul.f32 %v700, %v515
      %v766 = vmul.f32 %v705, %v520
      %v767 = vmul.f32 %v710, %v523
      %v768 = vmul.f32 %v715, %v528
      %v769 = vmul.f32 %v720, %v531
      %v770 = vmul.f32 %v725, %v536
      %v771 = vmul.f32 %v730, %v539
      %v772 = vmul.f32 %v735, %v544
      %v773 = vmul.f32 %v740, %v547
      %v774 = vpack.c.bf16 %v743, %v742
      %v775 = vpack.c.bf16 %v745, %v744
      %v776 = vpack.c.bf16 %v747, %v746
      %v777 = vpack.c.bf16 %v749, %v748
      %v778 = vpack.c.bf16 %v751, %v750
      %v779 = vpack.c.bf16 %v753, %v752
      %v780 = vpack.c.bf16 %v755, %v754
      %v781 = vpack.c.bf16 %v757, %v756
      %v782 = vpack.c.bf16 %v759, %v758
      %v783 = vpack.c.bf16 %v761, %v760
      %v784 = vpack.c.bf16 %v763, %v762
      %v785 = vpack.c.bf16 %v765, %v764
      %v786 = vpack.c.bf16 %v767, %v766
      %v787 = vpack.c.bf16 %v769, %v768
      %v788 = vpack.c.bf16 %v771, %v770
      %v789 = vpack.c.bf16 %v773, %v772
      %v806 = vunpack.c.l.b16 %v774
      %v807 = vunpack.c.h.b16 %v774
      %v808 = vunpack.c.l.b16 %v775
      %v809 = vunpack.c.h.b16 %v775
      %v810 = vunpack.c.l.b16 %v776
      %v811 = vunpack.c.h.b16 %v776
      %v812 = vunpack.c.l.b16 %v777
      %v813 = vunpack.c.h.b16 %v777
      %v814 = vunpack.c.l.b16 %v778
      %v815 = vunpack.c.h.b16 %v778
      %v816 = vunpack.c.l.b16 %v779
      %v817 = vunpack.c.h.b16 %v779
      %v818 = vunpack.c.l.b16 %v780
      %v819 = vunpack.c.h.b16 %v780
      %v820 = vunpack.c.l.b16 %v781
      %v821 = vunpack.c.h.b16 %v781
      %v822 = vunpack.c.l.b16 %v782
      %v823 = vunpack.c.h.b16 %v782
      %v824 = vunpack.c.l.b16 %v783
      %v825 = vunpack.c.h.b16 %v783
      %v826 = vunpack.c.l.b16 %v784
      %v827 = vunpack.c.h.b16 %v784
      %v828 = vunpack.c.l.b16 %v785
      %v829 = vunpack.c.h.b16 %v785
      %v830 = vunpack.c.l.b16 %v786
      %v831 = vunpack.c.h.b16 %v786
      %v832 = vunpack.c.l.b16 %v787
      %v833 = vunpack.c.h.b16 %v787
      %v834 = vunpack.c.l.b16 %v788
      %v835 = vunpack.c.h.b16 %v788
      %v836 = vunpack.c.l.b16 %v789
      %v837 = vunpack.c.h.b16 %v789
      %v838 = vpack.c.b16 %v806, %v806
      %v839 = vpack.c.b16 %v807, %v807
      %v840 = vpack.c.b16 %v808, %v808
      %v841 = vpack.c.b16 %v809, %v809
      %v842 = vpack.c.b16 %v810, %v810
      %v843 = vpack.c.b16 %v811, %v811
      %v844 = vpack.c.b16 %v812, %v812
      %v845 = vpack.c.b16 %v813, %v813
      %v846 = vpack.c.b16 %v814, %v814
      %v847 = vpack.c.b16 %v815, %v815
      %v848 = vpack.c.b16 %v816, %v816
      %v849 = vpack.c.b16 %v817, %v817
      %v850 = vpack.c.b16 %v818, %v818
      %v851 = vpack.c.b16 %v819, %v819
      %v852 = vpack.c.b16 %v820, %v820
      %v853 = vpack.c.b16 %v821, %v821
      %v854 = vpack.c.b16 %v822, %v822
      %v855 = vpack.c.b16 %v823, %v823
      %v856 = vpack.c.b16 %v824, %v824
      %v857 = vpack.c.b16 %v825, %v825
      %v858 = vpack.c.b16 %v826, %v826
      %v859 = vpack.c.b16 %v827, %v827
      %v860 = vpack.c.b16 %v828, %v828
      %v861 = vpack.c.b16 %v829, %v829
      %v862 = vpack.c.b16 %v830, %v830
      %v863 = vpack.c.b16 %v831, %v831
      %v864 = vpack.c.b16 %v832, %v832
      %v865 = vpack.c.b16 %v833, %v833
      %v866 = vpack.c.b16 %v834, %v834
      %v867 = vpack.c.b16 %v835, %v835
      %v868 = vpack.c.b16 %v836, %v836
      %v869 = vpack.c.b16 %v837, %v837
      %902 = vst [vmem:[%s194] sm:$0xf] %v838
      %903 = vst [vmem:[%s194 + $0x4] sm:$0xf] %v839
      %904 = vst [vmem:[%s194 + $0x8] sm:$0xf] %v840
      %905 = vst [vmem:[%s194 + $0xc] sm:$0xf] %v841
      %906 = vst [vmem:[%s194 + $0x10] sm:$0xf] %v842
      %907 = vst [vmem:[%s194 + $0x14] sm:$0xf] %v843
      %908 = vst [vmem:[%s194 + $0x18] sm:$0xf] %v844
      %909 = vst [vmem:[%s194 + $0x1c] sm:$0xf] %v845
      %910 = vst [vmem:[%s194 + $0x20] sm:$0xf] %v846
      %911 = vst [vmem:[%s194 + $0x24] sm:$0xf] %v847
      %912 = vst [vmem:[%s194 + $0x28] sm:$0xf] %v848
      %913 = vst [vmem:[%s194 + $0x2c] sm:$0xf] %v849
      %914 = vst [vmem:[%s194 + $0x30] sm:$0xf] %v850
      %915 = vst [vmem:[%s194 + $0x34] sm:$0xf] %v851
      %916 = vst [vmem:[%s194 + $0x38] sm:$0xf] %v852
      %917 = vst [vmem:[%s194 + $0x3c] sm:$0xf] %v853
      %918 = vst [vmem:[%s194 + $0x40] sm:$0xf] %v854
      %919 = vst [vmem:[%s194 + $0x44] sm:$0xf] %v855
      %920 = vst [vmem:[%s194 + $0x48] sm:$0xf] %v856
      %921 = vst [vmem:[%s194 + $0x4c] sm:$0xf] %v857
      %922 = vst [vmem:[%s194 + $0x50] sm:$0xf] %v858
      %923 = vst [vmem:[%s194 + $0x54] sm:$0xf] %v859
      %924 = vst [vmem:[%s194 + $0x58] sm:$0xf] %v860
      %925 = vst [vmem:[%s194 + $0x5c] sm:$0xf] %v861
      %926 = vst [vmem:[%s194 + $0x60] sm:$0xf] %v862
      %927 = vst [vmem:[%s194 + $0x64] sm:$0xf] %v863
      %928 = vst [vmem:[%s194 + $0x68] sm:$0xf] %v864
      %929 = vst [vmem:[%s194 + $0x6c] sm:$0xf] %v865
      %930 = vst [vmem:[%s194 + $0x70] sm:$0xf] %v866
      %931 = vst [vmem:[%s194 + $0x74] sm:$0xf] %v867
      %932 = vst [vmem:[%s194 + $0x78] sm:$0xf] %v868
      %933 = vst [vmem:[%s194 + $0x7c] sm:$0xf] %v869
      %s934 = smul.u32 32, %s14
      %p935 = scmp.lt.s32.totalorder %s934, 63
      %s936 = scalar_select %p935, %s934, 63
      %s937 = smul.addr %s936, 4
      %s938 = scalar_lea.vmem %s3, %s937
      // Predicated region
      $region33: #{simple_gcn_encoder.3} parent=31 // pred_check
        %p939 = pneg %p105
      $region34: #{simple_gcn_encoder.3} parent=31 // pred_check_branch
        %941 = sbr.rel (%p939) target = $region36
      $region35: #{simple_gcn_encoder.3} parent=31 // pred_region
        %s942 = smul.u32 32, %s14
      $region36: #{simple_gcn_encoder.3} parent=31 // pred_fallthru
        _
    $region32: #{simple_gcn_encoder.3} parent=5 // pred_fallthru
      _
    %p943 = scmp.le.s32.totalorder 2, %s9
    // Predicated region
    $region37: #{simple_gcn_encoder.3} parent=5 // pred_check
      %p944 = pneg %p943
    $region38: #{simple_gcn_encoder.3} parent=5 // pred_check_branch
      %946 = sbr.rel (%p944) target = $region40
    $region39: #{simple_gcn_encoder.3} parent=5 // pred_region
      %s947 = ssub.s32 %s9, 2
      // Predicated region
      $region41: #{simple_gcn_encoder.3} parent=39 // pred_check
        %p948 = pneg %p111
      $region42: #{simple_gcn_encoder.3} parent=39 // pred_check_branch
        %950 = sbr.rel (%p948) target = $region44
      $region43: #{simple_gcn_encoder.3} parent=39 // pred_region
        %s951 = smul.u32 32, %s15
        %p952 = scmp.lt.s32.totalorder %s951, 63
        %s953 = scalar_select %p952, %s951, 63
        %s954 = smul.addr %s953, 4
        %s955 = scalar_lea.vmem %s3, %s954
      $region44: #{simple_gcn_encoder.3} parent=39 // pred_fallthru
        _
    $region40: #{simple_gcn_encoder.3} parent=5 // pred_fallthru
      _
  $region6: #{simple_gcn_encoder.3} parent=0 // loop_footer
    %s13 = sadd.s32 1, %s9
  $region7: #{simple_gcn_encoder.3} parent=0 // loop_footer_branch
    %8 = sbr.rel target = $region3
  $region8: #{simple_gcn_encoder.3} parent=0 // loop_exit
    _

// kernel: simple_gcn_encoder.4
$region0: #{simple_gcn_encoder.4}
  #allocation0 [shape = 'u32[]', space=smem, size = 0x4, offset = 0x4, fixed_abs, tag = 'smem constant byte address 0x4 - core index']
  #allocation1 [shape = 'u32[144,128]{1,0:T(1,128)}', space=vmem, size = 0x12000, scoped, tag = 'internal scratch']
  #allocation2 [shape = 'f32[256,128]{1,0:T(8,128)}', space=vmem, size = 0x20000, scoped, tag = 'scratch operand']
  %s0 = inlined_call_operand.vmem [shape: bf16[512,512], index: 0, kind: input, shape index: {}]
  %s1 = inlined_call_operand.vmem [shape: bf16[512,128], index: 1, kind: input, shape index: {}]
  %s2 = inlined_call_operand.vmem [shape: f32[512,1], index: 2, kind: input, shape index: {}]
  %s3 = inlined_call_operand.vmem [shape: f32[1,128], index: 3, kind: input, shape index: {}]
  %s4 = inlined_call_operand.vmem [shape: bf16[128,128], index: 4, kind: input, shape index: {}]
  %s5 = inlined_call_operand.vmem [shape: bf16[512,128], index: 5, kind: output, shape index: {}]
  %s6 = sld [smem:[#allocation0]]
  $region61: #{simple_gcn_encoder.4} parent=0
    _
  %s8 = ssub.s32 1, %s6
  %s9 = scalar_select 0, %s8, %s6
  loop: start=0, step=1, limit=4
  $region2: #{simple_gcn_encoder.4} parent=0 // loop_pre_header
    _
  $region3: #{simple_gcn_encoder.4} parent=0 // loop_header
    %s11 = sphi 0, %s15
    %p12 = scmp.ge.s32.totalorder %s11, 4
    %s18 = sphi 0, %s30
    %s19 = sphi 0, %s26
    %s20 = sphi 0, %s18
    %s21 = sphi 0, %s19
    %s22 = sphi 0, %s20
    %s23 = sphi 0, %s21
    %s35 = sphi 0, %s37
    %s38 = sphi 0, %s35
    %s39 = sphi 0, %s38
    %s55 = sphi 0, %s39
    %s59 = sphi 0, %s59
    %s61 = sphi 0, %s59
    %s62 = sphi 0, %s61
    %s76 = sphi 0, %s62
    %s82 = sphi 0, %s84
    %s85 = sphi 0, %s82
    %s86 = sphi 0, %s85
    %s102 = sphi 0, %s86
    %s106 = sphi 0, %s106
    %s108 = sphi 0, %s106
    %s109 = sphi 0, %s108
    %s123 = sphi 0, %s109
    %s127 = sphi 0, %s127
    %s129 = sphi 0, %s127
    %s130 = sphi 0, %s129
    %s144 = sphi 0, %s130
    %s150 = sphi 0, %s152
    %s153 = sphi 0, %s150
    %s154 = sphi 0, %s153
    %s170 = sphi 0, %s154
  $region4: #{simple_gcn_encoder.4} parent=0 // loop_header_branch
    %14 = sbr.rel (%p12) target = $region8
  $region5: #{simple_gcn_encoder.4} parent=0 // loop_body
    %s16 = ssub.s32 %s11, 1
    %s17 = ssub.s32 %s11, 2
    %s24 = sadd.s32 1, %s19
    %p25 = scmp.ge.s32.totalorder %s24, 1
    %s26 = scalar_select %p25, 0, %s24
    %s27 = sadd.s32 1, %s18
    %s28 = scalar_select %p25, %s27, %s18
    %p29 = scmp.ge.s32.totalorder %s28, 2
    %s30 = scalar_select %p29, 0, %s28
    %s31 = ssub.s32 %s18, %s30
    %s32 = ssub.s32 %s19, %s26
    %s33 = sor.u32 %s31, %s32
    %p34 = scmp.eq.s32.totalorder %s33, 0
    %s36 = sadd.s32 %s35, 1
    %s37 = scalar_select %p34, %s35, %s36
    %p40 = pneg %p34
    %p41 = scmp.eq.s32.totalorder %s11, 1
    %p42 = por %p40, %p41
    %p43 = scmp.ne.s32.totalorder %s35, %s38
    %p44 = scmp.eq.s32.totalorder %s11, 0
    %p45 = por %p43, %p44
    %p46 = scmp.ne.s32.totalorder %s35, %s38
    %p47 = scmp.eq.s32.totalorder %s16, 1
    %p48 = por %p46, %p47
    %p49 = scmp.ne.s32.totalorder %s38, %s39
    %p50 = scmp.eq.s32.totalorder %s16, 0
    %p51 = por %p49, %p50
    %p52 = scmp.ne.s32.totalorder %s38, %s39
    %p53 = scmp.eq.s32.totalorder %s17, 1
    %p54 = por %p52, %p53
    %p56 = scmp.ne.s32.totalorder %s39, %s55
    %p57 = scmp.eq.s32.totalorder %s17, 0
    %p58 = por %p56, %p57
    %s60 = sadd.s32 %s59, 1
    %p63 = scmp.eq.s32.totalorder %s11, 1
    %p64 = scmp.ne.s32.totalorder %s59, %s61
    %p65 = scmp.eq.s32.totalorder %s11, 0
    %p66 = por %p64, %p65
    %p67 = scmp.ne.s32.totalorder %s59, %s61
    %p68 = scmp.eq.s32.totalorder %s16, 1
    %p69 = por %p67, %p68
    %p70 = scmp.ne.s32.totalorder %s61, %s62
    %p71 = scmp.eq.s32.totalorder %s16, 0
    %p72 = por %p70, %p71
    %p73 = scmp.ne.s32.totalorder %s61, %s62
    %p74 = scmp.eq.s32.totalorder %s17, 1
    %p75 = por %p73, %p74
    %p77 = scmp.ne.s32.totalorder %s62, %s76
    %p78 = scmp.eq.s32.totalorder %s17, 0
    %p79 = por %p77, %p78
    %s80 = ssub.s32 %s18, %s30
    %p81 = scmp.eq.s32.totalorder %s80, 0
    %s83 = sadd.s32 %s82, 1
    %s84 = scalar_select %p81, %s82, %s83
    %p87 = pneg %p81
    %p88 = scmp.eq.s32.totalorder %s11, 1
    %p89 = por %p87, %p88
    %p90 = scmp.ne.s32.totalorder %s82, %s85
    %p91 = scmp.eq.s32.totalorder %s11, 0
    %p92 = por %p90, %p91
    %p93 = scmp.ne.s32.totalorder %s82, %s85
    %p94 = scmp.eq.s32.totalorder %s16, 1
    %p95 = por %p93, %p94
    %p96 = scmp.ne.s32.totalorder %s85, %s86
    %p97 = scmp.eq.s32.totalorder %s16, 0
    %p98 = por %p96, %p97
    %p99 = scmp.ne.s32.totalorder %s85, %s86
    %p100 = scmp.eq.s32.totalorder %s17, 1
    %p101 = por %p99, %p100
    %p103 = scmp.ne.s32.totalorder %s86, %s102
    %p104 = scmp.eq.s32.totalorder %s17, 0
    %p105 = por %p103, %p104
    %s107 = sadd.s32 %s106, 1
    %p110 = scmp.eq.s32.totalorder %s11, 1
    %p111 = scmp.ne.s32.totalorder %s106, %s108
    %p112 = scmp.eq.s32.totalorder %s11, 0
    %p113 = por %p111, %p112
    %p114 = scmp.ne.s32.totalorder %s106, %s108
    %p115 = scmp.eq.s32.totalorder %s16, 1
    %p116 = por %p114, %p115
    %p117 = scmp.ne.s32.totalorder %s108, %s109
    %p118 = scmp.eq.s32.totalorder %s16, 0
    %p119 = por %p117, %p118
    %p120 = scmp.ne.s32.totalorder %s108, %s109
    %p121 = scmp.eq.s32.totalorder %s17, 1
    %p122 = por %p120, %p121
    %p124 = scmp.ne.s32.totalorder %s109, %s123
    %p125 = scmp.eq.s32.totalorder %s17, 0
    %p126 = por %p124, %p125
    %s128 = sadd.s32 %s127, 1
    %p131 = scmp.eq.s32.totalorder %s11, 1
    %p132 = scmp.ne.s32.totalorder %s127, %s129
    %p133 = scmp.eq.s32.totalorder %s11, 0
    %p134 = por %p132, %p133
    %p135 = scmp.ne.s32.totalorder %s127, %s129
    %p136 = scmp.eq.s32.totalorder %s16, 1
    %p137 = por %p135, %p136
    %p138 = scmp.ne.s32.totalorder %s129, %s130
    %p139 = scmp.eq.s32.totalorder %s16, 0
    %p140 = por %p138, %p139
    %p141 = scmp.ne.s32.totalorder %s129, %s130
    %p142 = scmp.eq.s32.totalorder %s17, 1
    %p143 = por %p141, %p142
    %p145 = scmp.ne.s32.totalorder %s130, %s144
    %p146 = scmp.eq.s32.totalorder %s17, 0
    %p147 = por %p145, %p146
    %s148 = ssub.s32 %s18, %s30
    %p149 = scmp.eq.s32.totalorder %s148, 0
    %s151 = sadd.s32 %s150, 1
    %s152 = scalar_select %p149, %s150, %s151
    %p155 = pneg %p149
    %p156 = scmp.eq.s32.totalorder %s11, 1
    %p157 = por %p155, %p156
    %p158 = scmp.ne.s32.totalorder %s150, %s153
    %p159 = scmp.eq.s32.totalorder %s11, 0
    %p160 = por %p158, %p159
    %p161 = scmp.ne.s32.totalorder %s150, %s153
    %p162 = scmp.eq.s32.totalorder %s16, 1
    %p163 = por %p161, %p162
    %p164 = scmp.ne.s32.totalorder %s153, %s154
    %p165 = scmp.eq.s32.totalorder %s16, 0
    %p166 = por %p164, %p165
    %p167 = scmp.ne.s32.totalorder %s153, %s154
    %p168 = scmp.eq.s32.totalorder %s17, 1
    %p169 = por %p167, %p168
    %p171 = scmp.ne.s32.totalorder %s154, %s170
    %p172 = scmp.eq.s32.totalorder %s17, 0
    %p173 = por %p171, %p172
    %p174 = scmp.le.s32.totalorder 1, %s11
    %p175 = scmp.lt.s32.totalorder %s11, 3
    %p176 = pnand %p174, %p175
    %p177 = pneg %p176
    // Predicated region
    $region9: #{simple_gcn_encoder.4} parent=5 // pred_check
      _
    $region10: #{simple_gcn_encoder.4} parent=5 // pred_check_branch
      %179 = sbr.rel (%p176) target = $region12
    $region11: #{simple_gcn_encoder.4} parent=5 // pred_region
      %s180 = ssub.s32 %s11, 1
      // Predicated region
      $region13: #{simple_gcn_encoder.4} parent=11 // pred_check
        %p181 = pneg %p72
      $region14: #{simple_gcn_encoder.4} parent=11 // pred_check_branch
        %183 = sbr.rel (%p181) target = $region16
      $region15: #{simple_gcn_encoder.4} parent=11 // pred_region
        _
      $region16: #{simple_gcn_encoder.4} parent=11 // pred_fallthru
        _
      // Predicated region
      $region17: #{simple_gcn_encoder.4} parent=11 // pred_check
        %p184 = pneg %p119
      $region18: #{simple_gcn_encoder.4} parent=11 // pred_check_branch
        %186 = sbr.rel (%p184) target = $region20
      $region19: #{simple_gcn_encoder.4} parent=11 // pred_region
        _
      $region20: #{simple_gcn_encoder.4} parent=11 // pred_fallthru
        _
      // Predicated region
      $region21: #{simple_gcn_encoder.4} parent=11 // pred_check
        %p187 = pneg %p140
      $region22: #{simple_gcn_encoder.4} parent=11 // pred_check_branch
        %189 = sbr.rel (%p187) target = $region24
      $region23: #{simple_gcn_encoder.4} parent=11 // pred_region
        _
      $region24: #{simple_gcn_encoder.4} parent=11 // pred_fallthru
        _
    $region12: #{simple_gcn_encoder.4} parent=5 // pred_fallthru
      _
    %p190 = scmp.lt.s32.totalorder %s11, 2
    // Predicated region
    $region25: #{simple_gcn_encoder.4} parent=5 // pred_check
      %p191 = pneg %p190
    $region26: #{simple_gcn_encoder.4} parent=5 // pred_check_branch
      %193 = sbr.rel (%p191) target = $region28
    $region27: #{simple_gcn_encoder.4} parent=5 // pred_region
      // Predicated region
      $region29: #{simple_gcn_encoder.4} parent=27 // pred_check
        %p194 = pneg %p45
      $region30: #{simple_gcn_encoder.4} parent=27 // pred_check_branch
        %196 = sbr.rel (%p194) target = $region32
      $region31: #{simple_gcn_encoder.4} parent=27 // pred_region
        %s197 = smul.u32 32, %s18
        %s198 = smul.u32 4, %s19
        %p199 = scmp.lt.s32.totalorder %s197, 63
        %s200 = scalar_select %p199, %s197, 63
        %p201 = scmp.lt.s32.totalorder %s198, 3
        %s202 = scalar_select %p201, %s198, 3
        %s203 = smul.addr %s200, 4
        %s204 = sadd.s32 %s202, %s203
        %s205 = smul.addr %s204, 4
        %s206 = scalar_lea.vmem %s0, %s205
        %s207 = smul.u32 32, %s18
        %s208 = smul.u32 4, %s19
      $region32: #{simple_gcn_encoder.4} parent=27 // pred_fallthru
        _
      // Predicated region
      $region33: #{simple_gcn_encoder.4} parent=27 // pred_check
        %p209 = pneg %p92
      $region34: #{simple_gcn_encoder.4} parent=27 // pred_check_branch
        %211 = sbr.rel (%p209) target = $region36
      $region35: #{simple_gcn_encoder.4} parent=27 // pred_region
        %s212 = smul.u32 32, %s18
        %p213 = scmp.lt.s32.totalorder %s212, 63
        %s214 = scalar_select %p213, %s212, 63
        %s215 = smul.addr %s214, 8
        %s216 = scalar_lea.vmem %s2, %s215
        %s217 = smul.u32 32, %s18
      $region36: #{simple_gcn_encoder.4} parent=27 // pred_fallthru
        _
    $region28: #{simple_gcn_encoder.4} parent=5 // pred_fallthru
      _
    %p218 = scmp.le.s32.totalorder 1, %s11
    %p219 = scmp.lt.s32.totalorder %s11, 3
    %p220 = pnand %p218, %p219
    %p221 = pneg %p220
    // Predicated region
    $region37: #{simple_gcn_encoder.4} parent=5 // pred_check
      _
    $region38: #{simple_gcn_encoder.4} parent=5 // pred_check_branch
      %223 = sbr.rel (%p220) target = $region40
    $region39: #{simple_gcn_encoder.4} parent=5 // pred_region
      %s224 = ssub.s32 %s11, 1
      %s225 = smul.u32 32, %s20
      %s226 = smul.u32 4, %s21
      %p227 = scmp.lt.s32.totalorder %s225, 63
      %s228 = scalar_select %p227, %s225, 63
      %p229 = scmp.lt.s32.totalorder %s226, 3
      %s230 = scalar_select %p229, %s226, 3
      %s231 = smul.addr %s228, 4
      %s232 = sadd.s32 %s230, %s231
      %s233 = smul.addr %s232, 4
      %s234 = scalar_lea.vmem %s0, %s233
      %p235 = pneg %p51
      %p236 = pneg %p48
      %p237 = pneg %p72
      %p238 = pneg %p69
      %s239 = smul.u32 32, %s20
      %p240 = scmp.lt.s32.totalorder %s239, 63
      %s241 = scalar_select %p240, %s239, 63
      %s242 = smul.addr %s241, 8
      %s243 = scalar_lea.vmem %s2, %s242
      %p244 = pneg %p98
      %p245 = pneg %p95
      %p246 = pneg %p119
      %p247 = pneg %p116
      %p248 = pneg %p140
      %p249 = pneg %p137
      %p250 = pneg %p166
      %p251 = pneg %p163
      %s252 = smul.u32 32, %s20
      %p253 = scmp.lt.s32.totalorder %s252, 63
      %s254 = scalar_select %p253, %s252, 63
      %s255 = smul.addr %s254, 4
      %s256 = scalar_lea.vmem %s5, %s255
      %s257 = smul.u32 32, %s20
      %s258 = smul.u32 4, %s21
      %p259 = scmp.lt.s32.totalorder %s257, 63
      %s260 = scalar_select %p259, %s257, 63
      %p261 = scmp.lt.s32.totalorder %s258, 3
      %s262 = scalar_select %p261, %s258, 3
      %s263 = smul.addr %s260, 4
      %s264 = sadd.s32 %s262, %s263
      %s265 = smul.addr %s264, 4
      %s266 = scalar_lea.vmem %s0, %s265
      %s267 = smul.u32 32, %s20
      %s268 = smul.u32 4, %s21
      %s269 = smul.u32 32, %s20
      %p270 = scmp.lt.s32.totalorder %s269, 63
      %s271 = scalar_select %p270, %s269, 63
      %s272 = smul.addr %s271, 8
      %s273 = scalar_lea.vmem %s2, %s272
      %s274 = smul.u32 32, %s20
      %s275 = smul.u32 32, %s20
      %p276 = scmp.lt.s32.totalorder %s275, 63
      %s277 = scalar_select %p276, %s275, 63
      %s278 = smul.addr %s277, 4
      %s279 = scalar_lea.vmem %s5, %s278
      %s280 = smul.u32 32, %s20
      %p282 = scmp.eq.s32.totalorder %s21, 0
      // Predicated region
      $region41: #{simple_gcn_encoder.4} parent=39 // pred_check
        %p283 = pneg %p282
      $region42: #{simple_gcn_encoder.4} parent=39 // pred_check_branch
        %285 = sbr.rel (%p283) target = $region44
      $region43: #{simple_gcn_encoder.4} parent=39 // pred_region
        %286 = vst [vmem:[#allocation2] sm:$0xff] 0.0
        %287 = vst [vmem:[#allocation2 + $0x8] sm:$0xff] 0.0
        %288 = vst [vmem:[#allocation2 + $0x10] sm:$0xff] 0.0
        %289 = vst [vmem:[#allocation2 + $0x18] sm:$0xff] 0.0
        %290 = vst [vmem:[#allocation2 + $0x20] sm:$0xff] 0.0
        %291 = vst [vmem:[#allocation2 + $0x28] sm:$0xff] 0.0
        %292 = vst [vmem:[#allocation2 + $0x30] sm:$0xff] 0.0
        %293 = vst [vmem:[#allocation2 + $0x38] sm:$0xff] 0.0
        %294 = vst [vmem:[#allocation2 + $0x40] sm:$0xff] 0.0
        %295 = vst [vmem:[#allocation2 + $0x48] sm:$0xff] 0.0
        %296 = vst [vmem:[#allocation2 + $0x50] sm:$0xff] 0.0
        %297 = vst [vmem:[#allocation2 + $0x58] sm:$0xff] 0.0
        %298 = vst [vmem:[#allocation2 + $0x60] sm:$0xff] 0.0
        %299 = vst [vmem:[#allocation2 + $0x68] sm:$0xff] 0.0
        %300 = vst [vmem:[#allocation2 + $0x70] sm:$0xff] 0.0
        %301 = vst [vmem:[#allocation2 + $0x78] sm:$0xff] 0.0
        %302 = vst [vmem:[#allocation2 + $0x80] sm:$0xff] 0.0
        %303 = vst [vmem:[#allocation2 + $0x88] sm:$0xff] 0.0
        %304 = vst [vmem:[#allocation2 + $0x90] sm:$0xff] 0.0
        %305 = vst [vmem:[#allocation2 + $0x98] sm:$0xff] 0.0
        %306 = vst [vmem:[#allocation2 + $0xa0] sm:$0xff] 0.0
        %307 = vst [vmem:[#allocation2 + $0xa8] sm:$0xff] 0.0
        %308 = vst [vmem:[#allocation2 + $0xb0] sm:$0xff] 0.0
        %309 = vst [vmem:[#allocation2 + $0xb8] sm:$0xff] 0.0
        %310 = vst [vmem:[#allocation2 + $0xc0] sm:$0xff] 0.0
        %311 = vst [vmem:[#allocation2 + $0xc8] sm:$0xff] 0.0
        %312 = vst [vmem:[#allocation2 + $0xd0] sm:$0xff] 0.0
        %313 = vst [vmem:[#allocation2 + $0xd8] sm:$0xff] 0.0
        %314 = vst [vmem:[#allocation2 + $0xe0] sm:$0xff] 0.0
        %315 = vst [vmem:[#allocation2 + $0xe8] sm:$0xff] 0.0
        %316 = vst [vmem:[#allocation2 + $0xf0] sm:$0xff] 0.0
        %317 = vst [vmem:[#allocation2 + $0xf8] sm:$0xff] 0.0
      $region44: #{simple_gcn_encoder.4} parent=39 // pred_fallthru
        _
      %s318 = smul.u32 %s21, 512
      %v319 = vld [vmem:[#allocation2] sm:$0xff]
      %v320 = vld [vmem:[#allocation2 + $0x8] sm:$0xff]
      %v321 = vld [vmem:[#allocation2 + $0x10] sm:$0xff]
      %v322 = vld [vmem:[#allocation2 + $0x18] sm:$0xff]
      %v323 = vld [vmem:[#allocation2 + $0x20] sm:$0xff]
      %v324 = vld [vmem:[#allocation2 + $0x28] sm:$0xff]
      %v325 = vld [vmem:[#allocation2 + $0x30] sm:$0xff]
      %v326 = vld [vmem:[#allocation2 + $0x38] sm:$0xff]
      %v327 = vld [vmem:[#allocation2 + $0x40] sm:$0xff]
      %v328 = vld [vmem:[#allocation2 + $0x48] sm:$0xff]
      %v329 = vld [vmem:[#allocation2 + $0x50] sm:$0xff]
      %v330 = vld [vmem:[#allocation2 + $0x58] sm:$0xff]
      %v331 = vld [vmem:[#allocation2 + $0x60] sm:$0xff]
      %v332 = vld [vmem:[#allocation2 + $0x68] sm:$0xff]
      %v333 = vld [vmem:[#allocation2 + $0x70] sm:$0xff]
      %v334 = vld [vmem:[#allocation2 + $0x78] sm:$0xff]
      %v335 = vld [vmem:[#allocation2 + $0x80] sm:$0xff]
      %v336 = vld [vmem:[#allocation2 + $0x88] sm:$0xff]
      %v337 = vld [vmem:[#allocation2 + $0x90] sm:$0xff]
      %v338 = vld [vmem:[#allocation2 + $0x98] sm:$0xff]
      %v339 = vld [vmem:[#allocation2 + $0xa0] sm:$0xff]
      %v340 = vld [vmem:[#allocation2 + $0xa8] sm:$0xff]
      %v341 = vld [vmem:[#allocation2 + $0xb0] sm:$0xff]
      %v342 = vld [vmem:[#allocation2 + $0xb8] sm:$0xff]
      %v343 = vld [vmem:[#allocation2 + $0xc0] sm:$0xff]
      %v344 = vld [vmem:[#allocation2 + $0xc8] sm:$0xff]
      %v345 = vld [vmem:[#allocation2 + $0xd0] sm:$0xff]
      %v346 = vld [vmem:[#allocation2 + $0xd8] sm:$0xff]
      %v347 = vld [vmem:[#allocation2 + $0xe0] sm:$0xff]
      %v348 = vld [vmem:[#allocation2 + $0xe8] sm:$0xff]
      %v349 = vld [vmem:[#allocation2 + $0xf0] sm:$0xff]
      %v350 = vld [vmem:[#allocation2 + $0xf8] sm:$0xff]
      %v351 = vld [vmem:[%s266] sm:$0xff]
      %v352 = vld [vmem:[%s266 + $0x8] sm:$0xff]
      %v353 = vld [vmem:[%s266 + $0x10] sm:$0xff]
      %v354 = vld [vmem:[%s266 + $0x18] sm:$0xff]
      %v355 = vld [vmem:[%s266 + $0x20] sm:$0xff]
      %v356 = vld [vmem:[%s266 + $0x28] sm:$0xff]
      %v357 = vld [vmem:[%s266 + $0x30] sm:$0xff]
      %v358 = vld [vmem:[%s266 + $0x38] sm:$0xff]
      %v359 = vld [vmem:[%s266 + $0x40] sm:$0xff]
      %v360 = vld [vmem:[%s266 + $0x48] sm:$0xff]
      %v361 = vld [vmem:[%s266 + $0x50] sm:$0xff]
      %v362 = vld [vmem:[%s266 + $0x58] sm:$0xff]
      %v363 = vld [vmem:[%s266 + $0x60] sm:$0xff]
      %v364 = vld [vmem:[%s266 + $0x68] sm:$0xff]
      %v365 = vld [vmem:[%s266 + $0x70] sm:$0xff]
      %v366 = vld [vmem:[%s266 + $0x78] sm:$0xff]
      %v367 = vld [vmem:[%s266 + $0x80] sm:$0xff]
      %v368 = vld [vmem:[%s266 + $0x88] sm:$0xff]
      %v369 = vld [vmem:[%s266 + $0x90] sm:$0xff]
      %v370 = vld [vmem:[%s266 + $0x98] sm:$0xff]
      %v371 = vld [vmem:[%s266 + $0xa0] sm:$0xff]
      %v372 = vld [vmem:[%s266 + $0xa8] sm:$0xff]
      %v373 = vld [vmem:[%s266 + $0xb0] sm:$0xff]
      %v374 = vld [vmem:[%s266 + $0xb8] sm:$0xff]
      %v375 = vld [vmem:[%s266 + $0xc0] sm:$0xff]
      %v376 = vld [vmem:[%s266 + $0xc8] sm:$0xff]
      %v377 = vld [vmem:[%s266 + $0xd0] sm:$0xff]
      %v378 = vld [vmem:[%s266 + $0xd8] sm:$0xff]
      %v379 = vld [vmem:[%s266 + $0xe0] sm:$0xff]
      %v380 = vld [vmem:[%s266 + $0xe8] sm:$0xff]
      %v381 = vld [vmem:[%s266 + $0xf0] sm:$0xff]
      %v382 = vld [vmem:[%s266 + $0xf8] sm:$0xff]
      %v383 = vld [vmem:[%s266 + $0x100] sm:$0xff]
      %v384 = vld [vmem:[%s266 + $0x108] sm:$0xff]
      %v385 = vld [vmem:[%s266 + $0x110] sm:$0xff]
      %v386 = vld [vmem:[%s266 + $0x118] sm:$0xff]
      %v387 = vld [vmem:[%s266 + $0x120] sm:$0xff]
      %v388 = vld [vmem:[%s266 + $0x128] sm:$0xff]
      %v389 = vld [vmem:[%s266 + $0x130] sm:$0xff]
      %v390 = vld [vmem:[%s266 + $0x138] sm:$0xff]
      %v391 = vld [vmem:[%s266 + $0x140] sm:$0xff]
      %v392 = vld [vmem:[%s266 + $0x148] sm:$0xff]
      %v393 = vld [vmem:[%s266 + $0x150] sm:$0xff]
      %v394 = vld [vmem:[%s266 + $0x158] sm:$0xff]
      %v395 = vld [vmem:[%s266 + $0x160] sm:$0xff]
      %v396 = vld [vmem:[%s266 + $0x168] sm:$0xff]
      %v397 = vld [vmem:[%s266 + $0x170] sm:$0xff]
      %v398 = vld [vmem:[%s266 + $0x178] sm:$0xff]
      %v399 = vld [vmem:[%s266 + $0x180] sm:$0xff]
      %v400 = vld [vmem:[%s266 + $0x188] sm:$0xff]
      %v401 = vld [vmem:[%s266 + $0x190] sm:$0xff]
      %v402 = vld [vmem:[%s266 + $0x198] sm:$0xff]
      %v403 = vld [vmem:[%s266 + $0x1a0] sm:$0xff]
      %v404 = vld [vmem:[%s266 + $0x1a8] sm:$0xff]
      %v405 = vld [vmem:[%s266 + $0x1b0] sm:$0xff]
      %v406 = vld [vmem:[%s266 + $0x1b8] sm:$0xff]
      %v407 = vld [vmem:[%s266 + $0x1c0] sm:$0xff]
      %v408 = vld [vmem:[%s266 + $0x1c8] sm:$0xff]
      %v409 = vld [vmem:[%s266 + $0x1d0] sm:$0xff]
      %v410 = vld [vmem:[%s266 + $0x1d8] sm:$0xff]
      %v411 = vld [vmem:[%s266 + $0x1e0] sm:$0xff]
      %v412 = vld [vmem:[%s266 + $0x1e8] sm:$0xff]
      %v413 = vld [vmem:[%s266 + $0x1f0] sm:$0xff]
      %v414 = vld [vmem:[%s266 + $0x1f8] sm:$0xff]
      %s415 = sshra.s32 %s318, 3
      %s416 = sand.u32 %s318, 7
      %s417 = smul.addr %s415, 4
      %s418 = scalar_lea.vmem %s1, %s417
      %v419 = vld [vmem:[%s418] sm:$0xf]
      %v420 = vld [vmem:[%s418 + $0x4] sm:$0xf]
      %v421 = vld [vmem:[%s418 + $0x8] sm:$0xf]
      %v422 = vld [vmem:[%s418 + $0xc] sm:$0xf]
      %v423 = vld [vmem:[%s418 + $0x10] sm:$0xf]
      %v424 = vld [vmem:[%s418 + $0x14] sm:$0xf]
      %v425 = vld [vmem:[%s418 + $0x18] sm:$0xf]
      %v426 = vld [vmem:[%s418 + $0x1c] sm:$0xf]
      %v427 = vld [vmem:[%s418 + $0x20] sm:$0xf]
      %v428 = vld [vmem:[%s418 + $0x24] sm:$0xf]
      %v429 = vld [vmem:[%s418 + $0x28] sm:$0xf]
      %v430 = vld [vmem:[%s418 + $0x2c] sm:$0xf]
      %v431 = vld [vmem:[%s418 + $0x30] sm:$0xf]
      %v432 = vld [vmem:[%s418 + $0x34] sm:$0xf]
      %v433 = vld [vmem:[%s418 + $0x38] sm:$0xf]
      %v434 = vld [vmem:[%s418 + $0x3c] sm:$0xf]
      %v435 = vld [vmem:[%s418 + $0x40] sm:$0xf]
      %v436 = vld [vmem:[%s418 + $0x44] sm:$0xf]
      %v437 = vld [vmem:[%s418 + $0x48] sm:$0xf]
      %v438 = vld [vmem:[%s418 + $0x4c] sm:$0xf]
      %v439 = vld [vmem:[%s418 + $0x50] sm:$0xf]
      %v440 = vld [vmem:[%s418 + $0x54] sm:$0xf]
      %v441 = vld [vmem:[%s418 + $0x58] sm:$0xf]
      %v442 = vld [vmem:[%s418 + $0x5c] sm:$0xf]
      %v443 = vld [vmem:[%s418 + $0x60] sm:$0xf]
      %v444 = vld [vmem:[%s418 + $0x64] sm:$0xf]
      %v445 = vld [vmem:[%s418 + $0x68] sm:$0xf]
      %v446 = vld [vmem:[%s418 + $0x6c] sm:$0xf]
      %v447 = vld [vmem:[%s418 + $0x70] sm:$0xf]
      %v448 = vld [vmem:[%s418 + $0x74] sm:$0xf]
      %v449 = vld [vmem:[%s418 + $0x78] sm:$0xf]
      %v450 = vld [vmem:[%s418 + $0x7c] sm:$0xf]
      %v451 = vld [vmem:[%s418 + $0x80] sm:$0xf]
      %v452 = vld [vmem:[%s418 + $0x84] sm:$0xf]
      %v453 = vld [vmem:[%s418 + $0x88] sm:$0xf]
      %v454 = vld [vmem:[%s418 + $0x8c] sm:$0xf]
      %v455 = vld [vmem:[%s418 + $0x90] sm:$0xf]
      %v456 = vld [vmem:[%s418 + $0x94] sm:$0xf]
      %v457 = vld [vmem:[%s418 + $0x98] sm:$0xf]
      %v458 = vld [vmem:[%s418 + $0x9c] sm:$0xf]
      %v459 = vld [vmem:[%s418 + $0xa0] sm:$0xf]
      %v460 = vld [vmem:[%s418 + $0xa4] sm:$0xf]
      %v461 = vld [vmem:[%s418 + $0xa8] sm:$0xf]
      %v462 = vld [vmem:[%s418 + $0xac] sm:$0xf]
      %v463 = vld [vmem:[%s418 + $0xb0] sm:$0xf]
      %v464 = vld [vmem:[%s418 + $0xb4] sm:$0xf]
      %v465 = vld [vmem:[%s418 + $0xb8] sm:$0xf]
      %v466 = vld [vmem:[%s418 + $0xbc] sm:$0xf]
      %v467 = vld [vmem:[%s418 + $0xc0] sm:$0xf]
      %v468 = vld [vmem:[%s418 + $0xc4] sm:$0xf]
      %v469 = vld [vmem:[%s418 + $0xc8] sm:$0xf]
      %v470 = vld [vmem:[%s418 + $0xcc] sm:$0xf]
      %v471 = vld [vmem:[%s418 + $0xd0] sm:$0xf]
      %v472 = vld [vmem:[%s418 + $0xd4] sm:$0xf]
      %v473 = vld [vmem:[%s418 + $0xd8] sm:$0xf]
      %v474 = vld [vmem:[%s418 + $0xdc] sm:$0xf]
      %v475 = vld [vmem:[%s418 + $0xe0] sm:$0xf]
      %v476 = vld [vmem:[%s418 + $0xe4] sm:$0xf]
      %v477 = vld [vmem:[%s418 + $0xe8] sm:$0xf]
      %v478 = vld [vmem:[%s418 + $0xec] sm:$0xf]
      %v479 = vld [vmem:[%s418 + $0xf0] sm:$0xf]
      %v480 = vld [vmem:[%s418 + $0xf4] sm:$0xf]
      %v481 = vld [vmem:[%s418 + $0xf8] sm:$0xf]
      %v482 = vld [vmem:[%s418 + $0xfc] sm:$0xf]
      %v547 = vunpack.c.l.b16 %v351
      %v548 = vunpack.c.h.b16 %v351
      %v549 = vunpack.c.l.b16 %v352
      %v550 = vunpack.c.h.b16 %v352
      %v551 = vunpack.c.l.b16 %v353
      %v552 = vunpack.c.h.b16 %v353
      %v553 = vunpack.c.l.b16 %v354
      %v554 = vunpack.c.h.b16 %v354
      %v555 = vunpack.c.l.b16 %v355
      %v556 = vunpack.c.h.b16 %v355
      %v557 = vunpack.c.l.b16 %v356
      %v558 = vunpack.c.h.b16 %v356
      %v559 = vunpack.c.l.b16 %v357
      %v560 = vunpack.c.h.b16 %v357
      %v561 = vunpack.c.l.b16 %v358
      %v562 = vunpack.c.h.b16 %v358
      %v563 = vunpack.c.l.b16 %v359
      %v564 = vunpack.c.h.b16 %v359
      %v565 = vunpack.c.l.b16 %v360
      %v566 = vunpack.c.h.b16 %v360
      %v567 = vunpack.c.l.b16 %v361
      %v568 = vunpack.c.h.b16 %v361
      %v569 = vunpack.c.l.b16 %v362
      %v570 = vunpack.c.h.b16 %v362
      %v571 = vunpack.c.l.b16 %v363
      %v572 = vunpack.c.h.b16 %v363
      %v573 = vunpack.c.l.b16 %v364
      %v574 = vunpack.c.h.b16 %v364
      %v575 = vunpack.c.l.b16 %v365
      %v576 = vunpack.c.h.b16 %v365
      %v577 = vunpack.c.l.b16 %v366
      %v578 = vunpack.c.h.b16 %v366
      %v579 = vunpack.c.l.b16 %v367
      %v580 = vunpack.c.h.b16 %v367
      %v581 = vunpack.c.l.b16 %v368
      %v582 = vunpack.c.h.b16 %v368
      %v583 = vunpack.c.l.b16 %v369
      %v584 = vunpack.c.h.b16 %v369
      %v585 = vunpack.c.l.b16 %v370
      %v586 = vunpack.c.h.b16 %v370
      %v587 = vunpack.c.l.b16 %v371
      %v588 = vunpack.c.h.b16 %v371
      %v589 = vunpack.c.l.b16 %v372
      %v590 = vunpack.c.h.b16 %v372
      %v591 = vunpack.c.l.b16 %v373
      %v592 = vunpack.c.h.b16 %v373
      %v593 = vunpack.c.l.b16 %v374
      %v594 = vunpack.c.h.b16 %v374
      %v595 = vunpack.c.l.b16 %v375
      %v596 = vunpack.c.h.b16 %v375
      %v597 = vunpack.c.l.b16 %v376
      %v598 = vunpack.c.h.b16 %v376
      %v599 = vunpack.c.l.b16 %v377
      %v600 = vunpack.c.h.b16 %v377
      %v601 = vunpack.c.l.b16 %v378
      %v602 = vunpack.c.h.b16 %v378
      %v603 = vunpack.c.l.b16 %v379
      %v604 = vunpack.c.h.b16 %v379
      %v605 = vunpack.c.l.b16 %v380
      %v606 = vunpack.c.h.b16 %v380
      %v607 = vunpack.c.l.b16 %v381
      %v608 = vunpack.c.h.b16 %v381
      %v609 = vunpack.c.l.b16 %v382
      %v610 = vunpack.c.h.b16 %v382
      %v611 = vunpack.c.l.b16 %v383
      %v612 = vunpack.c.h.b16 %v383
      %v613 = vunpack.c.l.b16 %v384
      %v614 = vunpack.c.h.b16 %v384
      %v615 = vunpack.c.l.b16 %v385
      %v616 = vunpack.c.h.b16 %v385
      %v617 = vunpack.c.l.b16 %v386
      %v618 = vunpack.c.h.b16 %v386
      %v619 = vunpack.c.l.b16 %v387
      %v620 = vunpack.c.h.b16 %v387
      %v621 = vunpack.c.l.b16 %v388
      %v622 = vunpack.c.h.b16 %v388
      %v623 = vunpack.c.l.b16 %v389
      %v624 = vunpack.c.h.b16 %v389
      %v625 = vunpack.c.l.b16 %v390
      %v626 = vunpack.c.h.b16 %v390
      %v627 = vunpack.c.l.b16 %v391
      %v628 = vunpack.c.h.b16 %v391
      %v629 = vunpack.c.l.b16 %v392
      %v630 = vunpack.c.h.b16 %v392
      %v631 = vunpack.c.l.b16 %v393
      %v632 = vunpack.c.h.b16 %v393
      %v633 = vunpack.c.l.b16 %v394
      %v634 = vunpack.c.h.b16 %v394
      %v635 = vunpack.c.l.b16 %v395
      %v636 = vunpack.c.h.b16 %v395
      %v637 = vunpack.c.l.b16 %v396
      %v638 = vunpack.c.h.b16 %v396
      %v639 = vunpack.c.l.b16 %v397
      %v640 = vunpack.c.h.b16 %v397
      %v641 = vunpack.c.l.b16 %v398
      %v642 = vunpack.c.h.b16 %v398
      %v643 = vunpack.c.l.b16 %v399
      %v644 = vunpack.c.h.b16 %v399
      %v645 = vunpack.c.l.b16 %v400
      %v646 = vunpack.c.h.b16 %v400
      %v647 = vunpack.c.l.b16 %v401
      %v648 = vunpack.c.h.b16 %v401
      %v649 = vunpack.c.l.b16 %v402
      %v650 = vunpack.c.h.b16 %v402
      %v651 = vunpack.c.l.b16 %v403
      %v652 = vunpack.c.h.b16 %v403
      %v653 = vunpack.c.l.b16 %v404
      %v654 = vunpack.c.h.b16 %v404
      %v655 = vunpack.c.l.b16 %v405
      %v656 = vunpack.c.h.b16 %v405
      %v657 = vunpack.c.l.b16 %v406
      %v658 = vunpack.c.h.b16 %v406
      %v659 = vunpack.c.l.b16 %v407
      %v660 = vunpack.c.h.b16 %v407
      %v661 = vunpack.c.l.b16 %v408
      %v662 = vunpack.c.h.b16 %v408
      %v663 = vunpack.c.l.b16 %v409
      %v664 = vunpack.c.h.b16 %v409
      %v665 = vunpack.c.l.b16 %v410
      %v666 = vunpack.c.h.b16 %v410
      %v667 = vunpack.c.l.b16 %v411
      %v668 = vunpack.c.h.b16 %v411
      %v669 = vunpack.c.l.b16 %v412
      %v670 = vunpack.c.h.b16 %v412
      %v671 = vunpack.c.l.b16 %v413
      %v672 = vunpack.c.h.b16 %v413
      %v673 = vunpack.c.l.b16 %v414
      %v674 = vunpack.c.h.b16 %v414
      %v675 = vpack.c.b16 %v551, %v547
      %v676 = vpack.c.b16 %v552, %v548
      %v677 = vpack.c.b16 %v553, %v549
      %v678 = vpack.c.b16 %v554, %v550
      %v679 = vpack.c.b16 %v559, %v555
      %v680 = vpack.c.b16 %v560, %v556
      %v681 = vpack.c.b16 %v561, %v557
      %v682 = vpack.c.b16 %v562, %v558
      %v683 = vpack.c.b16 %v567, %v563
      %v684 = vpack.c.b16 %v568, %v564
      %v685 = vpack.c.b16 %v569, %v565
      %v686 = vpack.c.b16 %v570, %v566
      %v687 = vpack.c.b16 %v575, %v571
      %v688 = vpack.c.b16 %v576, %v572
      %v689 = vpack.c.b16 %v577, %v573
      %v690 = vpack.c.b16 %v578, %v574
      %v691 = vpack.c.b16 %v583, %v579
      %v692 = vpack.c.b16 %v584, %v580
      %v693 = vpack.c.b16 %v585, %v581
      %v694 = vpack.c.b16 %v586, %v582
      %v695 = vpack.c.b16 %v591, %v587
      %v696 = vpack.c.b16 %v592, %v588
      %v697 = vpack.c.b16 %v593, %v589
      %v698 = vpack.c.b16 %v594, %v590
      %v699 = vpack.c.b16 %v599, %v595
      %v700 = vpack.c.b16 %v600, %v596
      %v701 = vpack.c.b16 %v601, %v597
      %v702 = vpack.c.b16 %v602, %v598
      %v703 = vpack.c.b16 %v607, %v603
      %v704 = vpack.c.b16 %v608, %v604
      %v705 = vpack.c.b16 %v609, %v605
      %v706 = vpack.c.b16 %v610, %v606
      %v707 = vpack.c.b16 %v615, %v611
      %v708 = vpack.c.b16 %v616, %v612
      %v709 = vpack.c.b16 %v617, %v613
      %v710 = vpack.c.b16 %v618, %v614
      %v711 = vpack.c.b16 %v623, %v619
      %v712 = vpack.c.b16 %v624, %v620
      %v713 = vpack.c.b16 %v625, %v621
      %v714 = vpack.c.b16 %v626, %v622
      %v715 = vpack.c.b16 %v631, %v627
      %v716 = vpack.c.b16 %v632, %v628
      %v717 = vpack.c.b16 %v633, %v629
      %v718 = vpack.c.b16 %v634, %v630
      %v719 = vpack.c.b16 %v639, %v635
      %v720 = vpack.c.b16 %v640, %v636
      %v721 = vpack.c.b16 %v641, %v637
      %v722 = vpack.c.b16 %v642, %v638
      %v723 = vpack.c.b16 %v647, %v643
      %v724 = vpack.c.b16 %v648, %v644
      %v725 = vpack.c.b16 %v649, %v645
      %v726 = vpack.c.b16 %v650, %v646
      %v727 = vpack.c.b16 %v655, %v651
      %v728 = vpack.c.b16 %v656, %v652
      %v729 = vpack.c.b16 %v657, %v653
      %v730 = vpack.c.b16 %v658, %v654
      %v731 = vpack.c.b16 %v663, %v659
      %v732 = vpack.c.b16 %v664, %v660
      %v733 = vpack.c.b16 %v665, %v661
      %v734 = vpack.c.b16 %v666, %v662
      %v735 = vpack.c.b16 %v671, %v667
      %v736 = vpack.c.b16 %v672, %v668
      %v737 = vpack.c.b16 %v673, %v669
      %v738 = vpack.c.b16 %v674, %v670
      %v867 = vunpack.c.l.b16 %v419
      %v868 = vunpack.c.l.b16 %v420
      %v869 = vunpack.c.l.b16 %v421
      %v870 = vunpack.c.l.b16 %v422
      %v871 = vunpack.c.l.b16 %v423
      %v872 = vunpack.c.l.b16 %v424
      %v873 = vunpack.c.l.b16 %v425
      %v874 = vunpack.c.l.b16 %v426
      %v875 = vunpack.c.l.b16 %v427
      %v876 = vunpack.c.l.b16 %v428
      %v877 = vunpack.c.l.b16 %v429
      %v878 = vunpack.c.l.b16 %v430
      %v879 = vunpack.c.l.b16 %v431
      %v880 = vunpack.c.l.b16 %v432
      %v881 = vunpack.c.l.b16 %v433
      %v882 = vunpack.c.l.b16 %v434
      %v883 = vunpack.c.l.b16 %v435
      %v884 = vunpack.c.l.b16 %v436
      %v885 = vunpack.c.l.b16 %v437
      %v886 = vunpack.c.l.b16 %v438
      %v887 = vunpack.c.l.b16 %v439
      %v888 = vunpack.c.l.b16 %v440
      %v889 = vunpack.c.l.b16 %v441
      %v890 = vunpack.c.l.b16 %v442
      %v891 = vunpack.c.l.b16 %v443
      %v892 = vunpack.c.l.b16 %v444
      %v893 = vunpack.c.l.b16 %v445
      %v894 = vunpack.c.l.b16 %v446
      %v895 = vunpack.c.l.b16 %v447
      %v896 = vunpack.c.l.b16 %v448
      %v897 = vunpack.c.l.b16 %v449
      %v898 = vunpack.c.l.b16 %v450
      %v899 = vunpack.c.l.b16 %v451
      %v900 = vunpack.c.l.b16 %v452
      %v901 = vunpack.c.l.b16 %v453
      %v902 = vunpack.c.l.b16 %v454
      %v903 = vunpack.c.l.b16 %v455
      %v904 = vunpack.c.l.b16 %v456
      %v905 = vunpack.c.l.b16 %v457
      %v906 = vunpack.c.l.b16 %v458
      %v907 = vunpack.c.l.b16 %v459
      %v908 = vunpack.c.l.b16 %v460
      %v909 = vunpack.c.l.b16 %v461
      %v910 = vunpack.c.l.b16 %v462
      %v911 = vunpack.c.l.b16 %v463
      %v912 = vunpack.c.l.b16 %v464
      %v913 = vunpack.c.l.b16 %v465
      %v914 = vunpack.c.l.b16 %v466
      %v915 = vunpack.c.l.b16 %v467
      %v916 = vunpack.c.l.b16 %v468
      %v917 = vunpack.c.l.b16 %v469
      %v918 = vunpack.c.l.b16 %v470
      %v919 = vunpack.c.l.b16 %v471
      %v920 = vunpack.c.l.b16 %v472
      %v921 = vunpack.c.l.b16 %v473
      %v922 = vunpack.c.l.b16 %v474
      %v923 = vunpack.c.l.b16 %v475
      %v924 = vunpack.c.l.b16 %v476
      %v925 = vunpack.c.l.b16 %v477
      %v926 = vunpack.c.l.b16 %v478
      %v927 = vunpack.c.l.b16 %v479
      %v928 = vunpack.c.l.b16 %v480
      %v929 = vunpack.c.l.b16 %v481
      %v930 = vunpack.c.l.b16 %v482
      %v931 = vpack.c.b16 %v868, %v867
      %v932 = vpack.c.b16 %v870, %v869
      %v933 = vpack.c.b16 %v872, %v871
      %v934 = vpack.c.b16 %v874, %v873
      %v935 = vpack.c.b16 %v876, %v875
      %v936 = vpack.c.b16 %v878, %v877
      %v937 = vpack.c.b16 %v880, %v879
      %v938 = vpack.c.b16 %v882, %v881
      %v939 = vpack.c.b16 %v884, %v883
      %v940 = vpack.c.b16 %v886, %v885
      %v941 = vpack.c.b16 %v888, %v887
      %v942 = vpack.c.b16 %v890, %v889
      %v943 = vpack.c.b16 %v892, %v891
      %v944 = vpack.c.b16 %v894, %v893
      %v945 = vpack.c.b16 %v896, %v895
      %v946 = vpack.c.b16 %v898, %v897
      %v947 = vpack.c.b16 %v900, %v899
      %v948 = vpack.c.b16 %v902, %v901
      %v949 = vpack.c.b16 %v904, %v903
      %v950 = vpack.c.b16 %v906, %v905
      %v951 = vpack.c.b16 %v908, %v907
      %v952 = vpack.c.b16 %v910, %v909
      %v953 = vpack.c.b16 %v912, %v911
      %v954 = vpack.c.b16 %v914, %v913
      %v955 = vpack.c.b16 %v916, %v915
      %v956 = vpack.c.b16 %v918, %v917
      %v957 = vpack.c.b16 %v920, %v919
      %v958 = vpack.c.b16 %v922, %v921
      %v959 = vpack.c.b16 %v924, %v923
      %v960 = vpack.c.b16 %v926, %v925
      %v961 = vpack.c.b16 %v928, %v927
      %v962 = vpack.c.b16 %v930, %v929
      %995 = vmatprep.subr.bf16.mxu0 0
      %996 = vmatpush1.bf16.msra.mxu0 %v931
      %997 = vmatprep.subr.bf16.mxu0 0
      %998 = vmatpush1.bf16.msra.mxu0 %v932
      %999 = vmatprep.subr.bf16.mxu0 0
      %1000 = vmatpush1.bf16.msra.mxu0 %v933
      %1001 = vmatprep.subr.bf16.mxu0 0
      %1002 = vmatpush1.bf16.msra.mxu0 %v934
      %1003 = vmatprep.subr.bf16.mxu0 0
      %1004 = vmatpush1.bf16.msra.mxu0 %v935
      %1005 = vmatprep.subr.bf16.mxu0 0
      %1006 = vmatpush1.bf16.msra.mxu0 %v936
      %1007 = vmatprep.subr.bf16.mxu0 0
      %1008 = vmatpush1.bf16.msra.mxu0 %v937
      %1009 = vmatprep.subr.bf16.mxu0 0
      %1010 = vmatpush1.bf16.msra.mxu0 %v938
      %1011 = vmatprep.subr.bf16.mxu0 0
      %1012 = vmatpush1.bf16.msra.mxu0 %v939
      %1013 = vmatprep.subr.bf16.mxu0 0
      %1014 = vmatpush1.bf16.msra.mxu0 %v940
      %1015 = vmatprep.subr.bf16.mxu0 0
      %1016 = vmatpush1.bf16.msra.mxu0 %v941
      %1017 = vmatprep.subr.bf16.mxu0 0
      %1018 = vmatpush1.bf16.msra.mxu0 %v942
      %1019 = vmatprep.subr.bf16.mxu0 0
      %1020 = vmatpush1.bf16.msra.mxu0 %v943
      %1021 = vmatprep.subr.bf16.mxu0 0
      %1022 = vmatpush1.bf16.msra.mxu0 %v944
      %1023 = vmatprep.subr.bf16.mxu0 0
      %1024 = vmatpush1.bf16.msra.mxu0 %v945
      %1025 = vmatprep.subr.bf16.mxu0 0
      %1026 = vmatpush1.bf16.msra.mxu0 %v946
      %1027 = vmatprep.mubr.bf16.mxu0 %v676
      %1028 = vmatmul.mubr.bf16.gmra.mrb[0].mxu0 %v675
      %v1029 = vpop.f32.mrb[0].mxu0
      %v1030 = vadd.f32 0.0, %v1029
      %v1031 = vpop.f32.mrb[0].mxu0
      %v1032 = vpop.f32.mrb[0].mxu0
      %v1033 = vadd.f32 0.0, %v1032
      %v1034 = vpop.f32.mrb[0].mxu0
      %1035 = vmatprep.mubr.bf16.mxu0 %v680
      %1036 = vmatmul.mubr.bf16.gmra.mrb[0].mxu0 %v679
      %v1037 = vpop.f32.mrb[0].mxu0
      %v1038 = vadd.f32 0.0, %v1037
      %v1039 = vpop.f32.mrb[0].mxu0
      %v1040 = vpop.f32.mrb[0].mxu0
      %v1041 = vadd.f32 0.0, %v1040
      %v1042 = vpop.f32.mrb[0].mxu0
      %1043 = vmatprep.mubr.bf16.mxu0 %v684
      %1044 = vmatmul.mubr.bf16.gmra.mrb[0].mxu0 %v683
      %v1045 = vpop.f32.mrb[0].mxu0
      %v1046 = vadd.f32 0.0, %v1045
      %v1047 = vpop.f32.mrb[0].mxu0
      %v1048 = vpop.f32.mrb[0].mxu0
      %v1049 = vadd.f32 0.0, %v1048
      %v1050 = vpop.f32.mrb[0].mxu0
      %1051 = vmatprep.mubr.bf16.mxu0 %v688
      %1052 = vmatmul.mubr.bf16.gmra.mrb[0].mxu0 %v687
      %v1053 = vpop.f32.mrb[0].mxu0
      %v1054 = vadd.f32 0.0, %v1053
      %v1055 = vpop.f32.mrb[0].mxu0
      %v1056 = vpop.f32.mrb[0].mxu0
      %v1057 = vadd.f32 0.0, %v1056
      %v1058 = vpop.f32.mrb[0].mxu0
      %1059 = vmatprep.mubr.bf16.mxu0 %v692
      %1060 = vmatmul.mubr.bf16.gmra.mrb[0].mxu0 %v691
      %v1061 = vpop.f32.mrb[0].mxu0
      %v1062 = vadd.f32 0.0, %v1061
      %v1063 = vpop.f32.mrb[0].mxu0
      %v1064 = vpop.f32.mrb[0].mxu0
      %v1065 = vadd.f32 0.0, %v1064
      %v1066 = vpop.f32.mrb[0].mxu0
      %1067 = vmatprep.mubr.bf16.mxu0 %v696
      %1068 = vmatmul.mubr.bf16.gmra.mrb[0].mxu0 %v695
      %v1069 = vpop.f32.mrb[0].mxu0
      %v1070 = vadd.f32 0.0, %v1069
      %v1071 = vpop.f32.mrb[0].mxu0
      %v1072 = vpop.f32.mrb[0].mxu0
      %v1073 = vadd.f32 0.0, %v1072
      %v1074 = vpop.f32.mrb[0].mxu0
      %1075 = vmatprep.mubr.bf16.mxu0 %v700
      %1076 = vmatmul.mubr.bf16.gmra.mrb[0].mxu0 %v699
      %v1077 = vpop.f32.mrb[0].mxu0
      %v1078 = vadd.f32 0.0, %v1077
      %v1079 = vpop.f32.mrb[0].mxu0
      %v1080 = vpop.f32.mrb[0].mxu0
      %v1081 = vadd.f32 0.0, %v1080
      %v1082 = vpop.f32.mrb[0].mxu0
      %1083 = vmatprep.mubr.bf16.mxu0 %v704
      %1084 = vmatmul.mubr.bf16.gmra.mrb[0].mxu0 %v703
      %v1085 = vpop.f32.mrb[0].mxu0
      %v1086 = vadd.f32 0.0, %v1085
      %v1087 = vpop.f32.mrb[0].mxu0
      %v1088 = vpop.f32.mrb[0].mxu0
      %v1089 = vadd.f32 0.0, %v1088
      %v1090 = vpop.f32.mrb[0].mxu0
      %1091 = vmatprep.mubr.bf16.mxu0 %v708
      %1092 = vmatmul.mubr.bf16.gmra.mrb[0].mxu0 %v707
      %v1093 = vpop.f32.mrb[0].mxu0
      %v1094 = vadd.f32 0.0, %v1093
      %v1095 = vpop.f32.mrb[0].mxu0
      %v1096 = vpop.f32.mrb[0].mxu0
      %v1097 = vadd.f32 0.0, %v1096
      %v1098 = vpop.f32.mrb[0].mxu0
      %1099 = vmatprep.mubr.bf16.mxu0 %v712
      %1100 = vmatmul.mubr.bf16.gmra.mrb[0].mxu0 %v711
      %v1101 = vpop.f32.mrb[0].mxu0
      %v1102 = vadd.f32 0.0, %v1101
      %v1103 = vpop.f32.mrb[0].mxu0
      %v1104 = vpop.f32.mrb[0].mxu0
      %v1105 = vadd.f32 0.0, %v1104
      %v1106 = vpop.f32.mrb[0].mxu0
      %1107 = vmatprep.mubr.bf16.mxu0 %v716
      %1108 = vmatmul.mubr.bf16.gmra.mrb[0].mxu0 %v715
      %v1109 = vpop.f32.mrb[0].mxu0
      %v1110 = vadd.f32 0.0, %v1109
      %v1111 = vpop.f32.mrb[0].mxu0
      %v1112 = vpop.f32.mrb[0].mxu0
      %v1113 = vadd.f32 0.0, %v1112
      %v1114 = vpop.f32.mrb[0].mxu0
      %1115 = vmatprep.mubr.bf16.mxu0 %v720
      %1116 = vmatmul.mubr.bf16.gmra.mrb[0].mxu0 %v719
      %v1117 = vpop.f32.mrb[0].mxu0
      %v1118 = vadd.f32 0.0, %v1117
      %v1119 = vpop.f32.mrb[0].mxu0
      %v1120 = vpop.f32.mrb[0].mxu0
      %v1121 = vadd.f32 0.0, %v1120
      %v1122 = vpop.f32.mrb[0].mxu0
      %1123 = vmatprep.mubr.bf16.mxu0 %v724
      %1124 = vmatmul.mubr.bf16.gmra.mrb[0].mxu0 %v723
      %v1125 = vpop.f32.mrb[0].mxu0
      %v1126 = vadd.f32 0.0, %v1125
      %v1127 = vpop.f32.mrb[0].mxu0
      %v1128 = vpop.f32.mrb[0].mxu0
      %v1129 = vadd.f32 0.0, %v1128
      %v1130 = vpop.f32.mrb[0].mxu0
      %1131 = vmatprep.mubr.bf16.mxu0 %v728
      %1132 = vmatmul.mubr.bf16.gmra.mrb[0].mxu0 %v727
      %v1133 = vpop.f32.mrb[0].mxu0
      %v1134 = vadd.f32 0.0, %v1133
      %v1135 = vpop.f32.mrb[0].mxu0
      %v1136 = vpop.f32.mrb[0].mxu0
      %v1137 = vadd.f32 0.0, %v1136
      %v1138 = vpop.f32.mrb[0].mxu0
      %1139 = vmatprep.mubr.bf16.mxu0 %v732
      %1140 = vmatmul.mubr.bf16.gmra.mrb[0].mxu0 %v731
      %v1141 = vpop.f32.mrb[0].mxu0
      %v1142 = vadd.f32 0.0, %v1141
      %v1143 = vpop.f32.mrb[0].mxu0
      %v1144 = vpop.f32.mrb[0].mxu0
      %v1145 = vadd.f32 0.0, %v1144
      %v1146 = vpop.f32.mrb[0].mxu0
      %1147 = vmatprep.mubr.bf16.mxu0 %v736
      %1148 = vmatmul.mubr.bf16.gmra.mrb[0].mxu0 %v735
      %v1149 = vpop.f32.mrb[0].mxu0
      %v1150 = vadd.f32 0.0, %v1149
      %v1151 = vpop.f32.mrb[0].mxu0
      %v1152 = vpop.f32.mrb[0].mxu0
      %v1153 = vadd.f32 0.0, %v1152
      %v1154 = vpop.f32.mrb[0].mxu0
      %1155 = vdwg.mxu0
      %1156 = vmatprep.subr.bf16.mxu0 0
      %1157 = vmatpush1.bf16.msra.mxu0 %v947
      %1158 = vmatprep.subr.bf16.mxu0 0
      %1159 = vmatpush1.bf16.msra.mxu0 %v948
      %1160 = vmatprep.subr.bf16.mxu0 0
      %1161 = vmatpush1.bf16.msra.mxu0 %v949
      %1162 = vmatprep.subr.bf16.mxu0 0
      %1163 = vmatpush1.bf16.msra.mxu0 %v950
      %1164 = vmatprep.subr.bf16.mxu0 0
      %1165 = vmatpush1.bf16.msra.mxu0 %v951
      %1166 = vmatprep.subr.bf16.mxu0 0
      %1167 = vmatpush1.bf16.msra.mxu0 %v952
      %1168 = vmatprep.subr.bf16.mxu0 0
      %1169 = vmatpush1.bf16.msra.mxu0 %v953
      %1170 = vmatprep.subr.bf16.mxu0 0
      %1171 = vmatpush1.bf16.msra.mxu0 %v954
      %1172 = vmatprep.subr.bf16.mxu0 0
      %1173 = vmatpush1.bf16.msra.mxu0 %v955
      %1174 = vmatprep.subr.bf16.mxu0 0
      %1175 = vmatpush1.bf16.msra.mxu0 %v956
      %1176 = vmatprep.subr.bf16.mxu0 0
      %1177 = vmatpush1.bf16.msra.mxu0 %v957
      %1178 = vmatprep.subr.bf16.mxu0 0
      %1179 = vmatpush1.bf16.msra.mxu0 %v958
      %1180 = vmatprep.subr.bf16.mxu0 0
      %1181 = vmatpush1.bf16.msra.mxu0 %v959
      %1182 = vmatprep.subr.bf16.mxu0 0
      %1183 = vmatpush1.bf16.msra.mxu0 %v960
      %1184 = vmatprep.subr.bf16.mxu0 0
      %1185 = vmatpush1.bf16.msra.mxu0 %v961
      %1186 = vmatprep.subr.bf16.mxu0 0
      %1187 = vmatpush1.bf16.msra.mxu0 %v962
      %1188 = vmatprep.mubr.bf16.mxu0 %v678
      %1189 = vmatmul.mubr.bf16.gmra.mrb[0].mxu0 %v677
      %v1190 = vpop.f32.mrb[0].mxu0
      %v1191 = vadd.f32 %v1030, %v1190
      %v1192 = vpop.f32.mrb[0].mxu0
      %v1193 = vpop.f32.mrb[0].mxu0
      %v1194 = vadd.f32 %v1033, %v1193
      %v1195 = vpop.f32.mrb[0].mxu0
      %1196 = vmatprep.mubr.bf16.mxu0 %v682
      %1197 = vmatmul.mubr.bf16.gmra.mrb[0].mxu0 %v681
      %v1198 = vpop.f32.mrb[0].mxu0
      %v1199 = vadd.f32 %v1038, %v1198
      %v1200 = vpop.f32.mrb[0].mxu0
      %v1201 = vpop.f32.mrb[0].mxu0
      %v1202 = vadd.f32 %v1041, %v1201
      %v1203 = vpop.f32.mrb[0].mxu0
      %1204 = vmatprep.mubr.bf16.mxu0 %v686
      %1205 = vmatmul.mubr.bf16.gmra.mrb[0].mxu0 %v685
      %v1206 = vpop.f32.mrb[0].mxu0
      %v1207 = vadd.f32 %v1046, %v1206
      %v1208 = vpop.f32.mrb[0].mxu0
      %v1209 = vpop.f32.mrb[0].mxu0
      %v1210 = vadd.f32 %v1049, %v1209
      %v1211 = vpop.f32.mrb[0].mxu0
      %1212 = vmatprep.mubr.bf16.mxu0 %v690
      %1213 = vmatmul.mubr.bf16.gmra.mrb[0].mxu0 %v689
      %v1214 = vpop.f32.mrb[0].mxu0
      %v1215 = vadd.f32 %v1054, %v1214
      %v1216 = vpop.f32.mrb[0].mxu0
      %v1217 = vpop.f32.mrb[0].mxu0
      %v1218 = vadd.f32 %v1057, %v1217
      %v1219 = vpop.f32.mrb[0].mxu0
      %1220 = vmatprep.mubr.bf16.mxu0 %v694
      %1221 = vmatmul.mubr.bf16.gmra.mrb[0].mxu0 %v693
      %v1222 = vpop.f32.mrb[0].mxu0
      %v1223 = vadd.f32 %v1062, %v1222
      %v1224 = vpop.f32.mrb[0].mxu0
      %v1225 = vpop.f32.mrb[0].mxu0
      %v1226 = vadd.f32 %v1065, %v1225
      %v1227 = vpop.f32.mrb[0].mxu0
      %1228 = vmatprep.mubr.bf16.mxu0 %v698
      %1229 = vmatmul.mubr.bf16.gmra.mrb[0].mxu0 %v697
      %v1230 = vpop.f32.mrb[0].mxu0
      %v1231 = vadd.f32 %v1070, %v1230
      %v1232 = vpop.f32.mrb[0].mxu0
      %v1233 = vpop.f32.mrb[0].mxu0
      %v1234 = vadd.f32 %v1073, %v1233
      %v1235 = vpop.f32.mrb[0].mxu0
      %1236 = vmatprep.mubr.bf16.mxu0 %v702
      %1237 = vmatmul.mubr.bf16.gmra.mrb[0].mxu0 %v701
      %v1238 = vpop.f32.mrb[0].mxu0
      %v1239 = vadd.f32 %v1078, %v1238
      %v1240 = vpop.f32.mrb[0].mxu0
      %v1241 = vpop.f32.mrb[0].mxu0
      %v1242 = vadd.f32 %v1081, %v1241
      %v1243 = vpop.f32.mrb[0].mxu0
      %1244 = vmatprep.mubr.bf16.mxu0 %v706
      %1245 = vmatmul.mubr.bf16.gmra.mrb[0].mxu0 %v705
      %v1246 = vpop.f32.mrb[0].mxu0
      %v1247 = vadd.f32 %v1086, %v1246
      %v1248 = vpop.f32.mrb[0].mxu0
      %v1249 = vpop.f32.mrb[0].mxu0
      %v1250 = vadd.f32 %v1089, %v1249
      %v1251 = vpop.f32.mrb[0].mxu0
      %1252 = vmatprep.mubr.bf16.mxu0 %v710
      %1253 = vmatmul.mubr.bf16.gmra.mrb[0].mxu0 %v709
      %v1254 = vpop.f32.mrb[0].mxu0
      %v1255 = vadd.f32 %v1094, %v1254
      %v1256 = vpop.f32.mrb[0].mxu0
      %v1257 = vpop.f32.mrb[0].mxu0
      %v1258 = vadd.f32 %v1097, %v1257
      %v1259 = vpop.f32.mrb[0].mxu0
      %1260 = vmatprep.mubr.bf16.mxu0 %v714
      %1261 = vmatmul.mubr.bf16.gmra.mrb[0].mxu0 %v713
      %v1262 = vpop.f32.mrb[0].mxu0
      %v1263 = vadd.f32 %v1102, %v1262
      %v1264 = vpop.f32.mrb[0].mxu0
      %v1265 = vpop.f32.mrb[0].mxu0
      %v1266 = vadd.f32 %v1105, %v1265
      %v1267 = vpop.f32.mrb[0].mxu0
      %1268 = vmatprep.mubr.bf16.mxu0 %v718
      %1269 = vmatmul.mubr.bf16.gmra.mrb[0].mxu0 %v717
      %v1270 = vpop.f32.mrb[0].mxu0
      %v1271 = vadd.f32 %v1110, %v1270
      %v1272 = vpop.f32.mrb[0].mxu0
      %v1273 = vpop.f32.mrb[0].mxu0
      %v1274 = vadd.f32 %v1113, %v1273
      %v1275 = vpop.f32.mrb[0].mxu0
      %1276 = vmatprep.mubr.bf16.mxu0 %v722
      %1277 = vmatmul.mubr.bf16.gmra.mrb[0].mxu0 %v721
      %v1278 = vpop.f32.mrb[0].mxu0
      %v1279 = vadd.f32 %v1118, %v1278
      %v1280 = vpop.f32.mrb[0].mxu0
      %v1281 = vpop.f32.mrb[0].mxu0
      %v1282 = vadd.f32 %v1121, %v1281
      %v1283 = vpop.f32.mrb[0].mxu0
      %1284 = vmatprep.mubr.bf16.mxu0 %v726
      %1285 = vmatmul.mubr.bf16.gmra.mrb[0].mxu0 %v725
      %v1286 = vpop.f32.mrb[0].mxu0
      %v1287 = vadd.f32 %v1126, %v1286
      %v1288 = vpop.f32.mrb[0].mxu0
      %v1289 = vpop.f32.mrb[0].mxu0
      %v1290 = vadd.f32 %v1129, %v1289
      %v1291 = vpop.f32.mrb[0].mxu0
      %1292 = vmatprep.mubr.bf16.mxu0 %v730
      %1293 = vmatmul.mubr.bf16.gmra.mrb[0].mxu0 %v729
      %v1294 = vpop.f32.mrb[0].mxu0
      %v1295 = vadd.f32 %v1134, %v1294
      %v1296 = vpop.f32.mrb[0].mxu0
      %v1297 = vpop.f32.mrb[0].mxu0
      %v1298 = vadd.f32 %v1137, %v1297
      %v1299 = vpop.f32.mrb[0].mxu0
      %1300 = vmatprep.mubr.bf16.mxu0 %v734
      %1301 = vmatmul.mubr.bf16.gmra.mrb[0].mxu0 %v733
      %v1302 = vpop.f32.mrb[0].mxu0
      %v1303 = vadd.f32 %v1142, %v1302
      %v1304 = vpop.f32.mrb[0].mxu0
      %v1305 = vpop.f32.mrb[0].mxu0
      %v1306 = vadd.f32 %v1145, %v1305
      %v1307 = vpop.f32.mrb[0].mxu0
      %1308 = vmatprep.mubr.bf16.mxu0 %v738
      %1309 = vmatmul.mubr.bf16.gmra.mrb[0].mxu0 %v737
      %v1310 = vpop.f32.mrb[0].mxu0
      %v1311 = vadd.f32 %v1150, %v1310
      %v1312 = vpop.f32.mrb[0].mxu0
      %v1313 = vpop.f32.mrb[0].mxu0
      %v1314 = vadd.f32 %v1153, %v1313
      %v1315 = vpop.f32.mrb[0].mxu0
      %1316 = vdwg.mxu0
      %v1317 = vadd.f32 %v319, %v1191
      %v1318 = vadd.f32 %v320, %v1194
      %v1319 = vadd.f32 %v321, %v1199
      %v1320 = vadd.f32 %v322, %v1202
      %v1321 = vadd.f32 %v323, %v1207
      %v1322 = vadd.f32 %v324, %v1210
      %v1323 = vadd.f32 %v325, %v1215
      %v1324 = vadd.f32 %v326, %v1218
      %v1325 = vadd.f32 %v327, %v1223
      %v1326 = vadd.f32 %v328, %v1226
      %v1327 = vadd.f32 %v329, %v1231
      %v1328 = vadd.f32 %v330, %v1234
      %v1329 = vadd.f32 %v331, %v1239
      %v1330 = vadd.f32 %v332, %v1242
      %v1331 = vadd.f32 %v333, %v1247
      %v1332 = vadd.f32 %v334, %v1250
      %v1333 = vadd.f32 %v335, %v1255
      %v1334 = vadd.f32 %v336, %v1258
      %v1335 = vadd.f32 %v337, %v1263
      %v1336 = vadd.f32 %v338, %v1266
      %v1337 = vadd.f32 %v339, %v1271
      %v1338 = vadd.f32 %v340, %v1274
      %v1339 = vadd.f32 %v341, %v1279
      %v1340 = vadd.f32 %v342, %v1282
      %v1341 = vadd.f32 %v343, %v1287
      %v1342 = vadd.f32 %v344, %v1290
      %v1343 = vadd.f32 %v345, %v1295
      %v1344 = vadd.f32 %v346, %v1298
      %v1345 = vadd.f32 %v347, %v1303
      %v1346 = vadd.f32 %v348, %v1306
      %v1347 = vadd.f32 %v349, %v1311
      %v1348 = vadd.f32 %v350, %v1314
      %1349 = vst [vmem:[#allocation2] sm:$0xff] %v1317
      %1350 = vst [vmem:[#allocation2 + $0x8] sm:$0xff] %v1318
      %1351 = vst [vmem:[#allocation2 + $0x10] sm:$0xff] %v1319
      %1352 = vst [vmem:[#allocation2 + $0x18] sm:$0xff] %v1320
      %1353 = vst [vmem:[#allocation2 + $0x20] sm:$0xff] %v1321
      %1354 = vst [vmem:[#allocation2 + $0x28] sm:$0xff] %v1322
      %1355 = vst [vmem:[#allocation2 + $0x30] sm:$0xff] %v1323
      %1356 = vst [vmem:[#allocation2 + $0x38] sm:$0xff] %v1324
      %1357 = vst [vmem:[#allocation2 + $0x40] sm:$0xff] %v1325
      %1358 = vst [vmem:[#allocation2 + $0x48] sm:$0xff] %v1326
      %1359 = vst [vmem:[#allocation2 + $0x50] sm:$0xff] %v1327
      %1360 = vst [vmem:[#allocation2 + $0x58] sm:$0xff] %v1328
      %1361 = vst [vmem:[#allocation2 + $0x60] sm:$0xff] %v1329
      %1362 = vst [vmem:[#allocation2 + $0x68] sm:$0xff] %v1330
      %1363 = vst [vmem:[#allocation2 + $0x70] sm:$0xff] %v1331
      %1364 = vst [vmem:[#allocation2 + $0x78] sm:$0xff] %v1332
      %1365 = vst [vmem:[#allocation2 + $0x80] sm:$0xff] %v1333
      %1366 = vst [vmem:[#allocation2 + $0x88] sm:$0xff] %v1334
      %1367 = vst [vmem:[#allocation2 + $0x90] sm:$0xff] %v1335
      %1368 = vst [vmem:[#allocation2 + $0x98] sm:$0xff] %v1336
      %1369 = vst [vmem:[#allocation2 + $0xa0] sm:$0xff] %v1337
      %1370 = vst [vmem:[#allocation2 + $0xa8] sm:$0xff] %v1338
      %1371 = vst [vmem:[#allocation2 + $0xb0] sm:$0xff] %v1339
      %1372 = vst [vmem:[#allocation2 + $0xb8] sm:$0xff] %v1340
      %1373 = vst [vmem:[#allocation2 + $0xc0] sm:$0xff] %v1341
      %1374 = vst [vmem:[#allocation2 + $0xc8] sm:$0xff] %v1342
      %1375 = vst [vmem:[#allocation2 + $0xd0] sm:$0xff] %v1343
      %1376 = vst [vmem:[#allocation2 + $0xd8] sm:$0xff] %v1344
      %1377 = vst [vmem:[#allocation2 + $0xe0] sm:$0xff] %v1345
      %1378 = vst [vmem:[#allocation2 + $0xe8] sm:$0xff] %v1346
      %1379 = vst [vmem:[#allocation2 + $0xf0] sm:$0xff] %v1347
      %1380 = vst [vmem:[#allocation2 + $0xf8] sm:$0xff] %v1348
      // Predicated region
      $region45: #{simple_gcn_encoder.4} parent=39 // pred_check
        %p1381 = pneg %p282
      $region46: #{simple_gcn_encoder.4} parent=39 // pred_check_branch
        %1383 = sbr.rel (%p1381) target = $region48
      $region47: #{simple_gcn_encoder.4} parent=39 // pred_region
        %v1384 = vld [vmem:[%s273] sm:$0xff]
        %v1385 = vld [vmem:[%s273 + $0x8] sm:$0xff]
        %v1386 = vld [vmem:[%s273 + $0x10] sm:$0xff]
        %v1387 = vld [vmem:[%s273 + $0x18] sm:$0xff]
        %v1388 = vld [vmem:[%s273 + $0x20] sm:$0xff]
        %v1389 = vld [vmem:[%s273 + $0x28] sm:$0xff]
        %v1390 = vld [vmem:[%s273 + $0x30] sm:$0xff]
        %v1391 = vld [vmem:[%s273 + $0x38] sm:$0xff]
        %v1392 = vld [vmem:[%s273 + $0x40] sm:$0xff]
        %v1393 = vld [vmem:[%s273 + $0x48] sm:$0xff]
        %v1394 = vld [vmem:[%s273 + $0x50] sm:$0xff]
        %v1395 = vld [vmem:[%s273 + $0x58] sm:$0xff]
        %v1396 = vld [vmem:[%s273 + $0x60] sm:$0xff]
        %v1397 = vld [vmem:[%s273 + $0x68] sm:$0xff]
        %v1398 = vld [vmem:[%s273 + $0x70] sm:$0xff]
        %v1399 = vld [vmem:[%s273 + $0x78] sm:$0xff]
        %v1400 = vld [vmem:[%s273 + $0x80] sm:$0xff]
        %v1401 = vld [vmem:[%s273 + $0x88] sm:$0xff]
        %v1402 = vld [vmem:[%s273 + $0x90] sm:$0xff]
        %v1403 = vld [vmem:[%s273 + $0x98] sm:$0xff]
        %v1404 = vld [vmem:[%s273 + $0xa0] sm:$0xff]
        %v1405 = vld [vmem:[%s273 + $0xa8] sm:$0xff]
        %v1406 = vld [vmem:[%s273 + $0xb0] sm:$0xff]
        %v1407 = vld [vmem:[%s273 + $0xb8] sm:$0xff]
        %v1408 = vld [vmem:[%s273 + $0xc0] sm:$0xff]
        %v1409 = vld [vmem:[%s273 + $0xc8] sm:$0xff]
        %v1410 = vld [vmem:[%s273 + $0xd0] sm:$0xff]
        %v1411 = vld [vmem:[%s273 + $0xd8] sm:$0xff]
        %v1412 = vld [vmem:[%s273 + $0xe0] sm:$0xff]
        %v1413 = vld [vmem:[%s273 + $0xe8] sm:$0xff]
        %v1414 = vld [vmem:[%s273 + $0xf0] sm:$0xff]
        %v1415 = vld [vmem:[%s273 + $0xf8] sm:$0xff]
        %v1416 = vld [vmem:[#allocation2] sm:$0xff]
        %v1417 = vld [vmem:[#allocation2 + $0x8] sm:$0xff]
        %v1418 = vld [vmem:[#allocation2 + $0x10] sm:$0xff]
        %v1419 = vld [vmem:[#allocation2 + $0x18] sm:$0xff]
        %v1420 = vld [vmem:[#allocation2 + $0x20] sm:$0xff]
        %v1421 = vld [vmem:[#allocation2 + $0x28] sm:$0xff]
        %v1422 = vld [vmem:[#allocation2 + $0x30] sm:$0xff]
        %v1423 = vld [vmem:[#allocation2 + $0x38] sm:$0xff]
        %v1424 = vld [vmem:[#allocation2 + $0x40] sm:$0xff]
        %v1425 = vld [vmem:[#allocation2 + $0x48] sm:$0xff]
        %v1426 = vld [vmem:[#allocation2 + $0x50] sm:$0xff]
        %v1427 = vld [vmem:[#allocation2 + $0x58] sm:$0xff]
        %v1428 = vld [vmem:[#allocation2 + $0x60] sm:$0xff]
        %v1429 = vld [vmem:[#allocation2 + $0x68] sm:$0xff]
        %v1430 = vld [vmem:[#allocation2 + $0x70] sm:$0xff]
        %v1431 = vld [vmem:[#allocation2 + $0x78] sm:$0xff]
        %v1432 = vld [vmem:[#allocation2 + $0x80] sm:$0xff]
        %v1433 = vld [vmem:[#allocation2 + $0x88] sm:$0xff]
        %v1434 = vld [vmem:[#allocation2 + $0x90] sm:$0xff]
        %v1435 = vld [vmem:[#allocation2 + $0x98] sm:$0xff]
        %v1436 = vld [vmem:[#allocation2 + $0xa0] sm:$0xff]
        %v1437 = vld [vmem:[#allocation2 + $0xa8] sm:$0xff]
        %v1438 = vld [vmem:[#allocation2 + $0xb0] sm:$0xff]
        %v1439 = vld [vmem:[#allocation2 + $0xb8] sm:$0xff]
        %v1440 = vld [vmem:[#allocation2 + $0xc0] sm:$0xff]
        %v1441 = vld [vmem:[#allocation2 + $0xc8] sm:$0xff]
        %v1442 = vld [vmem:[#allocation2 + $0xd0] sm:$0xff]
        %v1443 = vld [vmem:[#allocation2 + $0xd8] sm:$0xff]
        %v1444 = vld [vmem:[#allocation2 + $0xe0] sm:$0xff]
        %v1445 = vld [vmem:[#allocation2 + $0xe8] sm:$0xff]
        %v1446 = vld [vmem:[#allocation2 + $0xf0] sm:$0xff]
        %v1447 = vld [vmem:[#allocation2 + $0xf8] sm:$0xff]
        %1449 = vset.pattern.permute.xlu0 0
        %1450 = vperm.xlu0 %1449, %v1384
        %v1451 = vpop.permute.xlu0 %1450
        %1454 = vset.pattern.permute.xlu0 0
        %1455 = vperm.xlu0 %1454, %v1385
        %v1456 = vpop.permute.xlu0 %1455
        %1459 = vset.pattern.permute.xlu0 0
        %1460 = vperm.xlu0 %1459, %v1386
        %v1461 = vpop.permute.xlu0 %1460
        %1464 = vset.pattern.permute.xlu0 0
        %1465 = vperm.xlu0 %1464, %v1387
        %v1466 = vpop.permute.xlu0 %1465
        %1469 = vset.pattern.permute.xlu0 0
        %1470 = vperm.xlu0 %1469, %v1388
        %v1471 = vpop.permute.xlu0 %1470
        %1474 = vset.pattern.permute.xlu0 0
        %1475 = vperm.xlu0 %1474, %v1389
        %v1476 = vpop.permute.xlu0 %1475
        %1479 = vset.pattern.permute.xlu0 0
        %1480 = vperm.xlu0 %1479, %v1390
        %v1481 = vpop.permute.xlu0 %1480
        %1484 = vset.pattern.permute.xlu0 0
        %1485 = vperm.xlu0 %1484, %v1391
        %v1486 = vpop.permute.xlu0 %1485
        %1489 = vset.pattern.permute.xlu0 0
        %1490 = vperm.xlu0 %1489, %v1392
        %v1491 = vpop.permute.xlu0 %1490
        %1494 = vset.pattern.permute.xlu0 0
        %1495 = vperm.xlu0 %1494, %v1393
        %v1496 = vpop.permute.xlu0 %1495
        %1499 = vset.pattern.permute.xlu0 0
        %1500 = vperm.xlu0 %1499, %v1394
        %v1501 = vpop.permute.xlu0 %1500
        %1504 = vset.pattern.permute.xlu0 0
        %1505 = vperm.xlu0 %1504, %v1395
        %v1506 = vpop.permute.xlu0 %1505
        %1509 = vset.pattern.permute.xlu0 0
        %1510 = vperm.xlu0 %1509, %v1396
        %v1511 = vpop.permute.xlu0 %1510
        %1514 = vset.pattern.permute.xlu0 0
        %1515 = vperm.xlu0 %1514, %v1397
        %v1516 = vpop.permute.xlu0 %1515
        %1519 = vset.pattern.permute.xlu0 0
        %1520 = vperm.xlu0 %1519, %v1398
        %v1521 = vpop.permute.xlu0 %1520
        %1524 = vset.pattern.permute.xlu0 0
        %1525 = vperm.xlu0 %1524, %v1399
        %v1526 = vpop.permute.xlu0 %1525
        %1529 = vset.pattern.permute.xlu0 0
        %1530 = vperm.xlu0 %1529, %v1400
        %v1531 = vpop.permute.xlu0 %1530
        %1534 = vset.pattern.permute.xlu0 0
        %1535 = vperm.xlu0 %1534, %v1401
        %v1536 = vpop.permute.xlu0 %1535
        %1539 = vset.pattern.permute.xlu0 0
        %1540 = vperm.xlu0 %1539, %v1402
        %v1541 = vpop.permute.xlu0 %1540
        %1544 = vset.pattern.permute.xlu0 0
        %1545 = vperm.xlu0 %1544, %v1403
        %v1546 = vpop.permute.xlu0 %1545
        %1549 = vset.pattern.permute.xlu0 0
        %1550 = vperm.xlu0 %1549, %v1404
        %v1551 = vpop.permute.xlu0 %1550
        %1554 = vset.pattern.permute.xlu0 0
        %1555 = vperm.xlu0 %1554, %v1405
        %v1556 = vpop.permute.xlu0 %1555
        %1559 = vset.pattern.permute.xlu0 0
        %1560 = vperm.xlu0 %1559, %v1406
        %v1561 = vpop.permute.xlu0 %1560
        %1564 = vset.pattern.permute.xlu0 0
        %1565 = vperm.xlu0 %1564, %v1407
        %v1566 = vpop.permute.xlu0 %1565
        %1569 = vset.pattern.permute.xlu0 0
        %1570 = vperm.xlu0 %1569, %v1408
        %v1571 = vpop.permute.xlu0 %1570
        %1574 = vset.pattern.permute.xlu0 0
        %1575 = vperm.xlu0 %1574, %v1409
        %v1576 = vpop.permute.xlu0 %1575
        %1579 = vset.pattern.permute.xlu0 0
        %1580 = vperm.xlu0 %1579, %v1410
        %v1581 = vpop.permute.xlu0 %1580
        %1584 = vset.pattern.permute.xlu0 0
        %1585 = vperm.xlu0 %1584, %v1411
        %v1586 = vpop.permute.xlu0 %1585
        %1589 = vset.pattern.permute.xlu0 0
        %1590 = vperm.xlu0 %1589, %v1412
        %v1591 = vpop.permute.xlu0 %1590
        %1594 = vset.pattern.permute.xlu0 0
        %1595 = vperm.xlu0 %1594, %v1413
        %v1596 = vpop.permute.xlu0 %1595
        %1599 = vset.pattern.permute.xlu0 0
        %1600 = vperm.xlu0 %1599, %v1414
        %v1601 = vpop.permute.xlu0 %1600
        %1604 = vset.pattern.permute.xlu0 0
        %1605 = vperm.xlu0 %1604, %v1415
        %v1606 = vpop.permute.xlu0 %1605
        %v1608 = vmul.f32 %v1451, %v1416
        %v1609 = vmul.f32 %v1456, %v1417
        %v1610 = vmul.f32 %v1461, %v1418
        %v1611 = vmul.f32 %v1466, %v1419
        %v1612 = vmul.f32 %v1471, %v1420
        %v1613 = vmul.f32 %v1476, %v1421
        %v1614 = vmul.f32 %v1481, %v1422
        %v1615 = vmul.f32 %v1486, %v1423
        %v1616 = vmul.f32 %v1491, %v1424
        %v1617 = vmul.f32 %v1496, %v1425
        %v1618 = vmul.f32 %v1501, %v1426
        %v1619 = vmul.f32 %v1506, %v1427
        %v1620 = vmul.f32 %v1511, %v1428
        %v1621 = vmul.f32 %v1516, %v1429
        %v1622 = vmul.f32 %v1521, %v1430
        %v1623 = vmul.f32 %v1526, %v1431
        %v1624 = vmul.f32 %v1531, %v1432
        %v1625 = vmul.f32 %v1536, %v1433
        %v1626 = vmul.f32 %v1541, %v1434
        %v1627 = vmul.f32 %v1546, %v1435
        %v1628 = vmul.f32 %v1551, %v1436
        %v1629 = vmul.f32 %v1556, %v1437
        %v1630 = vmul.f32 %v1561, %v1438
        %v1631 = vmul.f32 %v1566, %v1439
        %v1632 = vmul.f32 %v1571, %v1440
        %v1633 = vmul.f32 %v1576, %v1441
        %v1634 = vmul.f32 %v1581, %v1442
        %v1635 = vmul.f32 %v1586, %v1443
        %v1636 = vmul.f32 %v1591, %v1444
        %v1637 = vmul.f32 %v1596, %v1445
        %v1638 = vmul.f32 %v1601, %v1446
        %v1639 = vmul.f32 %v1606, %v1447
        %v1640 = vld [vmem:[%s3] sm:$0x1]
        %v1642 = vlaneseq
        %v1643 = vshrl.u32 %v1642, 7
        %v1644 = vsub.s32 0, %v1643
        %v1645 = vrot.slane %v1640, %v1644
        %v1647 = vadd.f32 %v1608, %v1645
        %v1648 = vadd.f32 %v1609, %v1645
        %v1649 = vadd.f32 %v1610, %v1645
        %v1650 = vadd.f32 %v1611, %v1645
        %v1651 = vadd.f32 %v1612, %v1645
        %v1652 = vadd.f32 %v1613, %v1645
        %v1653 = vadd.f32 %v1614, %v1645
        %v1654 = vadd.f32 %v1615, %v1645
        %v1655 = vadd.f32 %v1616, %v1645
        %v1656 = vadd.f32 %v1617, %v1645
        %v1657 = vadd.f32 %v1618, %v1645
        %v1658 = vadd.f32 %v1619, %v1645
        %v1659 = vadd.f32 %v1620, %v1645
        %v1660 = vadd.f32 %v1621, %v1645
        %v1661 = vadd.f32 %v1622, %v1645
        %v1662 = vadd.f32 %v1623, %v1645
        %v1663 = vadd.f32 %v1624, %v1645
        %v1664 = vadd.f32 %v1625, %v1645
        %v1665 = vadd.f32 %v1626, %v1645
        %v1666 = vadd.f32 %v1627, %v1645
        %v1667 = vadd.f32 %v1628, %v1645
        %v1668 = vadd.f32 %v1629, %v1645
        %v1669 = vadd.f32 %v1630, %v1645
        %v1670 = vadd.f32 %v1631, %v1645
        %v1671 = vadd.f32 %v1632, %v1645
        %v1672 = vadd.f32 %v1633, %v1645
        %v1673 = vadd.f32 %v1634, %v1645
        %v1674 = vadd.f32 %v1635, %v1645
        %v1675 = vadd.f32 %v1636, %v1645
        %v1676 = vadd.f32 %v1637, %v1645
        %v1677 = vadd.f32 %v1638, %v1645
        %v1678 = vadd.f32 %v1639, %v1645
        %v1679 = vmax.f32 %v1647, 0.0
        %v1680 = vmax.f32 %v1648, 0.0
        %v1681 = vmax.f32 %v1649, 0.0
        %v1682 = vmax.f32 %v1650, 0.0
        %v1683 = vmax.f32 %v1651, 0.0
        %v1684 = vmax.f32 %v1652, 0.0
        %v1685 = vmax.f32 %v1653, 0.0
        %v1686 = vmax.f32 %v1654, 0.0
        %v1687 = vmax.f32 %v1655, 0.0
        %v1688 = vmax.f32 %v1656, 0.0
        %v1689 = vmax.f32 %v1657, 0.0
        %v1690 = vmax.f32 %v1658, 0.0
        %v1691 = vmax.f32 %v1659, 0.0
        %v1692 = vmax.f32 %v1660, 0.0
        %v1693 = vmax.f32 %v1661, 0.0
        %v1694 = vmax.f32 %v1662, 0.0
        %v1695 = vmax.f32 %v1663, 0.0
        %v1696 = vmax.f32 %v1664, 0.0
        %v1697 = vmax.f32 %v1665, 0.0
        %v1698 = vmax.f32 %v1666, 0.0
        %v1699 = vmax.f32 %v1667, 0.0
        %v1700 = vmax.f32 %v1668, 0.0
        %v1701 = vmax.f32 %v1669, 0.0
        %v1702 = vmax.f32 %v1670, 0.0
        %v1703 = vmax.f32 %v1671, 0.0
        %v1704 = vmax.f32 %v1672, 0.0
        %v1705 = vmax.f32 %v1673, 0.0
        %v1706 = vmax.f32 %v1674, 0.0
        %v1707 = vmax.f32 %v1675, 0.0
        %v1708 = vmax.f32 %v1676, 0.0
        %v1709 = vmax.f32 %v1677, 0.0
        %v1710 = vmax.f32 %v1678, 0.0
        %v1711 = vmul.f32 %v1451, %v1679
        %v1712 = vmul.f32 %v1456, %v1680
        %v1713 = vmul.f32 %v1461, %v1681
        %v1714 = vmul.f32 %v1466, %v1682
        %v1715 = vmul.f32 %v1471, %v1683
        %v1716 = vmul.f32 %v1476, %v1684
        %v1717 = vmul.f32 %v1481, %v1685
        %v1718 = vmul.f32 %v1486, %v1686
        %v1719 = vmul.f32 %v1491, %v1687
        %v1720 = vmul.f32 %v1496, %v1688
        %v1721 = vmul.f32 %v1501, %v1689
        %v1722 = vmul.f32 %v1506, %v1690
        %v1723 = vmul.f32 %v1511, %v1691
        %v1724 = vmul.f32 %v1516, %v1692
        %v1725 = vmul.f32 %v1521, %v1693
        %v1726 = vmul.f32 %v1526, %v1694
        %v1727 = vmul.f32 %v1531, %v1695
        %v1728 = vmul.f32 %v1536, %v1696
        %v1729 = vmul.f32 %v1541, %v1697
        %v1730 = vmul.f32 %v1546, %v1698
        %v1731 = vmul.f32 %v1551, %v1699
        %v1732 = vmul.f32 %v1556, %v1700
        %v1733 = vmul.f32 %v1561, %v1701
        %v1734 = vmul.f32 %v1566, %v1702
        %v1735 = vmul.f32 %v1571, %v1703
        %v1736 = vmul.f32 %v1576, %v1704
        %v1737 = vmul.f32 %v1581, %v1705
        %v1738 = vmul.f32 %v1586, %v1706
        %v1739 = vmul.f32 %v1591, %v1707
        %v1740 = vmul.f32 %v1596, %v1708
        %v1741 = vmul.f32 %v1601, %v1709
        %v1742 = vmul.f32 %v1606, %v1710
        %v1743 = vpack.c.bf16 %v1712, %v1711
        %v1744 = vpack.c.bf16 %v1714, %v1713
        %v1745 = vpack.c.bf16 %v1716, %v1715
        %v1746 = vpack.c.bf16 %v1718, %v1717
        %v1747 = vpack.c.bf16 %v1720, %v1719
        %v1748 = vpack.c.bf16 %v1722, %v1721
        %v1749 = vpack.c.bf16 %v1724, %v1723
        %v1750 = vpack.c.bf16 %v1726, %v1725
        %v1751 = vpack.c.bf16 %v1728, %v1727
        %v1752 = vpack.c.bf16 %v1730, %v1729
        %v1753 = vpack.c.bf16 %v1732, %v1731
        %v1754 = vpack.c.bf16 %v1734, %v1733
        %v1755 = vpack.c.bf16 %v1736, %v1735
        %v1756 = vpack.c.bf16 %v1738, %v1737
        %v1757 = vpack.c.bf16 %v1740, %v1739
        %v1758 = vpack.c.bf16 %v1742, %v1741
        %v1759 = vld [vmem:[%s4] sm:$0xf]
        %v1760 = vld [vmem:[%s4 + $0x4] sm:$0xf]
        %v1761 = vld [vmem:[%s4 + $0x8] sm:$0xf]
        %v1762 = vld [vmem:[%s4 + $0xc] sm:$0xf]
        %v1763 = vld [vmem:[%s4 + $0x10] sm:$0xf]
        %v1764 = vld [vmem:[%s4 + $0x14] sm:$0xf]
        %v1765 = vld [vmem:[%s4 + $0x18] sm:$0xf]
        %v1766 = vld [vmem:[%s4 + $0x1c] sm:$0xf]
        %v1767 = vld [vmem:[%s4 + $0x20] sm:$0xf]
        %v1768 = vld [vmem:[%s4 + $0x24] sm:$0xf]
        %v1769 = vld [vmem:[%s4 + $0x28] sm:$0xf]
        %v1770 = vld [vmem:[%s4 + $0x2c] sm:$0xf]
        %v1771 = vld [vmem:[%s4 + $0x30] sm:$0xf]
        %v1772 = vld [vmem:[%s4 + $0x34] sm:$0xf]
        %v1773 = vld [vmem:[%s4 + $0x38] sm:$0xf]
        %v1774 = vld [vmem:[%s4 + $0x3c] sm:$0xf]
        %v1791 = vunpack.c.l.b16 %v1759
        %v1792 = vunpack.c.l.b16 %v1760
        %v1793 = vunpack.c.l.b16 %v1761
        %v1794 = vunpack.c.l.b16 %v1762
        %v1795 = vunpack.c.l.b16 %v1763
        %v1796 = vunpack.c.l.b16 %v1764
        %v1797 = vunpack.c.l.b16 %v1765
        %v1798 = vunpack.c.l.b16 %v1766
        %v1799 = vunpack.c.l.b16 %v1767
        %v1800 = vunpack.c.l.b16 %v1768
        %v1801 = vunpack.c.l.b16 %v1769
        %v1802 = vunpack.c.l.b16 %v1770
        %v1803 = vunpack.c.l.b16 %v1771
        %v1804 = vunpack.c.l.b16 %v1772
        %v1805 = vunpack.c.l.b16 %v1773
        %v1806 = vunpack.c.l.b16 %v1774
        %v1807 = vpack.c.b16 %v1792, %v1791
        %v1808 = vpack.c.b16 %v1794, %v1793
        %v1809 = vpack.c.b16 %v1796, %v1795
        %v1810 = vpack.c.b16 %v1798, %v1797
        %v1811 = vpack.c.b16 %v1800, %v1799
        %v1812 = vpack.c.b16 %v1802, %v1801
        %v1813 = vpack.c.b16 %v1804, %v1803
        %v1814 = vpack.c.b16 %v1806, %v1805
        %1823 = vmatprep.subr.bf16.mxu0 0
        %1824 = vmatpush1.bf16.msra.mxu0 %v1807
        %1825 = vmatprep.subr.bf16.mxu0 0
        %1826 = vmatpush1.bf16.msra.mxu0 %v1808
        %1827 = vmatprep.subr.bf16.mxu0 0
        %1828 = vmatpush1.bf16.msra.mxu0 %v1809
        %1829 = vmatprep.subr.bf16.mxu0 0
        %1830 = vmatpush1.bf16.msra.mxu0 %v1810
        %1831 = vmatprep.subr.bf16.mxu0 0
        %1832 = vmatpush1.bf16.msra.mxu0 %v1811
        %1833 = vmatprep.subr.bf16.mxu0 0
        %1834 = vmatpush1.bf16.msra.mxu0 %v1812
        %1835 = vmatprep.subr.bf16.mxu0 0
        %1836 = vmatpush1.bf16.msra.mxu0 %v1813
        %1837 = vmatprep.subr.bf16.mxu0 0
        %1838 = vmatpush1.bf16.msra.mxu0 %v1814
        %1839 = vmatprep.subr.bf16.mxu0 0
        %1840 = vmatpush1.bf16.msra.mxu0 0
        %1841 = vmatprep.subr.bf16.mxu0 0
        %1842 = vmatpush1.bf16.msra.mxu0 0
        %1843 = vmatprep.subr.bf16.mxu0 0
        %1844 = vmatpush1.bf16.msra.mxu0 0
        %1845 = vmatprep.subr.bf16.mxu0 0
        %1846 = vmatpush1.bf16.msra.mxu0 0
        %1847 = vmatprep.subr.bf16.mxu0 0
        %1848 = vmatpush1.bf16.msra.mxu0 0
        %1849 = vmatprep.subr.bf16.mxu0 0
        %1850 = vmatpush1.bf16.msra.mxu0 0
        %1851 = vmatprep.subr.bf16.mxu0 0
        %1852 = vmatpush1.bf16.msra.mxu0 0
        %1853 = vmatprep.subr.bf16.mxu0 0
        %1854 = vmatpush1.bf16.msra.mxu0 0
        %1855 = vmatprep.mubr.bf16.mxu0 0
        %1856 = vmatmul.mubr.bf16.gmra.mrb[0].mxu0 %v1743
        %v1857 = vpop.f32.mrb[0].mxu0
        %v1858 = vadd.f32 0.0, %v1857
        %v1859 = vpop.f32.mrb[0].mxu0
        %v1860 = vpop.f32.mrb[0].mxu0
        %v1861 = vadd.f32 0.0, %v1860
        %v1862 = vpop.f32.mrb[0].mxu0
        %1863 = vmatprep.mubr.bf16.mxu0 0
        %1864 = vmatmul.mubr.bf16.gmra.mrb[0].mxu0 %v1744
        %v1865 = vpop.f32.mrb[0].mxu0
        %v1866 = vadd.f32 0.0, %v1865
        %v1867 = vpop.f32.mrb[0].mxu0
        %v1868 = vpop.f32.mrb[0].mxu0
        %v1869 = vadd.f32 0.0, %v1868
        %v1870 = vpop.f32.mrb[0].mxu0
        %1871 = vmatprep.mubr.bf16.mxu0 0
        %1872 = vmatmul.mubr.bf16.gmra.mrb[0].mxu0 %v1745
        %v1873 = vpop.f32.mrb[0].mxu0
        %v1874 = vadd.f32 0.0, %v1873
        %v1875 = vpop.f32.mrb[0].mxu0
        %v1876 = vpop.f32.mrb[0].mxu0
        %v1877 = vadd.f32 0.0, %v1876
        %v1878 = vpop.f32.mrb[0].mxu0
        %1879 = vmatprep.mubr.bf16.mxu0 0
        %1880 = vmatmul.mubr.bf16.gmra.mrb[0].mxu0 %v1746
        %v1881 = vpop.f32.mrb[0].mxu0
        %v1882 = vadd.f32 0.0, %v1881
        %v1883 = vpop.f32.mrb[0].mxu0
        %v1884 = vpop.f32.mrb[0].mxu0
        %v1885 = vadd.f32 0.0, %v1884
        %v1886 = vpop.f32.mrb[0].mxu0
        %1887 = vmatprep.mubr.bf16.mxu0 0
        %1888 = vmatmul.mubr.bf16.gmra.mrb[0].mxu0 %v1747
        %v1889 = vpop.f32.mrb[0].mxu0
        %v1890 = vadd.f32 0.0, %v1889
        %v1891 = vpop.f32.mrb[0].mxu0
        %v1892 = vpop.f32.mrb[0].mxu0
        %v1893 = vadd.f32 0.0, %v1892
        %v1894 = vpop.f32.mrb[0].mxu0
        %1895 = vmatprep.mubr.bf16.mxu0 0
        %1896 = vmatmul.mubr.bf16.gmra.mrb[0].mxu0 %v1748
        %v1897 = vpop.f32.mrb[0].mxu0
        %v1898 = vadd.f32 0.0, %v1897
        %v1899 = vpop.f32.mrb[0].mxu0
        %v1900 = vpop.f32.mrb[0].mxu0
        %v1901 = vadd.f32 0.0, %v1900
        %v1902 = vpop.f32.mrb[0].mxu0
        %1903 = vmatprep.mubr.bf16.mxu0 0
        %1904 = vmatmul.mubr.bf16.gmra.mrb[0].mxu0 %v1749
        %v1905 = vpop.f32.mrb[0].mxu0
        %v1906 = vadd.f32 0.0, %v1905
        %v1907 = vpop.f32.mrb[0].mxu0
        %v1908 = vpop.f32.mrb[0].mxu0
        %v1909 = vadd.f32 0.0, %v1908
        %v1910 = vpop.f32.mrb[0].mxu0
        %1911 = vmatprep.mubr.bf16.mxu0 0
        %1912 = vmatmul.mubr.bf16.gmra.mrb[0].mxu0 %v1750
        %v1913 = vpop.f32.mrb[0].mxu0
        %v1914 = vadd.f32 0.0, %v1913
        %v1915 = vpop.f32.mrb[0].mxu0
        %v1916 = vpop.f32.mrb[0].mxu0
        %v1917 = vadd.f32 0.0, %v1916
        %v1918 = vpop.f32.mrb[0].mxu0
        %1919 = vmatprep.mubr.bf16.mxu0 0
        %1920 = vmatmul.mubr.bf16.gmra.mrb[0].mxu0 %v1751
        %v1921 = vpop.f32.mrb[0].mxu0
        %v1922 = vadd.f32 0.0, %v1921
        %v1923 = vpop.f32.mrb[0].mxu0
        %v1924 = vpop.f32.mrb[0].mxu0
        %v1925 = vadd.f32 0.0, %v1924
        %v1926 = vpop.f32.mrb[0].mxu0
        %1927 = vmatprep.mubr.bf16.mxu0 0
        %1928 = vmatmul.mubr.bf16.gmra.mrb[0].mxu0 %v1752
        %v1929 = vpop.f32.mrb[0].mxu0
        %v1930 = vadd.f32 0.0, %v1929
        %v1931 = vpop.f32.mrb[0].mxu0
        %v1932 = vpop.f32.mrb[0].mxu0
        %v1933 = vadd.f32 0.0, %v1932
        %v1934 = vpop.f32.mrb[0].mxu0
        %1935 = vmatprep.mubr.bf16.mxu0 0
        %1936 = vmatmul.mubr.bf16.gmra.mrb[0].mxu0 %v1753
        %v1937 = vpop.f32.mrb[0].mxu0
        %v1938 = vadd.f32 0.0, %v1937
        %v1939 = vpop.f32.mrb[0].mxu0
        %v1940 = vpop.f32.mrb[0].mxu0
        %v1941 = vadd.f32 0.0, %v1940
        %v1942 = vpop.f32.mrb[0].mxu0
        %1943 = vmatprep.mubr.bf16.mxu0 0
        %1944 = vmatmul.mubr.bf16.gmra.mrb[0].mxu0 %v1754
        %v1945 = vpop.f32.mrb[0].mxu0
        %v1946 = vadd.f32 0.0, %v1945
        %v1947 = vpop.f32.mrb[0].mxu0
        %v1948 = vpop.f32.mrb[0].mxu0
        %v1949 = vadd.f32 0.0, %v1948
        %v1950 = vpop.f32.mrb[0].mxu0
        %1951 = vmatprep.mubr.bf16.mxu0 0
        %1952 = vmatmul.mubr.bf16.gmra.mrb[0].mxu0 %v1755
        %v1953 = vpop.f32.mrb[0].mxu0
        %v1954 = vadd.f32 0.0, %v1953
        %v1955 = vpop.f32.mrb[0].mxu0
        %v1956 = vpop.f32.mrb[0].mxu0
        %v1957 = vadd.f32 0.0, %v1956
        %v1958 = vpop.f32.mrb[0].mxu0
        %1959 = vmatprep.mubr.bf16.mxu0 0
        %1960 = vmatmul.mubr.bf16.gmra.mrb[0].mxu0 %v1756
        %v1961 = vpop.f32.mrb[0].mxu0
        %v1962 = vadd.f32 0.0, %v1961
        %v1963 = vpop.f32.mrb[0].mxu0
        %v1964 = vpop.f32.mrb[0].mxu0
        %v1965 = vadd.f32 0.0, %v1964
        %v1966 = vpop.f32.mrb[0].mxu0
        %1967 = vmatprep.mubr.bf16.mxu0 0
        %1968 = vmatmul.mubr.bf16.gmra.mrb[0].mxu0 %v1757
        %v1969 = vpop.f32.mrb[0].mxu0
        %v1970 = vadd.f32 0.0, %v1969
        %v1971 = vpop.f32.mrb[0].mxu0
        %v1972 = vpop.f32.mrb[0].mxu0
        %v1973 = vadd.f32 0.0, %v1972
        %v1974 = vpop.f32.mrb[0].mxu0
        %1975 = vmatprep.mubr.bf16.mxu0 0
        %1976 = vmatmul.mubr.bf16.gmra.mrb[0].mxu0 %v1758
        %v1977 = vpop.f32.mrb[0].mxu0
        %v1978 = vadd.f32 0.0, %v1977
        %v1979 = vpop.f32.mrb[0].mxu0
        %v1980 = vpop.f32.mrb[0].mxu0
        %v1981 = vadd.f32 0.0, %v1980
        %v1982 = vpop.f32.mrb[0].mxu0
        %1983 = vdwg.mxu0
        %v1984 = vpack.c.bf16 %v1861, %v1858
        %v1985 = vpack.c.bf16 %v1869, %v1866
        %v1986 = vpack.c.bf16 %v1877, %v1874
        %v1987 = vpack.c.bf16 %v1885, %v1882
        %v1988 = vpack.c.bf16 %v1893, %v1890
        %v1989 = vpack.c.bf16 %v1901, %v1898
        %v1990 = vpack.c.bf16 %v1909, %v1906
        %v1991 = vpack.c.bf16 %v1917, %v1914
        %v1992 = vpack.c.bf16 %v1925, %v1922
        %v1993 = vpack.c.bf16 %v1933, %v1930
        %v1994 = vpack.c.bf16 %v1941, %v1938
        %v1995 = vpack.c.bf16 %v1949, %v1946
        %v1996 = vpack.c.bf16 %v1957, %v1954
        %v1997 = vpack.c.bf16 %v1965, %v1962
        %v1998 = vpack.c.bf16 %v1973, %v1970
        %v1999 = vpack.c.bf16 %v1981, %v1978
        %v2016 = vunpack.c.l.b16 %v1984
        %v2017 = vunpack.c.h.b16 %v1984
        %v2018 = vunpack.c.l.b16 %v1985
        %v2019 = vunpack.c.h.b16 %v1985
        %v2020 = vunpack.c.l.b16 %v1986
        %v2021 = vunpack.c.h.b16 %v1986
        %v2022 = vunpack.c.l.b16 %v1987
        %v2023 = vunpack.c.h.b16 %v1987
        %v2024 = vunpack.c.l.b16 %v1988
        %v2025 = vunpack.c.h.b16 %v1988
        %v2026 = vunpack.c.l.b16 %v1989
        %v2027 = vunpack.c.h.b16 %v1989
        %v2028 = vunpack.c.l.b16 %v1990
        %v2029 = vunpack.c.h.b16 %v1990
        %v2030 = vunpack.c.l.b16 %v1991
        %v2031 = vunpack.c.h.b16 %v1991
        %v2032 = vunpack.c.l.b16 %v1992
        %v2033 = vunpack.c.h.b16 %v1992
        %v2034 = vunpack.c.l.b16 %v1993
        %v2035 = vunpack.c.h.b16 %v1993
        %v2036 = vunpack.c.l.b16 %v1994
        %v2037 = vunpack.c.h.b16 %v1994
        %v2038 = vunpack.c.l.b16 %v1995
        %v2039 = vunpack.c.h.b16 %v1995
        %v2040 = vunpack.c.l.b16 %v1996
        %v2041 = vunpack.c.h.b16 %v1996
        %v2042 = vunpack.c.l.b16 %v1997
        %v2043 = vunpack.c.h.b16 %v1997
        %v2044 = vunpack.c.l.b16 %v1998
        %v2045 = vunpack.c.h.b16 %v1998
        %v2046 = vunpack.c.l.b16 %v1999
        %v2047 = vunpack.c.h.b16 %v1999
        %v2048 = vpack.c.b16 %v2016, %v2016
        %v2049 = vpack.c.b16 %v2017, %v2017
        %v2050 = vpack.c.b16 %v2018, %v2018
        %v2051 = vpack.c.b16 %v2019, %v2019
        %v2052 = vpack.c.b16 %v2020, %v2020
        %v2053 = vpack.c.b16 %v2021, %v2021
        %v2054 = vpack.c.b16 %v2022, %v2022
        %v2055 = vpack.c.b16 %v2023, %v2023
        %v2056 = vpack.c.b16 %v2024, %v2024
        %v2057 = vpack.c.b16 %v2025, %v2025
        %v2058 = vpack.c.b16 %v2026, %v2026
        %v2059 = vpack.c.b16 %v2027, %v2027
        %v2060 = vpack.c.b16 %v2028, %v2028
        %v2061 = vpack.c.b16 %v2029, %v2029
        %v2062 = vpack.c.b16 %v2030, %v2030
        %v2063 = vpack.c.b16 %v2031, %v2031
        %v2064 = vpack.c.b16 %v2032, %v2032
        %v2065 = vpack.c.b16 %v2033, %v2033
        %v2066 = vpack.c.b16 %v2034, %v2034
        %v2067 = vpack.c.b16 %v2035, %v2035
        %v2068 = vpack.c.b16 %v2036, %v2036
        %v2069 = vpack.c.b16 %v2037, %v2037
        %v2070 = vpack.c.b16 %v2038, %v2038
        %v2071 = vpack.c.b16 %v2039, %v2039
        %v2072 = vpack.c.b16 %v2040, %v2040
        %v2073 = vpack.c.b16 %v2041, %v2041
        %v2074 = vpack.c.b16 %v2042, %v2042
        %v2075 = vpack.c.b16 %v2043, %v2043
        %v2076 = vpack.c.b16 %v2044, %v2044
        %v2077 = vpack.c.b16 %v2045, %v2045
        %v2078 = vpack.c.b16 %v2046, %v2046
        %v2079 = vpack.c.b16 %v2047, %v2047
        %2112 = vst [vmem:[%s279] sm:$0xf] %v2048
        %2113 = vst [vmem:[%s279 + $0x4] sm:$0xf] %v2049
        %2114 = vst [vmem:[%s279 + $0x8] sm:$0xf] %v2050
        %2115 = vst [vmem:[%s279 + $0xc] sm:$0xf] %v2051
        %2116 = vst [vmem:[%s279 + $0x10] sm:$0xf] %v2052
        %2117 = vst [vmem:[%s279 + $0x14] sm:$0xf] %v2053
        %2118 = vst [vmem:[%s279 + $0x18] sm:$0xf] %v2054
        %2119 = vst [vmem:[%s279 + $0x1c] sm:$0xf] %v2055
        %2120 = vst [vmem:[%s279 + $0x20] sm:$0xf] %v2056
        %2121 = vst [vmem:[%s279 + $0x24] sm:$0xf] %v2057
        %2122 = vst [vmem:[%s279 + $0x28] sm:$0xf] %v2058
        %2123 = vst [vmem:[%s279 + $0x2c] sm:$0xf] %v2059
        %2124 = vst [vmem:[%s279 + $0x30] sm:$0xf] %v2060
        %2125 = vst [vmem:[%s279 + $0x34] sm:$0xf] %v2061
        %2126 = vst [vmem:[%s279 + $0x38] sm:$0xf] %v2062
        %2127 = vst [vmem:[%s279 + $0x3c] sm:$0xf] %v2063
        %2128 = vst [vmem:[%s279 + $0x40] sm:$0xf] %v2064
        %2129 = vst [vmem:[%s279 + $0x44] sm:$0xf] %v2065
        %2130 = vst [vmem:[%s279 + $0x48] sm:$0xf] %v2066
        %2131 = vst [vmem:[%s279 + $0x4c] sm:$0xf] %v2067
        %2132 = vst [vmem:[%s279 + $0x50] sm:$0xf] %v2068
        %2133 = vst [vmem:[%s279 + $0x54] sm:$0xf] %v2069
        %2134 = vst [vmem:[%s279 + $0x58] sm:$0xf] %v2070
        %2135 = vst [vmem:[%s279 + $0x5c] sm:$0xf] %v2071
        %2136 = vst [vmem:[%s279 + $0x60] sm:$0xf] %v2072
        %2137 = vst [vmem:[%s279 + $0x64] sm:$0xf] %v2073
        %2138 = vst [vmem:[%s279 + $0x68] sm:$0xf] %v2074
        %2139 = vst [vmem:[%s279 + $0x6c] sm:$0xf] %v2075
        %2140 = vst [vmem:[%s279 + $0x70] sm:$0xf] %v2076
        %2141 = vst [vmem:[%s279 + $0x74] sm:$0xf] %v2077
        %2142 = vst [vmem:[%s279 + $0x78] sm:$0xf] %v2078
        %2143 = vst [vmem:[%s279 + $0x7c] sm:$0xf] %v2079
      $region48: #{simple_gcn_encoder.4} parent=39 // pred_fallthru
        _
      %s2144 = smul.u32 32, %s20
      %p2145 = scmp.lt.s32.totalorder %s2144, 63
      %s2146 = scalar_select %p2145, %s2144, 63
      %s2147 = smul.addr %s2146, 4
      %s2148 = scalar_lea.vmem %s5, %s2147
      // Predicated region
      $region49: #{simple_gcn_encoder.4} parent=39 // pred_check
        %p2149 = pneg %p163
      $region50: #{simple_gcn_encoder.4} parent=39 // pred_check_branch
        %2151 = sbr.rel (%p2149) target = $region52
      $region51: #{simple_gcn_encoder.4} parent=39 // pred_region
        %s2152 = smul.u32 32, %s20
      $region52: #{simple_gcn_encoder.4} parent=39 // pred_fallthru
        _
    $region40: #{simple_gcn_encoder.4} parent=5 // pred_fallthru
      _
    %p2153 = scmp.le.s32.totalorder 2, %s11
    // Predicated region
    $region53: #{simple_gcn_encoder.4} parent=5 // pred_check
      %p2154 = pneg %p2153
    $region54: #{simple_gcn_encoder.4} parent=5 // pred_check_branch
      %2156 = sbr.rel (%p2154) target = $region56
    $region55: #{simple_gcn_encoder.4} parent=5 // pred_region
      %s2157 = ssub.s32 %s11, 2
      // Predicated region
      $region57: #{simple_gcn_encoder.4} parent=55 // pred_check
        %p2158 = pneg %p169
      $region58: #{simple_gcn_encoder.4} parent=55 // pred_check_branch
        %2160 = sbr.rel (%p2158) target = $region60
      $region59: #{simple_gcn_encoder.4} parent=55 // pred_region
        %s2161 = smul.u32 32, %s22
        %p2162 = scmp.lt.s32.totalorder %s2161, 63
        %s2163 = scalar_select %p2162, %s2161, 63
        %s2164 = smul.addr %s2163, 4
        %s2165 = scalar_lea.vmem %s5, %s2164
      $region60: #{simple_gcn_encoder.4} parent=55 // pred_fallthru
        _
    $region56: #{simple_gcn_encoder.4} parent=5 // pred_fallthru
      _
  $region6: #{simple_gcn_encoder.4} parent=0 // loop_footer
    %s15 = sadd.s32 1, %s11
  $region7: #{simple_gcn_encoder.4} parent=0 // loop_footer_branch
    %10 = sbr.rel target = $region3
  $region8: #{simple_gcn_encoder.4} parent=0 // loop_exit
    _

// kernel: simple_gcn_encoder.5
$region0: #{simple_gcn_encoder.5}
  #allocation0 [shape = 'u32[]', space=smem, size = 0x4, offset = 0x4, fixed_abs, tag = 'smem constant byte address 0x4 - core index']
  #allocation1 [shape = 'u32[144,128]{1,0:T(1,128)}', space=vmem, size = 0x12000, scoped, tag = 'internal scratch']
  #allocation2 [shape = 'f32[256,128]{1,0:T(8,128)}', space=vmem, size = 0x20000, scoped, tag = 'scratch operand']
  #allocation3 [shape = 'f32[1,1]{1,0:T(1,128)S(6)}', space=smem, size = 0x200, scoped, tag = 'scoped memory for simple_gcn_encoder.5']
  %s0 = inlined_call_operand.vmem [shape: bf16[512,512], index: 0, kind: input, shape index: {}]
  %s1 = inlined_call_operand.vmem [shape: bf16[512,128], index: 1, kind: input, shape index: {}]
  %s2 = inlined_call_operand.vmem [shape: f32[512,1], index: 2, kind: input, shape index: {}]
  %s3 = inlined_call_operand.vmem [shape: f32[1,128], index: 3, kind: input, shape index: {}]
  %s4 = inlined_call_operand.vmem [shape: bf16[512,128], index: 4, kind: input, shape index: {}]
  %s5 = inlined_call_operand.vmem [shape: bf16[128,128], index: 5, kind: input, shape index: {}]
  %s6 = inlined_call_operand.vmem [shape: f32[1,128], index: 6, kind: input, shape index: {}]
  %s7 = inlined_call_operand.<no memory space> [shape: f32[1,1], index: 7, kind: input, shape index: {}]
  %s8 = inlined_call_operand.vmem [shape: f32[512,128], index: 8, kind: output, shape index: {}]
  %s9 = sld [smem:[#allocation0]]
  $region73: #{simple_gcn_encoder.5} parent=0
    _
  %s11 = ssub.s32 1, %s9
  %s12 = scalar_select 0, %s11, %s9
  %13 = sst [smem:[#allocation3]] %s7
  loop: start=0, step=1, limit=4
  $region2: #{simple_gcn_encoder.5} parent=0 // loop_pre_header
    _
  $region3: #{simple_gcn_encoder.5} parent=0 // loop_header
    %s15 = sphi 0, %s19
    %p16 = scmp.ge.s32.totalorder %s15, 4
    %s22 = sphi 0, %s34
    %s23 = sphi 0, %s30
    %s24 = sphi 0, %s22
    %s25 = sphi 0, %s23
    %s26 = sphi 0, %s24
    %s27 = sphi 0, %s25
    %s39 = sphi 0, %s41
    %s42 = sphi 0, %s39
    %s43 = sphi 0, %s42
    %s59 = sphi 0, %s43
    %s63 = sphi 0, %s63
    %s65 = sphi 0, %s63
    %s66 = sphi 0, %s65
    %s80 = sphi 0, %s66
    %s86 = sphi 0, %s88
    %s89 = sphi 0, %s86
    %s90 = sphi 0, %s89
    %s106 = sphi 0, %s90
    %s110 = sphi 0, %s110
    %s112 = sphi 0, %s110
    %s113 = sphi 0, %s112
    %s127 = sphi 0, %s113
    %s133 = sphi 0, %s135
    %s136 = sphi 0, %s133
    %s137 = sphi 0, %s136
    %s153 = sphi 0, %s137
    %s157 = sphi 0, %s157
    %s159 = sphi 0, %s157
    %s160 = sphi 0, %s159
    %s174 = sphi 0, %s160
    %s178 = sphi 0, %s178
    %s180 = sphi 0, %s178
    %s181 = sphi 0, %s180
    %s195 = sphi 0, %s181
    %s199 = sphi 0, %s199
    %s201 = sphi 0, %s199
    %s202 = sphi 0, %s201
    %s216 = sphi 0, %s202
    %s222 = sphi 0, %s224
    %s225 = sphi 0, %s222
    %s226 = sphi 0, %s225
    %s242 = sphi 0, %s226
  $region4: #{simple_gcn_encoder.5} parent=0 // loop_header_branch
    %18 = sbr.rel (%p16) target = $region8
  $region5: #{simple_gcn_encoder.5} parent=0 // loop_body
    %s20 = ssub.s32 %s15, 1
    %s21 = ssub.s32 %s15, 2
    %s28 = sadd.s32 1, %s23
    %p29 = scmp.ge.s32.totalorder %s28, 1
    %s30 = scalar_select %p29, 0, %s28
    %s31 = sadd.s32 1, %s22
    %s32 = scalar_select %p29, %s31, %s22
    %p33 = scmp.ge.s32.totalorder %s32, 2
    %s34 = scalar_select %p33, 0, %s32
    %s35 = ssub.s32 %s22, %s34
    %s36 = ssub.s32 %s23, %s30
    %s37 = sor.u32 %s35, %s36
    %p38 = scmp.eq.s32.totalorder %s37, 0
    %s40 = sadd.s32 %s39, 1
    %s41 = scalar_select %p38, %s39, %s40
    %p44 = pneg %p38
    %p45 = scmp.eq.s32.totalorder %s15, 1
    %p46 = por %p44, %p45
    %p47 = scmp.ne.s32.totalorder %s39, %s42
    %p48 = scmp.eq.s32.totalorder %s15, 0
    %p49 = por %p47, %p48
    %p50 = scmp.ne.s32.totalorder %s39, %s42
    %p51 = scmp.eq.s32.totalorder %s20, 1
    %p52 = por %p50, %p51
    %p53 = scmp.ne.s32.totalorder %s42, %s43
    %p54 = scmp.eq.s32.totalorder %s20, 0
    %p55 = por %p53, %p54
    %p56 = scmp.ne.s32.totalorder %s42, %s43
    %p57 = scmp.eq.s32.totalorder %s21, 1
    %p58 = por %p56, %p57
    %p60 = scmp.ne.s32.totalorder %s43, %s59
    %p61 = scmp.eq.s32.totalorder %s21, 0
    %p62 = por %p60, %p61
    %s64 = sadd.s32 %s63, 1
    %p67 = scmp.eq.s32.totalorder %s15, 1
    %p68 = scmp.ne.s32.totalorder %s63, %s65
    %p69 = scmp.eq.s32.totalorder %s15, 0
    %p70 = por %p68, %p69
    %p71 = scmp.ne.s32.totalorder %s63, %s65
    %p72 = scmp.eq.s32.totalorder %s20, 1
    %p73 = por %p71, %p72
    %p74 = scmp.ne.s32.totalorder %s65, %s66
    %p75 = scmp.eq.s32.totalorder %s20, 0
    %p76 = por %p74, %p75
    %p77 = scmp.ne.s32.totalorder %s65, %s66
    %p78 = scmp.eq.s32.totalorder %s21, 1
    %p79 = por %p77, %p78
    %p81 = scmp.ne.s32.totalorder %s66, %s80
    %p82 = scmp.eq.s32.totalorder %s21, 0
    %p83 = por %p81, %p82
    %s84 = ssub.s32 %s22, %s34
    %p85 = scmp.eq.s32.totalorder %s84, 0
    %s87 = sadd.s32 %s86, 1
    %s88 = scalar_select %p85, %s86, %s87
    %p91 = pneg %p85
    %p92 = scmp.eq.s32.totalorder %s15, 1
    %p93 = por %p91, %p92
    %p94 = scmp.ne.s32.totalorder %s86, %s89
    %p95 = scmp.eq.s32.totalorder %s15, 0
    %p96 = por %p94, %p95
    %p97 = scmp.ne.s32.totalorder %s86, %s89
    %p98 = scmp.eq.s32.totalorder %s20, 1
    %p99 = por %p97, %p98
    %p100 = scmp.ne.s32.totalorder %s89, %s90
    %p101 = scmp.eq.s32.totalorder %s20, 0
    %p102 = por %p100, %p101
    %p103 = scmp.ne.s32.totalorder %s89, %s90
    %p104 = scmp.eq.s32.totalorder %s21, 1
    %p105 = por %p103, %p104
    %p107 = scmp.ne.s32.totalorder %s90, %s106
    %p108 = scmp.eq.s32.totalorder %s21, 0
    %p109 = por %p107, %p108
    %s111 = sadd.s32 %s110, 1
    %p114 = scmp.eq.s32.totalorder %s15, 1
    %p115 = scmp.ne.s32.totalorder %s110, %s112
    %p116 = scmp.eq.s32.totalorder %s15, 0
    %p117 = por %p115, %p116
    %p118 = scmp.ne.s32.totalorder %s110, %s112
    %p119 = scmp.eq.s32.totalorder %s20, 1
    %p120 = por %p118, %p119
    %p121 = scmp.ne.s32.totalorder %s112, %s113
    %p122 = scmp.eq.s32.totalorder %s20, 0
    %p123 = por %p121, %p122
    %p124 = scmp.ne.s32.totalorder %s112, %s113
    %p125 = scmp.eq.s32.totalorder %s21, 1
    %p126 = por %p124, %p125
    %p128 = scmp.ne.s32.totalorder %s113, %s127
    %p129 = scmp.eq.s32.totalorder %s21, 0
    %p130 = por %p128, %p129
    %s131 = ssub.s32 %s22, %s34
    %p132 = scmp.eq.s32.totalorder %s131, 0
    %s134 = sadd.s32 %s133, 1
    %s135 = scalar_select %p132, %s133, %s134
    %p138 = pneg %p132
    %p139 = scmp.eq.s32.totalorder %s15, 1
    %p140 = por %p138, %p139
    %p141 = scmp.ne.s32.totalorder %s133, %s136
    %p142 = scmp.eq.s32.totalorder %s15, 0
    %p143 = por %p141, %p142
    %p144 = scmp.ne.s32.totalorder %s133, %s136
    %p145 = scmp.eq.s32.totalorder %s20, 1
    %p146 = por %p144, %p145
    %p147 = scmp.ne.s32.totalorder %s136, %s137
    %p148 = scmp.eq.s32.totalorder %s20, 0
    %p149 = por %p147, %p148
    %p150 = scmp.ne.s32.totalorder %s136, %s137
    %p151 = scmp.eq.s32.totalorder %s21, 1
    %p152 = por %p150, %p151
    %p154 = scmp.ne.s32.totalorder %s137, %s153
    %p155 = scmp.eq.s32.totalorder %s21, 0
    %p156 = por %p154, %p155
    %s158 = sadd.s32 %s157, 1
    %p161 = scmp.eq.s32.totalorder %s15, 1
    %p162 = scmp.ne.s32.totalorder %s157, %s159
    %p163 = scmp.eq.s32.totalorder %s15, 0
    %p164 = por %p162, %p163
    %p165 = scmp.ne.s32.totalorder %s157, %s159
    %p166 = scmp.eq.s32.totalorder %s20, 1
    %p167 = por %p165, %p166
    %p168 = scmp.ne.s32.totalorder %s159, %s160
    %p169 = scmp.eq.s32.totalorder %s20, 0
    %p170 = por %p168, %p169
    %p171 = scmp.ne.s32.totalorder %s159, %s160
    %p172 = scmp.eq.s32.totalorder %s21, 1
    %p173 = por %p171, %p172
    %p175 = scmp.ne.s32.totalorder %s160, %s174
    %p176 = scmp.eq.s32.totalorder %s21, 0
    %p177 = por %p175, %p176
    %s179 = sadd.s32 %s178, 1
    %p182 = scmp.eq.s32.totalorder %s15, 1
    %p183 = scmp.ne.s32.totalorder %s178, %s180
    %p184 = scmp.eq.s32.totalorder %s15, 0
    %p185 = por %p183, %p184
    %p186 = scmp.ne.s32.totalorder %s178, %s180
    %p187 = scmp.eq.s32.totalorder %s20, 1
    %p188 = por %p186, %p187
    %p189 = scmp.ne.s32.totalorder %s180, %s181
    %p190 = scmp.eq.s32.totalorder %s20, 0
    %p191 = por %p189, %p190
    %p192 = scmp.ne.s32.totalorder %s180, %s181
    %p193 = scmp.eq.s32.totalorder %s21, 1
    %p194 = por %p192, %p193
    %p196 = scmp.ne.s32.totalorder %s181, %s195
    %p197 = scmp.eq.s32.totalorder %s21, 0
    %p198 = por %p196, %p197
    %s200 = sadd.s32 %s199, 1
    %p203 = scmp.eq.s32.totalorder %s15, 1
    %p204 = scmp.ne.s32.totalorder %s199, %s201
    %p205 = scmp.eq.s32.totalorder %s15, 0
    %p206 = por %p204, %p205
    %p207 = scmp.ne.s32.totalorder %s199, %s201
    %p208 = scmp.eq.s32.totalorder %s20, 1
    %p209 = por %p207, %p208
    %p210 = scmp.ne.s32.totalorder %s201, %s202
    %p211 = scmp.eq.s32.totalorder %s20, 0
    %p212 = por %p210, %p211
    %p213 = scmp.ne.s32.totalorder %s201, %s202
    %p214 = scmp.eq.s32.totalorder %s21, 1
    %p215 = por %p213, %p214
    %p217 = scmp.ne.s32.totalorder %s202, %s216
    %p218 = scmp.eq.s32.totalorder %s21, 0
    %p219 = por %p217, %p218
    %s220 = ssub.s32 %s22, %s34
    %p221 = scmp.eq.s32.totalorder %s220, 0
    %s223 = sadd.s32 %s222, 1
    %s224 = scalar_select %p221, %s222, %s223
    %p227 = pneg %p221
    %p228 = scmp.eq.s32.totalorder %s15, 1
    %p229 = por %p227, %p228
    %p230 = scmp.ne.s32.totalorder %s222, %s225
    %p231 = scmp.eq.s32.totalorder %s15, 0
    %p232 = por %p230, %p231
    %p233 = scmp.ne.s32.totalorder %s222, %s225
    %p234 = scmp.eq.s32.totalorder %s20, 1
    %p235 = por %p233, %p234
    %p236 = scmp.ne.s32.totalorder %s225, %s226
    %p237 = scmp.eq.s32.totalorder %s20, 0
    %p238 = por %p236, %p237
    %p239 = scmp.ne.s32.totalorder %s225, %s226
    %p240 = scmp.eq.s32.totalorder %s21, 1
    %p241 = por %p239, %p240
    %p243 = scmp.ne.s32.totalorder %s226, %s242
    %p244 = scmp.eq.s32.totalorder %s21, 0
    %p245 = por %p243, %p244
    %p246 = scmp.le.s32.totalorder 1, %s15
    %p247 = scmp.lt.s32.totalorder %s15, 3
    %p248 = pnand %p246, %p247
    %p249 = pneg %p248
    // Predicated region
    $region9: #{simple_gcn_encoder.5} parent=5 // pred_check
      _
    $region10: #{simple_gcn_encoder.5} parent=5 // pred_check_branch
      %251 = sbr.rel (%p248) target = $region12
    $region11: #{simple_gcn_encoder.5} parent=5 // pred_region
      %s252 = ssub.s32 %s15, 1
      // Predicated region
      $region13: #{simple_gcn_encoder.5} parent=11 // pred_check
        %p253 = pneg %p76
      $region14: #{simple_gcn_encoder.5} parent=11 // pred_check_branch
        %255 = sbr.rel (%p253) target = $region16
      $region15: #{simple_gcn_encoder.5} parent=11 // pred_region
        _
      $region16: #{simple_gcn_encoder.5} parent=11 // pred_fallthru
        _
      // Predicated region
      $region17: #{simple_gcn_encoder.5} parent=11 // pred_check
        %p256 = pneg %p123
      $region18: #{simple_gcn_encoder.5} parent=11 // pred_check_branch
        %258 = sbr.rel (%p256) target = $region20
      $region19: #{simple_gcn_encoder.5} parent=11 // pred_region
        _
      $region20: #{simple_gcn_encoder.5} parent=11 // pred_fallthru
        _
      // Predicated region
      $region21: #{simple_gcn_encoder.5} parent=11 // pred_check
        %p259 = pneg %p170
      $region22: #{simple_gcn_encoder.5} parent=11 // pred_check_branch
        %261 = sbr.rel (%p259) target = $region24
      $region23: #{simple_gcn_encoder.5} parent=11 // pred_region
        _
      $region24: #{simple_gcn_encoder.5} parent=11 // pred_fallthru
        _
      // Predicated region
      $region25: #{simple_gcn_encoder.5} parent=11 // pred_check
        %p262 = pneg %p191
      $region26: #{simple_gcn_encoder.5} parent=11 // pred_check_branch
        %264 = sbr.rel (%p262) target = $region28
      $region27: #{simple_gcn_encoder.5} parent=11 // pred_region
        _
      $region28: #{simple_gcn_encoder.5} parent=11 // pred_fallthru
        _
      // Predicated region
      $region29: #{simple_gcn_encoder.5} parent=11 // pred_check
        %p265 = pneg %p212
      $region30: #{simple_gcn_encoder.5} parent=11 // pred_check_branch
        %267 = sbr.rel (%p265) target = $region32
      $region31: #{simple_gcn_encoder.5} parent=11 // pred_region
        _
      $region32: #{simple_gcn_encoder.5} parent=11 // pred_fallthru
        _
    $region12: #{simple_gcn_encoder.5} parent=5 // pred_fallthru
      _
    %p268 = scmp.lt.s32.totalorder %s15, 2
    // Predicated region
    $region33: #{simple_gcn_encoder.5} parent=5 // pred_check
      %p269 = pneg %p268
    $region34: #{simple_gcn_encoder.5} parent=5 // pred_check_branch
      %271 = sbr.rel (%p269) target = $region36
    $region35: #{simple_gcn_encoder.5} parent=5 // pred_region
      // Predicated region
      $region37: #{simple_gcn_encoder.5} parent=35 // pred_check
        %p272 = pneg %p49
      $region38: #{simple_gcn_encoder.5} parent=35 // pred_check_branch
        %274 = sbr.rel (%p272) target = $region40
      $region39: #{simple_gcn_encoder.5} parent=35 // pred_region
        %s275 = smul.u32 32, %s22
        %s276 = smul.u32 4, %s23
        %p277 = scmp.lt.s32.totalorder %s275, 63
        %s278 = scalar_select %p277, %s275, 63
        %p279 = scmp.lt.s32.totalorder %s276, 3
        %s280 = scalar_select %p279, %s276, 3
        %s281 = smul.addr %s278, 4
        %s282 = sadd.s32 %s280, %s281
        %s283 = smul.addr %s282, 4
        %s284 = scalar_lea.vmem %s0, %s283
        %s285 = smul.u32 32, %s22
        %s286 = smul.u32 4, %s23
      $region40: #{simple_gcn_encoder.5} parent=35 // pred_fallthru
        _
      // Predicated region
      $region41: #{simple_gcn_encoder.5} parent=35 // pred_check
        %p287 = pneg %p96
      $region42: #{simple_gcn_encoder.5} parent=35 // pred_check_branch
        %289 = sbr.rel (%p287) target = $region44
      $region43: #{simple_gcn_encoder.5} parent=35 // pred_region
        %s290 = smul.u32 32, %s22
        %p291 = scmp.lt.s32.totalorder %s290, 63
        %s292 = scalar_select %p291, %s290, 63
        %s293 = smul.addr %s292, 8
        %s294 = scalar_lea.vmem %s2, %s293
        %s295 = smul.u32 32, %s22
      $region44: #{simple_gcn_encoder.5} parent=35 // pred_fallthru
        _
      // Predicated region
      $region45: #{simple_gcn_encoder.5} parent=35 // pred_check
        %p296 = pneg %p143
      $region46: #{simple_gcn_encoder.5} parent=35 // pred_check_branch
        %298 = sbr.rel (%p296) target = $region48
      $region47: #{simple_gcn_encoder.5} parent=35 // pred_region
        %s299 = smul.u32 32, %s22
        %p300 = scmp.lt.s32.totalorder %s299, 63
        %s301 = scalar_select %p300, %s299, 63
        %s302 = smul.addr %s301, 4
        %s303 = scalar_lea.vmem %s4, %s302
        %s304 = smul.u32 32, %s22
      $region48: #{simple_gcn_encoder.5} parent=35 // pred_fallthru
        _
    $region36: #{simple_gcn_encoder.5} parent=5 // pred_fallthru
      _
    %p305 = scmp.le.s32.totalorder 1, %s15
    %p306 = scmp.lt.s32.totalorder %s15, 3
    %p307 = pnand %p305, %p306
    %p308 = pneg %p307
    // Predicated region
    $region49: #{simple_gcn_encoder.5} parent=5 // pred_check
      _
    $region50: #{simple_gcn_encoder.5} parent=5 // pred_check_branch
      %310 = sbr.rel (%p307) target = $region52
    $region51: #{simple_gcn_encoder.5} parent=5 // pred_region
      %s311 = ssub.s32 %s15, 1
      %s312 = smul.u32 32, %s24
      %s313 = smul.u32 4, %s25
      %p314 = scmp.lt.s32.totalorder %s312, 63
      %s315 = scalar_select %p314, %s312, 63
      %p316 = scmp.lt.s32.totalorder %s313, 3
      %s317 = scalar_select %p316, %s313, 3
      %s318 = smul.addr %s315, 4
      %s319 = sadd.s32 %s317, %s318
      %s320 = smul.addr %s319, 4
      %s321 = scalar_lea.vmem %s0, %s320
      %p322 = pneg %p55
      %p323 = pneg %p52
      %p324 = pneg %p76
      %p325 = pneg %p73
      %s326 = smul.u32 32, %s24
      %p327 = scmp.lt.s32.totalorder %s326, 63
      %s328 = scalar_select %p327, %s326, 63
      %s329 = smul.addr %s328, 8
      %s330 = scalar_lea.vmem %s2, %s329
      %p331 = pneg %p102
      %p332 = pneg %p99
      %p333 = pneg %p123
      %p334 = pneg %p120
      %s335 = smul.u32 32, %s24
      %p336 = scmp.lt.s32.totalorder %s335, 63
      %s337 = scalar_select %p336, %s335, 63
      %s338 = smul.addr %s337, 4
      %s339 = scalar_lea.vmem %s4, %s338
      %p340 = pneg %p149
      %p341 = pneg %p146
      %p342 = pneg %p170
      %p343 = pneg %p167
      %p344 = pneg %p191
      %p345 = pneg %p188
      %p346 = pneg %p212
      %p347 = pneg %p209
      %p348 = pneg %p238
      %p349 = pneg %p235
      %s350 = smul.u32 32, %s24
      %p351 = scmp.lt.s32.totalorder %s350, 63
      %s352 = scalar_select %p351, %s350, 63
      %s353 = smul.addr %s352, 8
      %s354 = scalar_lea.vmem %s8, %s353
      %s355 = smul.u32 32, %s24
      %s356 = smul.u32 4, %s25
      %p357 = scmp.lt.s32.totalorder %s355, 63
      %s358 = scalar_select %p357, %s355, 63
      %p359 = scmp.lt.s32.totalorder %s356, 3
      %s360 = scalar_select %p359, %s356, 3
      %s361 = smul.addr %s358, 4
      %s362 = sadd.s32 %s360, %s361
      %s363 = smul.addr %s362, 4
      %s364 = scalar_lea.vmem %s0, %s363
      %s365 = smul.u32 32, %s24
      %s366 = smul.u32 4, %s25
      %s367 = smul.u32 32, %s24
      %p368 = scmp.lt.s32.totalorder %s367, 63
      %s369 = scalar_select %p368, %s367, 63
      %s370 = smul.addr %s369, 8
      %s371 = scalar_lea.vmem %s2, %s370
      %s372 = smul.u32 32, %s24
      %s373 = smul.u32 32, %s24
      %p374 = scmp.lt.s32.totalorder %s373, 63
      %s375 = scalar_select %p374, %s373, 63
      %s376 = smul.addr %s375, 4
      %s377 = scalar_lea.vmem %s4, %s376
      %s378 = smul.u32 32, %s24
      %s379 = smul.u32 32, %s24
      %p380 = scmp.lt.s32.totalorder %s379, 63
      %s381 = scalar_select %p380, %s379, 63
      %s382 = smul.addr %s381, 8
      %s383 = scalar_lea.vmem %s8, %s382
      %s384 = smul.u32 32, %s24
      %p386 = scmp.eq.s32.totalorder %s25, 0
      // Predicated region
      $region53: #{simple_gcn_encoder.5} parent=51 // pred_check
        %p387 = pneg %p386
      $region54: #{simple_gcn_encoder.5} parent=51 // pred_check_branch
        %389 = sbr.rel (%p387) target = $region56
      $region55: #{simple_gcn_encoder.5} parent=51 // pred_region
        %390 = vst [vmem:[#allocation2] sm:$0xff] 0.0
        %391 = vst [vmem:[#allocation2 + $0x8] sm:$0xff] 0.0
        %392 = vst [vmem:[#allocation2 + $0x10] sm:$0xff] 0.0
        %393 = vst [vmem:[#allocation2 + $0x18] sm:$0xff] 0.0
        %394 = vst [vmem:[#allocation2 + $0x20] sm:$0xff] 0.0
        %395 = vst [vmem:[#allocation2 + $0x28] sm:$0xff] 0.0
        %396 = vst [vmem:[#allocation2 + $0x30] sm:$0xff] 0.0
        %397 = vst [vmem:[#allocation2 + $0x38] sm:$0xff] 0.0
        %398 = vst [vmem:[#allocation2 + $0x40] sm:$0xff] 0.0
        %399 = vst [vmem:[#allocation2 + $0x48] sm:$0xff] 0.0
        %400 = vst [vmem:[#allocation2 + $0x50] sm:$0xff] 0.0
        %401 = vst [vmem:[#allocation2 + $0x58] sm:$0xff] 0.0
        %402 = vst [vmem:[#allocation2 + $0x60] sm:$0xff] 0.0
        %403 = vst [vmem:[#allocation2 + $0x68] sm:$0xff] 0.0
        %404 = vst [vmem:[#allocation2 + $0x70] sm:$0xff] 0.0
        %405 = vst [vmem:[#allocation2 + $0x78] sm:$0xff] 0.0
        %406 = vst [vmem:[#allocation2 + $0x80] sm:$0xff] 0.0
        %407 = vst [vmem:[#allocation2 + $0x88] sm:$0xff] 0.0
        %408 = vst [vmem:[#allocation2 + $0x90] sm:$0xff] 0.0
        %409 = vst [vmem:[#allocation2 + $0x98] sm:$0xff] 0.0
        %410 = vst [vmem:[#allocation2 + $0xa0] sm:$0xff] 0.0
        %411 = vst [vmem:[#allocation2 + $0xa8] sm:$0xff] 0.0
        %412 = vst [vmem:[#allocation2 + $0xb0] sm:$0xff] 0.0
        %413 = vst [vmem:[#allocation2 + $0xb8] sm:$0xff] 0.0
        %414 = vst [vmem:[#allocation2 + $0xc0] sm:$0xff] 0.0
        %415 = vst [vmem:[#allocation2 + $0xc8] sm:$0xff] 0.0
        %416 = vst [vmem:[#allocation2 + $0xd0] sm:$0xff] 0.0
        %417 = vst [vmem:[#allocation2 + $0xd8] sm:$0xff] 0.0
        %418 = vst [vmem:[#allocation2 + $0xe0] sm:$0xff] 0.0
        %419 = vst [vmem:[#allocation2 + $0xe8] sm:$0xff] 0.0
        %420 = vst [vmem:[#allocation2 + $0xf0] sm:$0xff] 0.0
        %421 = vst [vmem:[#allocation2 + $0xf8] sm:$0xff] 0.0
      $region56: #{simple_gcn_encoder.5} parent=51 // pred_fallthru
        _
      %s422 = smul.u32 %s25, 512
      %v423 = vld [vmem:[#allocation2] sm:$0xff]
      %v424 = vld [vmem:[#allocation2 + $0x8] sm:$0xff]
      %v425 = vld [vmem:[#allocation2 + $0x10] sm:$0xff]
      %v426 = vld [vmem:[#allocation2 + $0x18] sm:$0xff]
      %v427 = vld [vmem:[#allocation2 + $0x20] sm:$0xff]
      %v428 = vld [vmem:[#allocation2 + $0x28] sm:$0xff]
      %v429 = vld [vmem:[#allocation2 + $0x30] sm:$0xff]
      %v430 = vld [vmem:[#allocation2 + $0x38] sm:$0xff]
      %v431 = vld [vmem:[#allocation2 + $0x40] sm:$0xff]
      %v432 = vld [vmem:[#allocation2 + $0x48] sm:$0xff]
      %v433 = vld [vmem:[#allocation2 + $0x50] sm:$0xff]
      %v434 = vld [vmem:[#allocation2 + $0x58] sm:$0xff]
      %v435 = vld [vmem:[#allocation2 + $0x60] sm:$0xff]
      %v436 = vld [vmem:[#allocation2 + $0x68] sm:$0xff]
      %v437 = vld [vmem:[#allocation2 + $0x70] sm:$0xff]
      %v438 = vld [vmem:[#allocation2 + $0x78] sm:$0xff]
      %v439 = vld [vmem:[#allocation2 + $0x80] sm:$0xff]
      %v440 = vld [vmem:[#allocation2 + $0x88] sm:$0xff]
      %v441 = vld [vmem:[#allocation2 + $0x90] sm:$0xff]
      %v442 = vld [vmem:[#allocation2 + $0x98] sm:$0xff]
      %v443 = vld [vmem:[#allocation2 + $0xa0] sm:$0xff]
      %v444 = vld [vmem:[#allocation2 + $0xa8] sm:$0xff]
      %v445 = vld [vmem:[#allocation2 + $0xb0] sm:$0xff]
      %v446 = vld [vmem:[#allocation2 + $0xb8] sm:$0xff]
      %v447 = vld [vmem:[#allocation2 + $0xc0] sm:$0xff]
      %v448 = vld [vmem:[#allocation2 + $0xc8] sm:$0xff]
      %v449 = vld [vmem:[#allocation2 + $0xd0] sm:$0xff]
      %v450 = vld [vmem:[#allocation2 + $0xd8] sm:$0xff]
      %v451 = vld [vmem:[#allocation2 + $0xe0] sm:$0xff]
      %v452 = vld [vmem:[#allocation2 + $0xe8] sm:$0xff]
      %v453 = vld [vmem:[#allocation2 + $0xf0] sm:$0xff]
      %v454 = vld [vmem:[#allocation2 + $0xf8] sm:$0xff]
      %v455 = vld [vmem:[%s364] sm:$0xff]
      %v456 = vld [vmem:[%s364 + $0x8] sm:$0xff]
      %v457 = vld [vmem:[%s364 + $0x10] sm:$0xff]
      %v458 = vld [vmem:[%s364 + $0x18] sm:$0xff]
      %v459 = vld [vmem:[%s364 + $0x20] sm:$0xff]
      %v460 = vld [vmem:[%s364 + $0x28] sm:$0xff]
      %v461 = vld [vmem:[%s364 + $0x30] sm:$0xff]
      %v462 = vld [vmem:[%s364 + $0x38] sm:$0xff]
      %v463 = vld [vmem:[%s364 + $0x40] sm:$0xff]
      %v464 = vld [vmem:[%s364 + $0x48] sm:$0xff]
      %v465 = vld [vmem:[%s364 + $0x50] sm:$0xff]
      %v466 = vld [vmem:[%s364 + $0x58] sm:$0xff]
      %v467 = vld [vmem:[%s364 + $0x60] sm:$0xff]
      %v468 = vld [vmem:[%s364 + $0x68] sm:$0xff]
      %v469 = vld [vmem:[%s364 + $0x70] sm:$0xff]
      %v470 = vld [vmem:[%s364 + $0x78] sm:$0xff]
      %v471 = vld [vmem:[%s364 + $0x80] sm:$0xff]
      %v472 = vld [vmem:[%s364 + $0x88] sm:$0xff]
      %v473 = vld [vmem:[%s364 + $0x90] sm:$0xff]
      %v474 = vld [vmem:[%s364 + $0x98] sm:$0xff]
      %v475 = vld [vmem:[%s364 + $0xa0] sm:$0xff]
      %v476 = vld [vmem:[%s364 + $0xa8] sm:$0xff]
      %v477 = vld [vmem:[%s364 + $0xb0] sm:$0xff]
      %v478 = vld [vmem:[%s364 + $0xb8] sm:$0xff]
      %v479 = vld [vmem:[%s364 + $0xc0] sm:$0xff]
      %v480 = vld [vmem:[%s364 + $0xc8] sm:$0xff]
      %v481 = vld [vmem:[%s364 + $0xd0] sm:$0xff]
      %v482 = vld [vmem:[%s364 + $0xd8] sm:$0xff]
      %v483 = vld [vmem:[%s364 + $0xe0] sm:$0xff]
      %v484 = vld [vmem:[%s364 + $0xe8] sm:$0xff]
      %v485 = vld [vmem:[%s364 + $0xf0] sm:$0xff]
      %v486 = vld [vmem:[%s364 + $0xf8] sm:$0xff]
      %v487 = vld [vmem:[%s364 + $0x100] sm:$0xff]
      %v488 = vld [vmem:[%s364 + $0x108] sm:$0xff]
      %v489 = vld [vmem:[%s364 + $0x110] sm:$0xff]
      %v490 = vld [vmem:[%s364 + $0x118] sm:$0xff]
      %v491 = vld [vmem:[%s364 + $0x120] sm:$0xff]
      %v492 = vld [vmem:[%s364 + $0x128] sm:$0xff]
      %v493 = vld [vmem:[%s364 + $0x130] sm:$0xff]
      %v494 = vld [vmem:[%s364 + $0x138] sm:$0xff]
      %v495 = vld [vmem:[%s364 + $0x140] sm:$0xff]
      %v496 = vld [vmem:[%s364 + $0x148] sm:$0xff]
      %v497 = vld [vmem:[%s364 + $0x150] sm:$0xff]
      %v498 = vld [vmem:[%s364 + $0x158] sm:$0xff]
      %v499 = vld [vmem:[%s364 + $0x160] sm:$0xff]
      %v500 = vld [vmem:[%s364 + $0x168] sm:$0xff]
      %v501 = vld [vmem:[%s364 + $0x170] sm:$0xff]
      %v502 = vld [vmem:[%s364 + $0x178] sm:$0xff]
      %v503 = vld [vmem:[%s364 + $0x180] sm:$0xff]
      %v504 = vld [vmem:[%s364 + $0x188] sm:$0xff]
      %v505 = vld [vmem:[%s364 + $0x190] sm:$0xff]
      %v506 = vld [vmem:[%s364 + $0x198] sm:$0xff]
      %v507 = vld [vmem:[%s364 + $0x1a0] sm:$0xff]
      %v508 = vld [vmem:[%s364 + $0x1a8] sm:$0xff]
      %v509 = vld [vmem:[%s364 + $0x1b0] sm:$0xff]
      %v510 = vld [vmem:[%s364 + $0x1b8] sm:$0xff]
      %v511 = vld [vmem:[%s364 + $0x1c0] sm:$0xff]
      %v512 = vld [vmem:[%s364 + $0x1c8] sm:$0xff]
      %v513 = vld [vmem:[%s364 + $0x1d0] sm:$0xff]
      %v514 = vld [vmem:[%s364 + $0x1d8] sm:$0xff]
      %v515 = vld [vmem:[%s364 + $0x1e0] sm:$0xff]
      %v516 = vld [vmem:[%s364 + $0x1e8] sm:$0xff]
      %v517 = vld [vmem:[%s364 + $0x1f0] sm:$0xff]
      %v518 = vld [vmem:[%s364 + $0x1f8] sm:$0xff]
      %s519 = sshra.s32 %s422, 3
      %s520 = sand.u32 %s422, 7
      %s521 = smul.addr %s519, 4
      %s522 = scalar_lea.vmem %s1, %s521
      %v523 = vld [vmem:[%s522] sm:$0xf]
      %v524 = vld [vmem:[%s522 + $0x4] sm:$0xf]
      %v525 = vld [vmem:[%s522 + $0x8] sm:$0xf]
      %v526 = vld [vmem:[%s522 + $0xc] sm:$0xf]
      %v527 = vld [vmem:[%s522 + $0x10] sm:$0xf]
      %v528 = vld [vmem:[%s522 + $0x14] sm:$0xf]
      %v529 = vld [vmem:[%s522 + $0x18] sm:$0xf]
      %v530 = vld [vmem:[%s522 + $0x1c] sm:$0xf]
      %v531 = vld [vmem:[%s522 + $0x20] sm:$0xf]
      %v532 = vld [vmem:[%s522 + $0x24] sm:$0xf]
      %v533 = vld [vmem:[%s522 + $0x28] sm:$0xf]
      %v534 = vld [vmem:[%s522 + $0x2c] sm:$0xf]
      %v535 = vld [vmem:[%s522 + $0x30] sm:$0xf]
      %v536 = vld [vmem:[%s522 + $0x34] sm:$0xf]
      %v537 = vld [vmem:[%s522 + $0x38] sm:$0xf]
      %v538 = vld [vmem:[%s522 + $0x3c] sm:$0xf]
      %v539 = vld [vmem:[%s522 + $0x40] sm:$0xf]
      %v540 = vld [vmem:[%s522 + $0x44] sm:$0xf]
      %v541 = vld [vmem:[%s522 + $0x48] sm:$0xf]
      %v542 = vld [vmem:[%s522 + $0x4c] sm:$0xf]
      %v543 = vld [vmem:[%s522 + $0x50] sm:$0xf]
      %v544 = vld [vmem:[%s522 + $0x54] sm:$0xf]
      %v545 = vld [vmem:[%s522 + $0x58] sm:$0xf]
      %v546 = vld [vmem:[%s522 + $0x5c] sm:$0xf]
      %v547 = vld [vmem:[%s522 + $0x60] sm:$0xf]
      %v548 = vld [vmem:[%s522 + $0x64] sm:$0xf]
      %v549 = vld [vmem:[%s522 + $0x68] sm:$0xf]
      %v550 = vld [vmem:[%s522 + $0x6c] sm:$0xf]
      %v551 = vld [vmem:[%s522 + $0x70] sm:$0xf]
      %v552 = vld [vmem:[%s522 + $0x74] sm:$0xf]
      %v553 = vld [vmem:[%s522 + $0x78] sm:$0xf]
      %v554 = vld [vmem:[%s522 + $0x7c] sm:$0xf]
      %v555 = vld [vmem:[%s522 + $0x80] sm:$0xf]
      %v556 = vld [vmem:[%s522 + $0x84] sm:$0xf]
      %v557 = vld [vmem:[%s522 + $0x88] sm:$0xf]
      %v558 = vld [vmem:[%s522 + $0x8c] sm:$0xf]
      %v559 = vld [vmem:[%s522 + $0x90] sm:$0xf]
      %v560 = vld [vmem:[%s522 + $0x94] sm:$0xf]
      %v561 = vld [vmem:[%s522 + $0x98] sm:$0xf]
      %v562 = vld [vmem:[%s522 + $0x9c] sm:$0xf]
      %v563 = vld [vmem:[%s522 + $0xa0] sm:$0xf]
      %v564 = vld [vmem:[%s522 + $0xa4] sm:$0xf]
      %v565 = vld [vmem:[%s522 + $0xa8] sm:$0xf]
      %v566 = vld [vmem:[%s522 + $0xac] sm:$0xf]
      %v567 = vld [vmem:[%s522 + $0xb0] sm:$0xf]
      %v568 = vld [vmem:[%s522 + $0xb4] sm:$0xf]
      %v569 = vld [vmem:[%s522 + $0xb8] sm:$0xf]
      %v570 = vld [vmem:[%s522 + $0xbc] sm:$0xf]
      %v571 = vld [vmem:[%s522 + $0xc0] sm:$0xf]
      %v572 = vld [vmem:[%s522 + $0xc4] sm:$0xf]
      %v573 = vld [vmem:[%s522 + $0xc8] sm:$0xf]
      %v574 = vld [vmem:[%s522 + $0xcc] sm:$0xf]
      %v575 = vld [vmem:[%s522 + $0xd0] sm:$0xf]
      %v576 = vld [vmem:[%s522 + $0xd4] sm:$0xf]
      %v577 = vld [vmem:[%s522 + $0xd8] sm:$0xf]
      %v578 = vld [vmem:[%s522 + $0xdc] sm:$0xf]
      %v579 = vld [vmem:[%s522 + $0xe0] sm:$0xf]
      %v580 = vld [vmem:[%s522 + $0xe4] sm:$0xf]
      %v581 = vld [vmem:[%s522 + $0xe8] sm:$0xf]
      %v582 = vld [vmem:[%s522 + $0xec] sm:$0xf]
      %v583 = vld [vmem:[%s522 + $0xf0] sm:$0xf]
      %v584 = vld [vmem:[%s522 + $0xf4] sm:$0xf]
      %v585 = vld [vmem:[%s522 + $0xf8] sm:$0xf]
      %v586 = vld [vmem:[%s522 + $0xfc] sm:$0xf]
      %v651 = vunpack.c.l.b16 %v455
      %v652 = vunpack.c.h.b16 %v455
      %v653 = vunpack.c.l.b16 %v456
      %v654 = vunpack.c.h.b16 %v456
      %v655 = vunpack.c.l.b16 %v457
      %v656 = vunpack.c.h.b16 %v457
      %v657 = vunpack.c.l.b16 %v458
      %v658 = vunpack.c.h.b16 %v458
      %v659 = vunpack.c.l.b16 %v459
      %v660 = vunpack.c.h.b16 %v459
      %v661 = vunpack.c.l.b16 %v460
      %v662 = vunpack.c.h.b16 %v460
      %v663 = vunpack.c.l.b16 %v461
      %v664 = vunpack.c.h.b16 %v461
      %v665 = vunpack.c.l.b16 %v462
      %v666 = vunpack.c.h.b16 %v462
      %v667 = vunpack.c.l.b16 %v463
      %v668 = vunpack.c.h.b16 %v463
      %v669 = vunpack.c.l.b16 %v464
      %v670 = vunpack.c.h.b16 %v464
      %v671 = vunpack.c.l.b16 %v465
      %v672 = vunpack.c.h.b16 %v465
      %v673 = vunpack.c.l.b16 %v466
      %v674 = vunpack.c.h.b16 %v466
      %v675 = vunpack.c.l.b16 %v467
      %v676 = vunpack.c.h.b16 %v467
      %v677 = vunpack.c.l.b16 %v468
      %v678 = vunpack.c.h.b16 %v468
      %v679 = vunpack.c.l.b16 %v469
      %v680 = vunpack.c.h.b16 %v469
      %v681 = vunpack.c.l.b16 %v470
      %v682 = vunpack.c.h.b16 %v470
      %v683 = vunpack.c.l.b16 %v471
      %v684 = vunpack.c.h.b16 %v471
      %v685 = vunpack.c.l.b16 %v472
      %v686 = vunpack.c.h.b16 %v472
      %v687 = vunpack.c.l.b16 %v473
      %v688 = vunpack.c.h.b16 %v473
      %v689 = vunpack.c.l.b16 %v474
      %v690 = vunpack.c.h.b16 %v474
      %v691 = vunpack.c.l.b16 %v475
      %v692 = vunpack.c.h.b16 %v475
      %v693 = vunpack.c.l.b16 %v476
      %v694 = vunpack.c.h.b16 %v476
      %v695 = vunpack.c.l.b16 %v477
      %v696 = vunpack.c.h.b16 %v477
      %v697 = vunpack.c.l.b16 %v478
      %v698 = vunpack.c.h.b16 %v478
      %v699 = vunpack.c.l.b16 %v479
      %v700 = vunpack.c.h.b16 %v479
      %v701 = vunpack.c.l.b16 %v480
      %v702 = vunpack.c.h.b16 %v480
      %v703 = vunpack.c.l.b16 %v481
      %v704 = vunpack.c.h.b16 %v481
      %v705 = vunpack.c.l.b16 %v482
      %v706 = vunpack.c.h.b16 %v482
      %v707 = vunpack.c.l.b16 %v483
      %v708 = vunpack.c.h.b16 %v483
      %v709 = vunpack.c.l.b16 %v484
      %v710 = vunpack.c.h.b16 %v484
      %v711 = vunpack.c.l.b16 %v485
      %v712 = vunpack.c.h.b16 %v485
      %v713 = vunpack.c.l.b16 %v486
      %v714 = vunpack.c.h.b16 %v486
      %v715 = vunpack.c.l.b16 %v487
      %v716 = vunpack.c.h.b16 %v487
      %v717 = vunpack.c.l.b16 %v488
      %v718 = vunpack.c.h.b16 %v488
      %v719 = vunpack.c.l.b16 %v489
      %v720 = vunpack.c.h.b16 %v489
      %v721 = vunpack.c.l.b16 %v490
      %v722 = vunpack.c.h.b16 %v490
      %v723 = vunpack.c.l.b16 %v491
      %v724 = vunpack.c.h.b16 %v491
      %v725 = vunpack.c.l.b16 %v492
      %v726 = vunpack.c.h.b16 %v492
      %v727 = vunpack.c.l.b16 %v493
      %v728 = vunpack.c.h.b16 %v493
      %v729 = vunpack.c.l.b16 %v494
      %v730 = vunpack.c.h.b16 %v494
      %v731 = vunpack.c.l.b16 %v495
      %v732 = vunpack.c.h.b16 %v495
      %v733 = vunpack.c.l.b16 %v496
      %v734 = vunpack.c.h.b16 %v496
      %v735 = vunpack.c.l.b16 %v497
      %v736 = vunpack.c.h.b16 %v497
      %v737 = vunpack.c.l.b16 %v498
      %v738 = vunpack.c.h.b16 %v498
      %v739 = vunpack.c.l.b16 %v499
      %v740 = vunpack.c.h.b16 %v499
      %v741 = vunpack.c.l.b16 %v500
      %v742 = vunpack.c.h.b16 %v500
      %v743 = vunpack.c.l.b16 %v501
      %v744 = vunpack.c.h.b16 %v501
      %v745 = vunpack.c.l.b16 %v502
      %v746 = vunpack.c.h.b16 %v502
      %v747 = vunpack.c.l.b16 %v503
      %v748 = vunpack.c.h.b16 %v503
      %v749 = vunpack.c.l.b16 %v504
      %v750 = vunpack.c.h.b16 %v504
      %v751 = vunpack.c.l.b16 %v505
      %v752 = vunpack.c.h.b16 %v505
      %v753 = vunpack.c.l.b16 %v506
      %v754 = vunpack.c.h.b16 %v506
      %v755 = vunpack.c.l.b16 %v507
      %v756 = vunpack.c.h.b16 %v507
      %v757 = vunpack.c.l.b16 %v508
      %v758 = vunpack.c.h.b16 %v508
      %v759 = vunpack.c.l.b16 %v509
      %v760 = vunpack.c.h.b16 %v509
      %v761 = vunpack.c.l.b16 %v510
      %v762 = vunpack.c.h.b16 %v510
      %v763 = vunpack.c.l.b16 %v511
      %v764 = vunpack.c.h.b16 %v511
      %v765 = vunpack.c.l.b16 %v512
      %v766 = vunpack.c.h.b16 %v512
      %v767 = vunpack.c.l.b16 %v513
      %v768 = vunpack.c.h.b16 %v513
      %v769 = vunpack.c.l.b16 %v514
      %v770 = vunpack.c.h.b16 %v514
      %v771 = vunpack.c.l.b16 %v515
      %v772 = vunpack.c.h.b16 %v515
      %v773 = vunpack.c.l.b16 %v516
      %v774 = vunpack.c.h.b16 %v516
      %v775 = vunpack.c.l.b16 %v517
      %v776 = vunpack.c.h.b16 %v517
      %v777 = vunpack.c.l.b16 %v518
      %v778 = vunpack.c.h.b16 %v518
      %v779 = vpack.c.b16 %v655, %v651
      %v780 = vpack.c.b16 %v656, %v652
      %v781 = vpack.c.b16 %v657, %v653
      %v782 = vpack.c.b16 %v658, %v654
      %v783 = vpack.c.b16 %v663, %v659
      %v784 = vpack.c.b16 %v664, %v660
      %v785 = vpack.c.b16 %v665, %v661
      %v786 = vpack.c.b16 %v666, %v662
      %v787 = vpack.c.b16 %v671, %v667
      %v788 = vpack.c.b16 %v672, %v668
      %v789 = vpack.c.b16 %v673, %v669
      %v790 = vpack.c.b16 %v674, %v670
      %v791 = vpack.c.b16 %v679, %v675
      %v792 = vpack.c.b16 %v680, %v676
      %v793 = vpack.c.b16 %v681, %v677
      %v794 = vpack.c.b16 %v682, %v678
      %v795 = vpack.c.b16 %v687, %v683
      %v796 = vpack.c.b16 %v688, %v684
      %v797 = vpack.c.b16 %v689, %v685
      %v798 = vpack.c.b16 %v690, %v686
      %v799 = vpack.c.b16 %v695, %v691
      %v800 = vpack.c.b16 %v696, %v692
      %v801 = vpack.c.b16 %v697, %v693
      %v802 = vpack.c.b16 %v698, %v694
      %v803 = vpack.c.b16 %v703, %v699
      %v804 = vpack.c.b16 %v704, %v700
      %v805 = vpack.c.b16 %v705, %v701
      %v806 = vpack.c.b16 %v706, %v702
      %v807 = vpack.c.b16 %v711, %v707
      %v808 = vpack.c.b16 %v712, %v708
      %v809 = vpack.c.b16 %v713, %v709
      %v810 = vpack.c.b16 %v714, %v710
      %v811 = vpack.c.b16 %v719, %v715
      %v812 = vpack.c.b16 %v720, %v716
      %v813 = vpack.c.b16 %v721, %v717
      %v814 = vpack.c.b16 %v722, %v718
      %v815 = vpack.c.b16 %v727, %v723
      %v816 = vpack.c.b16 %v728, %v724
      %v817 = vpack.c.b16 %v729, %v725
      %v818 = vpack.c.b16 %v730, %v726
      %v819 = vpack.c.b16 %v735, %v731
      %v820 = vpack.c.b16 %v736, %v732
      %v821 = vpack.c.b16 %v737, %v733
      %v822 = vpack.c.b16 %v738, %v734
      %v823 = vpack.c.b16 %v743, %v739
      %v824 = vpack.c.b16 %v744, %v740
      %v825 = vpack.c.b16 %v745, %v741
      %v826 = vpack.c.b16 %v746, %v742
      %v827 = vpack.c.b16 %v751, %v747
      %v828 = vpack.c.b16 %v752, %v748
      %v829 = vpack.c.b16 %v753, %v749
      %v830 = vpack.c.b16 %v754, %v750
      %v831 = vpack.c.b16 %v759, %v755
      %v832 = vpack.c.b16 %v760, %v756
      %v833 = vpack.c.b16 %v761, %v757
      %v834 = vpack.c.b16 %v762, %v758
      %v835 = vpack.c.b16 %v767, %v763
      %v836 = vpack.c.b16 %v768, %v764
      %v837 = vpack.c.b16 %v769, %v765
      %v838 = vpack.c.b16 %v770, %v766
      %v839 = vpack.c.b16 %v775, %v771
      %v840 = vpack.c.b16 %v776, %v772
      %v841 = vpack.c.b16 %v777, %v773
      %v842 = vpack.c.b16 %v778, %v774
      %v971 = vunpack.c.l.b16 %v523
      %v972 = vunpack.c.l.b16 %v524
      %v973 = vunpack.c.l.b16 %v525
      %v974 = vunpack.c.l.b16 %v526
      %v975 = vunpack.c.l.b16 %v527
      %v976 = vunpack.c.l.b16 %v528
      %v977 = vunpack.c.l.b16 %v529
      %v978 = vunpack.c.l.b16 %v530
      %v979 = vunpack.c.l.b16 %v531
      %v980 = vunpack.c.l.b16 %v532
      %v981 = vunpack.c.l.b16 %v533
      %v982 = vunpack.c.l.b16 %v534
      %v983 = vunpack.c.l.b16 %v535
      %v984 = vunpack.c.l.b16 %v536
      %v985 = vunpack.c.l.b16 %v537
      %v986 = vunpack.c.l.b16 %v538
      %v987 = vunpack.c.l.b16 %v539
      %v988 = vunpack.c.l.b16 %v540
      %v989 = vunpack.c.l.b16 %v541
      %v990 = vunpack.c.l.b16 %v542
      %v991 = vunpack.c.l.b16 %v543
      %v992 = vunpack.c.l.b16 %v544
      %v993 = vunpack.c.l.b16 %v545
      %v994 = vunpack.c.l.b16 %v546
      %v995 = vunpack.c.l.b16 %v547
      %v996 = vunpack.c.l.b16 %v548
      %v997 = vunpack.c.l.b16 %v549
      %v998 = vunpack.c.l.b16 %v550
      %v999 = vunpack.c.l.b16 %v551
      %v1000 = vunpack.c.l.b16 %v552
      %v1001 = vunpack.c.l.b16 %v553
      %v1002 = vunpack.c.l.b16 %v554
      %v1003 = vunpack.c.l.b16 %v555
      %v1004 = vunpack.c.l.b16 %v556
      %v1005 = vunpack.c.l.b16 %v557
      %v1006 = vunpack.c.l.b16 %v558
      %v1007 = vunpack.c.l.b16 %v559
      %v1008 = vunpack.c.l.b16 %v560
      %v1009 = vunpack.c.l.b16 %v561
      %v1010 = vunpack.c.l.b16 %v562
      %v1011 = vunpack.c.l.b16 %v563
      %v1012 = vunpack.c.l.b16 %v564
      %v1013 = vunpack.c.l.b16 %v565
      %v1014 = vunpack.c.l.b16 %v566
      %v1015 = vunpack.c.l.b16 %v567
      %v1016 = vunpack.c.l.b16 %v568
      %v1017 = vunpack.c.l.b16 %v569
      %v1018 = vunpack.c.l.b16 %v570
      %v1019 = vunpack.c.l.b16 %v571
      %v1020 = vunpack.c.l.b16 %v572
      %v1021 = vunpack.c.l.b16 %v573
      %v1022 = vunpack.c.l.b16 %v574
      %v1023 = vunpack.c.l.b16 %v575
      %v1024 = vunpack.c.l.b16 %v576
      %v1025 = vunpack.c.l.b16 %v577
      %v1026 = vunpack.c.l.b16 %v578
      %v1027 = vunpack.c.l.b16 %v579
      %v1028 = vunpack.c.l.b16 %v580
      %v1029 = vunpack.c.l.b16 %v581
      %v1030 = vunpack.c.l.b16 %v582
      %v1031 = vunpack.c.l.b16 %v583
      %v1032 = vunpack.c.l.b16 %v584
      %v1033 = vunpack.c.l.b16 %v585
      %v1034 = vunpack.c.l.b16 %v586
      %v1035 = vpack.c.b16 %v972, %v971
      %v1036 = vpack.c.b16 %v974, %v973
      %v1037 = vpack.c.b16 %v976, %v975
      %v1038 = vpack.c.b16 %v978, %v977
      %v1039 = vpack.c.b16 %v980, %v979
      %v1040 = vpack.c.b16 %v982, %v981
      %v1041 = vpack.c.b16 %v984, %v983
      %v1042 = vpack.c.b16 %v986, %v985
      %v1043 = vpack.c.b16 %v988, %v987
      %v1044 = vpack.c.b16 %v990, %v989
      %v1045 = vpack.c.b16 %v992, %v991
      %v1046 = vpack.c.b16 %v994, %v993
      %v1047 = vpack.c.b16 %v996, %v995
      %v1048 = vpack.c.b16 %v998, %v997
      %v1049 = vpack.c.b16 %v1000, %v999
      %v1050 = vpack.c.b16 %v1002, %v1001
      %v1051 = vpack.c.b16 %v1004, %v1003
      %v1052 = vpack.c.b16 %v1006, %v1005
      %v1053 = vpack.c.b16 %v1008, %v1007
      %v1054 = vpack.c.b16 %v1010, %v1009
      %v1055 = vpack.c.b16 %v1012, %v1011
      %v1056 = vpack.c.b16 %v1014, %v1013
      %v1057 = vpack.c.b16 %v1016, %v1015
      %v1058 = vpack.c.b16 %v1018, %v1017
      %v1059 = vpack.c.b16 %v1020, %v1019
      %v1060 = vpack.c.b16 %v1022, %v1021
      %v1061 = vpack.c.b16 %v1024, %v1023
      %v1062 = vpack.c.b16 %v1026, %v1025
      %v1063 = vpack.c.b16 %v1028, %v1027
      %v1064 = vpack.c.b16 %v1030, %v1029
      %v1065 = vpack.c.b16 %v1032, %v1031
      %v1066 = vpack.c.b16 %v1034, %v1033
      %1099 = vmatprep.subr.bf16.mxu0 0
      %1100 = vmatpush1.bf16.msra.mxu0 %v1035
      %1101 = vmatprep.subr.bf16.mxu0 0
      %1102 = vmatpush1.bf16.msra.mxu0 %v1036
      %1103 = vmatprep.subr.bf16.mxu0 0
      %1104 = vmatpush1.bf16.msra.mxu0 %v1037
      %1105 = vmatprep.subr.bf16.mxu0 0
      %1106 = vmatpush1.bf16.msra.mxu0 %v1038
      %1107 = vmatprep.subr.bf16.mxu0 0
      %1108 = vmatpush1.bf16.msra.mxu0 %v1039
      %1109 = vmatprep.subr.bf16.mxu0 0
      %1110 = vmatpush1.bf16.msra.mxu0 %v1040
      %1111 = vmatprep.subr.bf16.mxu0 0
      %1112 = vmatpush1.bf16.msra.mxu0 %v1041
      %1113 = vmatprep.subr.bf16.mxu0 0
      %1114 = vmatpush1.bf16.msra.mxu0 %v1042
      %1115 = vmatprep.subr.bf16.mxu0 0
      %1116 = vmatpush1.bf16.msra.mxu0 %v1043
      %1117 = vmatprep.subr.bf16.mxu0 0
      %1118 = vmatpush1.bf16.msra.mxu0 %v1044
      %1119 = vmatprep.subr.bf16.mxu0 0
      %1120 = vmatpush1.bf16.msra.mxu0 %v1045
      %1121 = vmatprep.subr.bf16.mxu0 0
      %1122 = vmatpush1.bf16.msra.mxu0 %v1046
      %1123 = vmatprep.subr.bf16.mxu0 0
      %1124 = vmatpush1.bf16.msra.mxu0 %v1047
      %1125 = vmatprep.subr.bf16.mxu0 0
      %1126 = vmatpush1.bf16.msra.mxu0 %v1048
      %1127 = vmatprep.subr.bf16.mxu0 0
      %1128 = vmatpush1.bf16.msra.mxu0 %v1049
      %1129 = vmatprep.subr.bf16.mxu0 0
      %1130 = vmatpush1.bf16.msra.mxu0 %v1050
      %1131 = vmatprep.mubr.bf16.mxu0 %v780
      %1132 = vmatmul.mubr.bf16.gmra.mrb[0].mxu0 %v779
      %v1133 = vpop.f32.mrb[0].mxu0
      %v1134 = vadd.f32 0.0, %v1133
      %v1135 = vpop.f32.mrb[0].mxu0
      %v1136 = vpop.f32.mrb[0].mxu0
      %v1137 = vadd.f32 0.0, %v1136
      %v1138 = vpop.f32.mrb[0].mxu0
      %1139 = vmatprep.mubr.bf16.mxu0 %v784
      %1140 = vmatmul.mubr.bf16.gmra.mrb[0].mxu0 %v783
      %v1141 = vpop.f32.mrb[0].mxu0
      %v1142 = vadd.f32 0.0, %v1141
      %v1143 = vpop.f32.mrb[0].mxu0
      %v1144 = vpop.f32.mrb[0].mxu0
      %v1145 = vadd.f32 0.0, %v1144
      %v1146 = vpop.f32.mrb[0].mxu0
      %1147 = vmatprep.mubr.bf16.mxu0 %v788
      %1148 = vmatmul.mubr.bf16.gmra.mrb[0].mxu0 %v787
      %v1149 = vpop.f32.mrb[0].mxu0
      %v1150 = vadd.f32 0.0, %v1149
      %v1151 = vpop.f32.mrb[0].mxu0
      %v1152 = vpop.f32.mrb[0].mxu0
      %v1153 = vadd.f32 0.0, %v1152
      %v1154 = vpop.f32.mrb[0].mxu0
      %1155 = vmatprep.mubr.bf16.mxu0 %v792
      %1156 = vmatmul.mubr.bf16.gmra.mrb[0].mxu0 %v791
      %v1157 = vpop.f32.mrb[0].mxu0
      %v1158 = vadd.f32 0.0, %v1157
      %v1159 = vpop.f32.mrb[0].mxu0
      %v1160 = vpop.f32.mrb[0].mxu0
      %v1161 = vadd.f32 0.0, %v1160
      %v1162 = vpop.f32.mrb[0].mxu0
      %1163 = vmatprep.mubr.bf16.mxu0 %v796
      %1164 = vmatmul.mubr.bf16.gmra.mrb[0].mxu0 %v795
      %v1165 = vpop.f32.mrb[0].mxu0
      %v1166 = vadd.f32 0.0, %v1165
      %v1167 = vpop.f32.mrb[0].mxu0
      %v1168 = vpop.f32.mrb[0].mxu0
      %v1169 = vadd.f32 0.0, %v1168
      %v1170 = vpop.f32.mrb[0].mxu0
      %1171 = vmatprep.mubr.bf16.mxu0 %v800
      %1172 = vmatmul.mubr.bf16.gmra.mrb[0].mxu0 %v799
      %v1173 = vpop.f32.mrb[0].mxu0
      %v1174 = vadd.f32 0.0, %v1173
      %v1175 = vpop.f32.mrb[0].mxu0
      %v1176 = vpop.f32.mrb[0].mxu0
      %v1177 = vadd.f32 0.0, %v1176
      %v1178 = vpop.f32.mrb[0].mxu0
      %1179 = vmatprep.mubr.bf16.mxu0 %v804
      %1180 = vmatmul.mubr.bf16.gmra.mrb[0].mxu0 %v803
      %v1181 = vpop.f32.mrb[0].mxu0
      %v1182 = vadd.f32 0.0, %v1181
      %v1183 = vpop.f32.mrb[0].mxu0
      %v1184 = vpop.f32.mrb[0].mxu0
      %v1185 = vadd.f32 0.0, %v1184
      %v1186 = vpop.f32.mrb[0].mxu0
      %1187 = vmatprep.mubr.bf16.mxu0 %v808
      %1188 = vmatmul.mubr.bf16.gmra.mrb[0].mxu0 %v807
      %v1189 = vpop.f32.mrb[0].mxu0
      %v1190 = vadd.f32 0.0, %v1189
      %v1191 = vpop.f32.mrb[0].mxu0
      %v1192 = vpop.f32.mrb[0].mxu0
      %v1193 = vadd.f32 0.0, %v1192
      %v1194 = vpop.f32.mrb[0].mxu0
      %1195 = vmatprep.mubr.bf16.mxu0 %v812
      %1196 = vmatmul.mubr.bf16.gmra.mrb[0].mxu0 %v811
      %v1197 = vpop.f32.mrb[0].mxu0
      %v1198 = vadd.f32 0.0, %v1197
      %v1199 = vpop.f32.mrb[0].mxu0
      %v1200 = vpop.f32.mrb[0].mxu0
      %v1201 = vadd.f32 0.0, %v1200
      %v1202 = vpop.f32.mrb[0].mxu0
      %1203 = vmatprep.mubr.bf16.mxu0 %v816
      %1204 = vmatmul.mubr.bf16.gmra.mrb[0].mxu0 %v815
      %v1205 = vpop.f32.mrb[0].mxu0
      %v1206 = vadd.f32 0.0, %v1205
      %v1207 = vpop.f32.mrb[0].mxu0
      %v1208 = vpop.f32.mrb[0].mxu0
      %v1209 = vadd.f32 0.0, %v1208
      %v1210 = vpop.f32.mrb[0].mxu0
      %1211 = vmatprep.mubr.bf16.mxu0 %v820
      %1212 = vmatmul.mubr.bf16.gmra.mrb[0].mxu0 %v819
      %v1213 = vpop.f32.mrb[0].mxu0
      %v1214 = vadd.f32 0.0, %v1213
      %v1215 = vpop.f32.mrb[0].mxu0
      %v1216 = vpop.f32.mrb[0].mxu0
      %v1217 = vadd.f32 0.0, %v1216
      %v1218 = vpop.f32.mrb[0].mxu0
      %1219 = vmatprep.mubr.bf16.mxu0 %v824
      %1220 = vmatmul.mubr.bf16.gmra.mrb[0].mxu0 %v823
      %v1221 = vpop.f32.mrb[0].mxu0
      %v1222 = vadd.f32 0.0, %v1221
      %v1223 = vpop.f32.mrb[0].mxu0
      %v1224 = vpop.f32.mrb[0].mxu0
      %v1225 = vadd.f32 0.0, %v1224
      %v1226 = vpop.f32.mrb[0].mxu0
      %1227 = vmatprep.mubr.bf16.mxu0 %v828
      %1228 = vmatmul.mubr.bf16.gmra.mrb[0].mxu0 %v827
      %v1229 = vpop.f32.mrb[0].mxu0
      %v1230 = vadd.f32 0.0, %v1229
      %v1231 = vpop.f32.mrb[0].mxu0
      %v1232 = vpop.f32.mrb[0].mxu0
      %v1233 = vadd.f32 0.0, %v1232
      %v1234 = vpop.f32.mrb[0].mxu0
      %1235 = vmatprep.mubr.bf16.mxu0 %v832
      %1236 = vmatmul.mubr.bf16.gmra.mrb[0].mxu0 %v831
      %v1237 = vpop.f32.mrb[0].mxu0
      %v1238 = vadd.f32 0.0, %v1237
      %v1239 = vpop.f32.mrb[0].mxu0
      %v1240 = vpop.f32.mrb[0].mxu0
      %v1241 = vadd.f32 0.0, %v1240
      %v1242 = vpop.f32.mrb[0].mxu0
      %1243 = vmatprep.mubr.bf16.mxu0 %v836
      %1244 = vmatmul.mubr.bf16.gmra.mrb[0].mxu0 %v835
      %v1245 = vpop.f32.mrb[0].mxu0
      %v1246 = vadd.f32 0.0, %v1245
      %v1247 = vpop.f32.mrb[0].mxu0
      %v1248 = vpop.f32.mrb[0].mxu0
      %v1249 = vadd.f32 0.0, %v1248
      %v1250 = vpop.f32.mrb[0].mxu0
      %1251 = vmatprep.mubr.bf16.mxu0 %v840
      %1252 = vmatmul.mubr.bf16.gmra.mrb[0].mxu0 %v839
      %v1253 = vpop.f32.mrb[0].mxu0
      %v1254 = vadd.f32 0.0, %v1253
      %v1255 = vpop.f32.mrb[0].mxu0
      %v1256 = vpop.f32.mrb[0].mxu0
      %v1257 = vadd.f32 0.0, %v1256
      %v1258 = vpop.f32.mrb[0].mxu0
      %1259 = vdwg.mxu0
      %1260 = vmatprep.subr.bf16.mxu0 0
      %1261 = vmatpush1.bf16.msra.mxu0 %v1051
      %1262 = vmatprep.subr.bf16.mxu0 0
      %1263 = vmatpush1.bf16.msra.mxu0 %v1052
      %1264 = vmatprep.subr.bf16.mxu0 0
      %1265 = vmatpush1.bf16.msra.mxu0 %v1053
      %1266 = vmatprep.subr.bf16.mxu0 0
      %1267 = vmatpush1.bf16.msra.mxu0 %v1054
      %1268 = vmatprep.subr.bf16.mxu0 0
      %1269 = vmatpush1.bf16.msra.mxu0 %v1055
      %1270 = vmatprep.subr.bf16.mxu0 0
      %1271 = vmatpush1.bf16.msra.mxu0 %v1056
      %1272 = vmatprep.subr.bf16.mxu0 0
      %1273 = vmatpush1.bf16.msra.mxu0 %v1057
      %1274 = vmatprep.subr.bf16.mxu0 0
      %1275 = vmatpush1.bf16.msra.mxu0 %v1058
      %1276 = vmatprep.subr.bf16.mxu0 0
      %1277 = vmatpush1.bf16.msra.mxu0 %v1059
      %1278 = vmatprep.subr.bf16.mxu0 0
      %1279 = vmatpush1.bf16.msra.mxu0 %v1060
      %1280 = vmatprep.subr.bf16.mxu0 0
      %1281 = vmatpush1.bf16.msra.mxu0 %v1061
      %1282 = vmatprep.subr.bf16.mxu0 0
      %1283 = vmatpush1.bf16.msra.mxu0 %v1062
      %1284 = vmatprep.subr.bf16.mxu0 0
      %1285 = vmatpush1.bf16.msra.mxu0 %v1063
      %1286 = vmatprep.subr.bf16.mxu0 0
      %1287 = vmatpush1.bf16.msra.mxu0 %v1064
      %1288 = vmatprep.subr.bf16.mxu0 0
      %1289 = vmatpush1.bf16.msra.mxu0 %v1065
      %1290 = vmatprep.subr.bf16.mxu0 0
      %1291 = vmatpush1.bf16.msra.mxu0 %v1066
      %1292 = vmatprep.mubr.bf16.mxu0 %v782
      %1293 = vmatmul.mubr.bf16.gmra.mrb[0].mxu0 %v781
      %v1294 = vpop.f32.mrb[0].mxu0
      %v1295 = vadd.f32 %v1134, %v1294
      %v1296 = vpop.f32.mrb[0].mxu0
      %v1297 = vpop.f32.mrb[0].mxu0
      %v1298 = vadd.f32 %v1137, %v1297
      %v1299 = vpop.f32.mrb[0].mxu0
      %1300 = vmatprep.mubr.bf16.mxu0 %v786
      %1301 = vmatmul.mubr.bf16.gmra.mrb[0].mxu0 %v785
      %v1302 = vpop.f32.mrb[0].mxu0
      %v1303 = vadd.f32 %v1142, %v1302
      %v1304 = vpop.f32.mrb[0].mxu0
      %v1305 = vpop.f32.mrb[0].mxu0
      %v1306 = vadd.f32 %v1145, %v1305
      %v1307 = vpop.f32.mrb[0].mxu0
      %1308 = vmatprep.mubr.bf16.mxu0 %v790
      %1309 = vmatmul.mubr.bf16.gmra.mrb[0].mxu0 %v789
      %v1310 = vpop.f32.mrb[0].mxu0
      %v1311 = vadd.f32 %v1150, %v1310
      %v1312 = vpop.f32.mrb[0].mxu0
      %v1313 = vpop.f32.mrb[0].mxu0
      %v1314 = vadd.f32 %v1153, %v1313
      %v1315 = vpop.f32.mrb[0].mxu0
      %1316 = vmatprep.mubr.bf16.mxu0 %v794
      %1317 = vmatmul.mubr.bf16.gmra.mrb[0].mxu0 %v793
      %v1318 = vpop.f32.mrb[0].mxu0
      %v1319 = vadd.f32 %v1158, %v1318
      %v1320 = vpop.f32.mrb[0].mxu0
      %v1321 = vpop.f32.mrb[0].mxu0
      %v1322 = vadd.f32 %v1161, %v1321
      %v1323 = vpop.f32.mrb[0].mxu0
      %1324 = vmatprep.mubr.bf16.mxu0 %v798
      %1325 = vmatmul.mubr.bf16.gmra.mrb[0].mxu0 %v797
      %v1326 = vpop.f32.mrb[0].mxu0
      %v1327 = vadd.f32 %v1166, %v1326
      %v1328 = vpop.f32.mrb[0].mxu0
      %v1329 = vpop.f32.mrb[0].mxu0
      %v1330 = vadd.f32 %v1169, %v1329
      %v1331 = vpop.f32.mrb[0].mxu0
      %1332 = vmatprep.mubr.bf16.mxu0 %v802
      %1333 = vmatmul.mubr.bf16.gmra.mrb[0].mxu0 %v801
      %v1334 = vpop.f32.mrb[0].mxu0
      %v1335 = vadd.f32 %v1174, %v1334
      %v1336 = vpop.f32.mrb[0].mxu0
      %v1337 = vpop.f32.mrb[0].mxu0
      %v1338 = vadd.f32 %v1177, %v1337
      %v1339 = vpop.f32.mrb[0].mxu0
      %1340 = vmatprep.mubr.bf16.mxu0 %v806
      %1341 = vmatmul.mubr.bf16.gmra.mrb[0].mxu0 %v805
      %v1342 = vpop.f32.mrb[0].mxu0
      %v1343 = vadd.f32 %v1182, %v1342
      %v1344 = vpop.f32.mrb[0].mxu0
      %v1345 = vpop.f32.mrb[0].mxu0
      %v1346 = vadd.f32 %v1185, %v1345
      %v1347 = vpop.f32.mrb[0].mxu0
      %1348 = vmatprep.mubr.bf16.mxu0 %v810
      %1349 = vmatmul.mubr.bf16.gmra.mrb[0].mxu0 %v809
      %v1350 = vpop.f32.mrb[0].mxu0
      %v1351 = vadd.f32 %v1190, %v1350
      %v1352 = vpop.f32.mrb[0].mxu0
      %v1353 = vpop.f32.mrb[0].mxu0
      %v1354 = vadd.f32 %v1193, %v1353
      %v1355 = vpop.f32.mrb[0].mxu0
      %1356 = vmatprep.mubr.bf16.mxu0 %v814
      %1357 = vmatmul.mubr.bf16.gmra.mrb[0].mxu0 %v813
      %v1358 = vpop.f32.mrb[0].mxu0
      %v1359 = vadd.f32 %v1198, %v1358
      %v1360 = vpop.f32.mrb[0].mxu0
      %v1361 = vpop.f32.mrb[0].mxu0
      %v1362 = vadd.f32 %v1201, %v1361
      %v1363 = vpop.f32.mrb[0].mxu0
      %1364 = vmatprep.mubr.bf16.mxu0 %v818
      %1365 = vmatmul.mubr.bf16.gmra.mrb[0].mxu0 %v817
      %v1366 = vpop.f32.mrb[0].mxu0
      %v1367 = vadd.f32 %v1206, %v1366
      %v1368 = vpop.f32.mrb[0].mxu0
      %v1369 = vpop.f32.mrb[0].mxu0
      %v1370 = vadd.f32 %v1209, %v1369
      %v1371 = vpop.f32.mrb[0].mxu0
      %1372 = vmatprep.mubr.bf16.mxu0 %v822
      %1373 = vmatmul.mubr.bf16.gmra.mrb[0].mxu0 %v821
      %v1374 = vpop.f32.mrb[0].mxu0
      %v1375 = vadd.f32 %v1214, %v1374
      %v1376 = vpop.f32.mrb[0].mxu0
      %v1377 = vpop.f32.mrb[0].mxu0
      %v1378 = vadd.f32 %v1217, %v1377
      %v1379 = vpop.f32.mrb[0].mxu0
      %1380 = vmatprep.mubr.bf16.mxu0 %v826
      %1381 = vmatmul.mubr.bf16.gmra.mrb[0].mxu0 %v825
      %v1382 = vpop.f32.mrb[0].mxu0
      %v1383 = vadd.f32 %v1222, %v1382
      %v1384 = vpop.f32.mrb[0].mxu0
      %v1385 = vpop.f32.mrb[0].mxu0
      %v1386 = vadd.f32 %v1225, %v1385
      %v1387 = vpop.f32.mrb[0].mxu0
      %1388 = vmatprep.mubr.bf16.mxu0 %v830
      %1389 = vmatmul.mubr.bf16.gmra.mrb[0].mxu0 %v829
      %v1390 = vpop.f32.mrb[0].mxu0
      %v1391 = vadd.f32 %v1230, %v1390
      %v1392 = vpop.f32.mrb[0].mxu0
      %v1393 = vpop.f32.mrb[0].mxu0
      %v1394 = vadd.f32 %v1233, %v1393
      %v1395 = vpop.f32.mrb[0].mxu0
      %1396 = vmatprep.mubr.bf16.mxu0 %v834
      %1397 = vmatmul.mubr.bf16.gmra.mrb[0].mxu0 %v833
      %v1398 = vpop.f32.mrb[0].mxu0
      %v1399 = vadd.f32 %v1238, %v1398
      %v1400 = vpop.f32.mrb[0].mxu0
      %v1401 = vpop.f32.mrb[0].mxu0
      %v1402 = vadd.f32 %v1241, %v1401
      %v1403 = vpop.f32.mrb[0].mxu0
      %1404 = vmatprep.mubr.bf16.mxu0 %v838
      %1405 = vmatmul.mubr.bf16.gmra.mrb[0].mxu0 %v837
      %v1406 = vpop.f32.mrb[0].mxu0
      %v1407 = vadd.f32 %v1246, %v1406
      %v1408 = vpop.f32.mrb[0].mxu0
      %v1409 = vpop.f32.mrb[0].mxu0
      %v1410 = vadd.f32 %v1249, %v1409
      %v1411 = vpop.f32.mrb[0].mxu0
      %1412 = vmatprep.mubr.bf16.mxu0 %v842
      %1413 = vmatmul.mubr.bf16.gmra.mrb[0].mxu0 %v841
      %v1414 = vpop.f32.mrb[0].mxu0
      %v1415 = vadd.f32 %v1254, %v1414
      %v1416 = vpop.f32.mrb[0].mxu0
      %v1417 = vpop.f32.mrb[0].mxu0
      %v1418 = vadd.f32 %v1257, %v1417
      %v1419 = vpop.f32.mrb[0].mxu0
      %1420 = vdwg.mxu0
      %v1421 = vadd.f32 %v423, %v1295
      %v1422 = vadd.f32 %v424, %v1298
      %v1423 = vadd.f32 %v425, %v1303
      %v1424 = vadd.f32 %v426, %v1306
      %v1425 = vadd.f32 %v427, %v1311
      %v1426 = vadd.f32 %v428, %v1314
      %v1427 = vadd.f32 %v429, %v1319
      %v1428 = vadd.f32 %v430, %v1322
      %v1429 = vadd.f32 %v431, %v1327
      %v1430 = vadd.f32 %v432, %v1330
      %v1431 = vadd.f32 %v433, %v1335
      %v1432 = vadd.f32 %v434, %v1338
      %v1433 = vadd.f32 %v435, %v1343
      %v1434 = vadd.f32 %v436, %v1346
      %v1435 = vadd.f32 %v437, %v1351
      %v1436 = vadd.f32 %v438, %v1354
      %v1437 = vadd.f32 %v439, %v1359
      %v1438 = vadd.f32 %v440, %v1362
      %v1439 = vadd.f32 %v441, %v1367
      %v1440 = vadd.f32 %v442, %v1370
      %v1441 = vadd.f32 %v443, %v1375
      %v1442 = vadd.f32 %v444, %v1378
      %v1443 = vadd.f32 %v445, %v1383
      %v1444 = vadd.f32 %v446, %v1386
      %v1445 = vadd.f32 %v447, %v1391
      %v1446 = vadd.f32 %v448, %v1394
      %v1447 = vadd.f32 %v449, %v1399
      %v1448 = vadd.f32 %v450, %v1402
      %v1449 = vadd.f32 %v451, %v1407
      %v1450 = vadd.f32 %v452, %v1410
      %v1451 = vadd.f32 %v453, %v1415
      %v1452 = vadd.f32 %v454, %v1418
      %1453 = vst [vmem:[#allocation2] sm:$0xff] %v1421
      %1454 = vst [vmem:[#allocation2 + $0x8] sm:$0xff] %v1422
      %1455 = vst [vmem:[#allocation2 + $0x10] sm:$0xff] %v1423
      %1456 = vst [vmem:[#allocation2 + $0x18] sm:$0xff] %v1424
      %1457 = vst [vmem:[#allocation2 + $0x20] sm:$0xff] %v1425
      %1458 = vst [vmem:[#allocation2 + $0x28] sm:$0xff] %v1426
      %1459 = vst [vmem:[#allocation2 + $0x30] sm:$0xff] %v1427
      %1460 = vst [vmem:[#allocation2 + $0x38] sm:$0xff] %v1428
      %1461 = vst [vmem:[#allocation2 + $0x40] sm:$0xff] %v1429
      %1462 = vst [vmem:[#allocation2 + $0x48] sm:$0xff] %v1430
      %1463 = vst [vmem:[#allocation2 + $0x50] sm:$0xff] %v1431
      %1464 = vst [vmem:[#allocation2 + $0x58] sm:$0xff] %v1432
      %1465 = vst [vmem:[#allocation2 + $0x60] sm:$0xff] %v1433
      %1466 = vst [vmem:[#allocation2 + $0x68] sm:$0xff] %v1434
      %1467 = vst [vmem:[#allocation2 + $0x70] sm:$0xff] %v1435
      %1468 = vst [vmem:[#allocation2 + $0x78] sm:$0xff] %v1436
      %1469 = vst [vmem:[#allocation2 + $0x80] sm:$0xff] %v1437
      %1470 = vst [vmem:[#allocation2 + $0x88] sm:$0xff] %v1438
      %1471 = vst [vmem:[#allocation2 + $0x90] sm:$0xff] %v1439
      %1472 = vst [vmem:[#allocation2 + $0x98] sm:$0xff] %v1440
      %1473 = vst [vmem:[#allocation2 + $0xa0] sm:$0xff] %v1441
      %1474 = vst [vmem:[#allocation2 + $0xa8] sm:$0xff] %v1442
      %1475 = vst [vmem:[#allocation2 + $0xb0] sm:$0xff] %v1443
      %1476 = vst [vmem:[#allocation2 + $0xb8] sm:$0xff] %v1444
      %1477 = vst [vmem:[#allocation2 + $0xc0] sm:$0xff] %v1445
      %1478 = vst [vmem:[#allocation2 + $0xc8] sm:$0xff] %v1446
      %1479 = vst [vmem:[#allocation2 + $0xd0] sm:$0xff] %v1447
      %1480 = vst [vmem:[#allocation2 + $0xd8] sm:$0xff] %v1448
      %1481 = vst [vmem:[#allocation2 + $0xe0] sm:$0xff] %v1449
      %1482 = vst [vmem:[#allocation2 + $0xe8] sm:$0xff] %v1450
      %1483 = vst [vmem:[#allocation2 + $0xf0] sm:$0xff] %v1451
      %1484 = vst [vmem:[#allocation2 + $0xf8] sm:$0xff] %v1452
      // Predicated region
      $region57: #{simple_gcn_encoder.5} parent=51 // pred_check
        %p1485 = pneg %p386
      $region58: #{simple_gcn_encoder.5} parent=51 // pred_check_branch
        %1487 = sbr.rel (%p1485) target = $region60
      $region59: #{simple_gcn_encoder.5} parent=51 // pred_region
        %v1488 = vld [vmem:[%s371] sm:$0xff]
        %v1489 = vld [vmem:[%s371 + $0x8] sm:$0xff]
        %v1490 = vld [vmem:[%s371 + $0x10] sm:$0xff]
        %v1491 = vld [vmem:[%s371 + $0x18] sm:$0xff]
        %v1492 = vld [vmem:[%s371 + $0x20] sm:$0xff]
        %v1493 = vld [vmem:[%s371 + $0x28] sm:$0xff]
        %v1494 = vld [vmem:[%s371 + $0x30] sm:$0xff]
        %v1495 = vld [vmem:[%s371 + $0x38] sm:$0xff]
        %v1496 = vld [vmem:[%s371 + $0x40] sm:$0xff]
        %v1497 = vld [vmem:[%s371 + $0x48] sm:$0xff]
        %v1498 = vld [vmem:[%s371 + $0x50] sm:$0xff]
        %v1499 = vld [vmem:[%s371 + $0x58] sm:$0xff]
        %v1500 = vld [vmem:[%s371 + $0x60] sm:$0xff]
        %v1501 = vld [vmem:[%s371 + $0x68] sm:$0xff]
        %v1502 = vld [vmem:[%s371 + $0x70] sm:$0xff]
        %v1503 = vld [vmem:[%s371 + $0x78] sm:$0xff]
        %v1504 = vld [vmem:[%s371 + $0x80] sm:$0xff]
        %v1505 = vld [vmem:[%s371 + $0x88] sm:$0xff]
        %v1506 = vld [vmem:[%s371 + $0x90] sm:$0xff]
        %v1507 = vld [vmem:[%s371 + $0x98] sm:$0xff]
        %v1508 = vld [vmem:[%s371 + $0xa0] sm:$0xff]
        %v1509 = vld [vmem:[%s371 + $0xa8] sm:$0xff]
        %v1510 = vld [vmem:[%s371 + $0xb0] sm:$0xff]
        %v1511 = vld [vmem:[%s371 + $0xb8] sm:$0xff]
        %v1512 = vld [vmem:[%s371 + $0xc0] sm:$0xff]
        %v1513 = vld [vmem:[%s371 + $0xc8] sm:$0xff]
        %v1514 = vld [vmem:[%s371 + $0xd0] sm:$0xff]
        %v1515 = vld [vmem:[%s371 + $0xd8] sm:$0xff]
        %v1516 = vld [vmem:[%s371 + $0xe0] sm:$0xff]
        %v1517 = vld [vmem:[%s371 + $0xe8] sm:$0xff]
        %v1518 = vld [vmem:[%s371 + $0xf0] sm:$0xff]
        %v1519 = vld [vmem:[%s371 + $0xf8] sm:$0xff]
        %v1520 = vld [vmem:[#allocation2] sm:$0xff]
        %v1521 = vld [vmem:[#allocation2 + $0x8] sm:$0xff]
        %v1522 = vld [vmem:[#allocation2 + $0x10] sm:$0xff]
        %v1523 = vld [vmem:[#allocation2 + $0x18] sm:$0xff]
        %v1524 = vld [vmem:[#allocation2 + $0x20] sm:$0xff]
        %v1525 = vld [vmem:[#allocation2 + $0x28] sm:$0xff]
        %v1526 = vld [vmem:[#allocation2 + $0x30] sm:$0xff]
        %v1527 = vld [vmem:[#allocation2 + $0x38] sm:$0xff]
        %v1528 = vld [vmem:[#allocation2 + $0x40] sm:$0xff]
        %v1529 = vld [vmem:[#allocation2 + $0x48] sm:$0xff]
        %v1530 = vld [vmem:[#allocation2 + $0x50] sm:$0xff]
        %v1531 = vld [vmem:[#allocation2 + $0x58] sm:$0xff]
        %v1532 = vld [vmem:[#allocation2 + $0x60] sm:$0xff]
        %v1533 = vld [vmem:[#allocation2 + $0x68] sm:$0xff]
        %v1534 = vld [vmem:[#allocation2 + $0x70] sm:$0xff]
        %v1535 = vld [vmem:[#allocation2 + $0x78] sm:$0xff]
        %v1536 = vld [vmem:[#allocation2 + $0x80] sm:$0xff]
        %v1537 = vld [vmem:[#allocation2 + $0x88] sm:$0xff]
        %v1538 = vld [vmem:[#allocation2 + $0x90] sm:$0xff]
        %v1539 = vld [vmem:[#allocation2 + $0x98] sm:$0xff]
        %v1540 = vld [vmem:[#allocation2 + $0xa0] sm:$0xff]
        %v1541 = vld [vmem:[#allocation2 + $0xa8] sm:$0xff]
        %v1542 = vld [vmem:[#allocation2 + $0xb0] sm:$0xff]
        %v1543 = vld [vmem:[#allocation2 + $0xb8] sm:$0xff]
        %v1544 = vld [vmem:[#allocation2 + $0xc0] sm:$0xff]
        %v1545 = vld [vmem:[#allocation2 + $0xc8] sm:$0xff]
        %v1546 = vld [vmem:[#allocation2 + $0xd0] sm:$0xff]
        %v1547 = vld [vmem:[#allocation2 + $0xd8] sm:$0xff]
        %v1548 = vld [vmem:[#allocation2 + $0xe0] sm:$0xff]
        %v1549 = vld [vmem:[#allocation2 + $0xe8] sm:$0xff]
        %v1550 = vld [vmem:[#allocation2 + $0xf0] sm:$0xff]
        %v1551 = vld [vmem:[#allocation2 + $0xf8] sm:$0xff]
        %1553 = vset.pattern.permute.xlu0 0
        %1554 = vperm.xlu0 %1553, %v1488
        %v1555 = vpop.permute.xlu0 %1554
        %1558 = vset.pattern.permute.xlu0 0
        %1559 = vperm.xlu0 %1558, %v1489
        %v1560 = vpop.permute.xlu0 %1559
        %1563 = vset.pattern.permute.xlu0 0
        %1564 = vperm.xlu0 %1563, %v1490
        %v1565 = vpop.permute.xlu0 %1564
        %1568 = vset.pattern.permute.xlu0 0
        %1569 = vperm.xlu0 %1568, %v1491
        %v1570 = vpop.permute.xlu0 %1569
        %1573 = vset.pattern.permute.xlu0 0
        %1574 = vperm.xlu0 %1573, %v1492
        %v1575 = vpop.permute.xlu0 %1574
        %1578 = vset.pattern.permute.xlu0 0
        %1579 = vperm.xlu0 %1578, %v1493
        %v1580 = vpop.permute.xlu0 %1579
        %1583 = vset.pattern.permute.xlu0 0
        %1584 = vperm.xlu0 %1583, %v1494
        %v1585 = vpop.permute.xlu0 %1584
        %1588 = vset.pattern.permute.xlu0 0
        %1589 = vperm.xlu0 %1588, %v1495
        %v1590 = vpop.permute.xlu0 %1589
        %1593 = vset.pattern.permute.xlu0 0
        %1594 = vperm.xlu0 %1593, %v1496
        %v1595 = vpop.permute.xlu0 %1594
        %1598 = vset.pattern.permute.xlu0 0
        %1599 = vperm.xlu0 %1598, %v1497
        %v1600 = vpop.permute.xlu0 %1599
        %1603 = vset.pattern.permute.xlu0 0
        %1604 = vperm.xlu0 %1603, %v1498
        %v1605 = vpop.permute.xlu0 %1604
        %1608 = vset.pattern.permute.xlu0 0
        %1609 = vperm.xlu0 %1608, %v1499
        %v1610 = vpop.permute.xlu0 %1609
        %1613 = vset.pattern.permute.xlu0 0
        %1614 = vperm.xlu0 %1613, %v1500
        %v1615 = vpop.permute.xlu0 %1614
        %1618 = vset.pattern.permute.xlu0 0
        %1619 = vperm.xlu0 %1618, %v1501
        %v1620 = vpop.permute.xlu0 %1619
        %1623 = vset.pattern.permute.xlu0 0
        %1624 = vperm.xlu0 %1623, %v1502
        %v1625 = vpop.permute.xlu0 %1624
        %1628 = vset.pattern.permute.xlu0 0
        %1629 = vperm.xlu0 %1628, %v1503
        %v1630 = vpop.permute.xlu0 %1629
        %1633 = vset.pattern.permute.xlu0 0
        %1634 = vperm.xlu0 %1633, %v1504
        %v1635 = vpop.permute.xlu0 %1634
        %1638 = vset.pattern.permute.xlu0 0
        %1639 = vperm.xlu0 %1638, %v1505
        %v1640 = vpop.permute.xlu0 %1639
        %1643 = vset.pattern.permute.xlu0 0
        %1644 = vperm.xlu0 %1643, %v1506
        %v1645 = vpop.permute.xlu0 %1644
        %1648 = vset.pattern.permute.xlu0 0
        %1649 = vperm.xlu0 %1648, %v1507
        %v1650 = vpop.permute.xlu0 %1649
        %1653 = vset.pattern.permute.xlu0 0
        %1654 = vperm.xlu0 %1653, %v1508
        %v1655 = vpop.permute.xlu0 %1654
        %1658 = vset.pattern.permute.xlu0 0
        %1659 = vperm.xlu0 %1658, %v1509
        %v1660 = vpop.permute.xlu0 %1659
        %1663 = vset.pattern.permute.xlu0 0
        %1664 = vperm.xlu0 %1663, %v1510
        %v1665 = vpop.permute.xlu0 %1664
        %1668 = vset.pattern.permute.xlu0 0
        %1669 = vperm.xlu0 %1668, %v1511
        %v1670 = vpop.permute.xlu0 %1669
        %1673 = vset.pattern.permute.xlu0 0
        %1674 = vperm.xlu0 %1673, %v1512
        %v1675 = vpop.permute.xlu0 %1674
        %1678 = vset.pattern.permute.xlu0 0
        %1679 = vperm.xlu0 %1678, %v1513
        %v1680 = vpop.permute.xlu0 %1679
        %1683 = vset.pattern.permute.xlu0 0
        %1684 = vperm.xlu0 %1683, %v1514
        %v1685 = vpop.permute.xlu0 %1684
        %1688 = vset.pattern.permute.xlu0 0
        %1689 = vperm.xlu0 %1688, %v1515
        %v1690 = vpop.permute.xlu0 %1689
        %1693 = vset.pattern.permute.xlu0 0
        %1694 = vperm.xlu0 %1693, %v1516
        %v1695 = vpop.permute.xlu0 %1694
        %1698 = vset.pattern.permute.xlu0 0
        %1699 = vperm.xlu0 %1698, %v1517
        %v1700 = vpop.permute.xlu0 %1699
        %1703 = vset.pattern.permute.xlu0 0
        %1704 = vperm.xlu0 %1703, %v1518
        %v1705 = vpop.permute.xlu0 %1704
        %1708 = vset.pattern.permute.xlu0 0
        %1709 = vperm.xlu0 %1708, %v1519
        %v1710 = vpop.permute.xlu0 %1709
        %v1712 = vmul.f32 %v1555, %v1520
        %v1713 = vmul.f32 %v1560, %v1521
        %v1714 = vmul.f32 %v1565, %v1522
        %v1715 = vmul.f32 %v1570, %v1523
        %v1716 = vmul.f32 %v1575, %v1524
        %v1717 = vmul.f32 %v1580, %v1525
        %v1718 = vmul.f32 %v1585, %v1526
        %v1719 = vmul.f32 %v1590, %v1527
        %v1720 = vmul.f32 %v1595, %v1528
        %v1721 = vmul.f32 %v1600, %v1529
        %v1722 = vmul.f32 %v1605, %v1530
        %v1723 = vmul.f32 %v1610, %v1531
        %v1724 = vmul.f32 %v1615, %v1532
        %v1725 = vmul.f32 %v1620, %v1533
        %v1726 = vmul.f32 %v1625, %v1534
        %v1727 = vmul.f32 %v1630, %v1535
        %v1728 = vmul.f32 %v1635, %v1536
        %v1729 = vmul.f32 %v1640, %v1537
        %v1730 = vmul.f32 %v1645, %v1538
        %v1731 = vmul.f32 %v1650, %v1539
        %v1732 = vmul.f32 %v1655, %v1540
        %v1733 = vmul.f32 %v1660, %v1541
        %v1734 = vmul.f32 %v1665, %v1542
        %v1735 = vmul.f32 %v1670, %v1543
        %v1736 = vmul.f32 %v1675, %v1544
        %v1737 = vmul.f32 %v1680, %v1545
        %v1738 = vmul.f32 %v1685, %v1546
        %v1739 = vmul.f32 %v1690, %v1547
        %v1740 = vmul.f32 %v1695, %v1548
        %v1741 = vmul.f32 %v1700, %v1549
        %v1742 = vmul.f32 %v1705, %v1550
        %v1743 = vmul.f32 %v1710, %v1551
        %v1744 = vld [vmem:[%s3] sm:$0x1]
        %v1746 = vlaneseq
        %v1747 = vshrl.u32 %v1746, 7
        %v1748 = vsub.s32 0, %v1747
        %v1749 = vrot.slane %v1744, %v1748
        %v1751 = vadd.f32 %v1712, %v1749
        %v1752 = vadd.f32 %v1713, %v1749
        %v1753 = vadd.f32 %v1714, %v1749
        %v1754 = vadd.f32 %v1715, %v1749
        %v1755 = vadd.f32 %v1716, %v1749
        %v1756 = vadd.f32 %v1717, %v1749
        %v1757 = vadd.f32 %v1718, %v1749
        %v1758 = vadd.f32 %v1719, %v1749
        %v1759 = vadd.f32 %v1720, %v1749
        %v1760 = vadd.f32 %v1721, %v1749
        %v1761 = vadd.f32 %v1722, %v1749
        %v1762 = vadd.f32 %v1723, %v1749
        %v1763 = vadd.f32 %v1724, %v1749
        %v1764 = vadd.f32 %v1725, %v1749
        %v1765 = vadd.f32 %v1726, %v1749
        %v1766 = vadd.f32 %v1727, %v1749
        %v1767 = vadd.f32 %v1728, %v1749
        %v1768 = vadd.f32 %v1729, %v1749
        %v1769 = vadd.f32 %v1730, %v1749
        %v1770 = vadd.f32 %v1731, %v1749
        %v1771 = vadd.f32 %v1732, %v1749
        %v1772 = vadd.f32 %v1733, %v1749
        %v1773 = vadd.f32 %v1734, %v1749
        %v1774 = vadd.f32 %v1735, %v1749
        %v1775 = vadd.f32 %v1736, %v1749
        %v1776 = vadd.f32 %v1737, %v1749
        %v1777 = vadd.f32 %v1738, %v1749
        %v1778 = vadd.f32 %v1739, %v1749
        %v1779 = vadd.f32 %v1740, %v1749
        %v1780 = vadd.f32 %v1741, %v1749
        %v1781 = vadd.f32 %v1742, %v1749
        %v1782 = vadd.f32 %v1743, %v1749
        %v1783 = vld [vmem:[%s377] sm:$0xf]
        %v1784 = vld [vmem:[%s377 + $0x4] sm:$0xf]
        %v1785 = vld [vmem:[%s377 + $0x8] sm:$0xf]
        %v1786 = vld [vmem:[%s377 + $0xc] sm:$0xf]
        %v1787 = vld [vmem:[%s377 + $0x10] sm:$0xf]
        %v1788 = vld [vmem:[%s377 + $0x14] sm:$0xf]
        %v1789 = vld [vmem:[%s377 + $0x18] sm:$0xf]
        %v1790 = vld [vmem:[%s377 + $0x1c] sm:$0xf]
        %v1791 = vld [vmem:[%s377 + $0x20] sm:$0xf]
        %v1792 = vld [vmem:[%s377 + $0x24] sm:$0xf]
        %v1793 = vld [vmem:[%s377 + $0x28] sm:$0xf]
        %v1794 = vld [vmem:[%s377 + $0x2c] sm:$0xf]
        %v1795 = vld [vmem:[%s377 + $0x30] sm:$0xf]
        %v1796 = vld [vmem:[%s377 + $0x34] sm:$0xf]
        %v1797 = vld [vmem:[%s377 + $0x38] sm:$0xf]
        %v1798 = vld [vmem:[%s377 + $0x3c] sm:$0xf]
        %v1799 = vld [vmem:[%s377 + $0x40] sm:$0xf]
        %v1800 = vld [vmem:[%s377 + $0x44] sm:$0xf]
        %v1801 = vld [vmem:[%s377 + $0x48] sm:$0xf]
        %v1802 = vld [vmem:[%s377 + $0x4c] sm:$0xf]
        %v1803 = vld [vmem:[%s377 + $0x50] sm:$0xf]
        %v1804 = vld [vmem:[%s377 + $0x54] sm:$0xf]
        %v1805 = vld [vmem:[%s377 + $0x58] sm:$0xf]
        %v1806 = vld [vmem:[%s377 + $0x5c] sm:$0xf]
        %v1807 = vld [vmem:[%s377 + $0x60] sm:$0xf]
        %v1808 = vld [vmem:[%s377 + $0x64] sm:$0xf]
        %v1809 = vld [vmem:[%s377 + $0x68] sm:$0xf]
        %v1810 = vld [vmem:[%s377 + $0x6c] sm:$0xf]
        %v1811 = vld [vmem:[%s377 + $0x70] sm:$0xf]
        %v1812 = vld [vmem:[%s377 + $0x74] sm:$0xf]
        %v1813 = vld [vmem:[%s377 + $0x78] sm:$0xf]
        %v1814 = vld [vmem:[%s377 + $0x7c] sm:$0xf]
        %v1815 = vld [vmem:[%s5] sm:$0xf]
        %v1816 = vld [vmem:[%s5 + $0x4] sm:$0xf]
        %v1817 = vld [vmem:[%s5 + $0x8] sm:$0xf]
        %v1818 = vld [vmem:[%s5 + $0xc] sm:$0xf]
        %v1819 = vld [vmem:[%s5 + $0x10] sm:$0xf]
        %v1820 = vld [vmem:[%s5 + $0x14] sm:$0xf]
        %v1821 = vld [vmem:[%s5 + $0x18] sm:$0xf]
        %v1822 = vld [vmem:[%s5 + $0x1c] sm:$0xf]
        %v1823 = vld [vmem:[%s5 + $0x20] sm:$0xf]
        %v1824 = vld [vmem:[%s5 + $0x24] sm:$0xf]
        %v1825 = vld [vmem:[%s5 + $0x28] sm:$0xf]
        %v1826 = vld [vmem:[%s5 + $0x2c] sm:$0xf]
        %v1827 = vld [vmem:[%s5 + $0x30] sm:$0xf]
        %v1828 = vld [vmem:[%s5 + $0x34] sm:$0xf]
        %v1829 = vld [vmem:[%s5 + $0x38] sm:$0xf]
        %v1830 = vld [vmem:[%s5 + $0x3c] sm:$0xf]
        %v1831 = vld [vmem:[%s6] sm:$0x1]
        %v1833 = vlaneseq
        %v1834 = vshrl.u32 %v1833, 7
        %v1835 = vsub.s32 0, %v1834
        %v1836 = vrot.slane %v1831, %v1835
        %v1870 = vunpack.c.l.b16 %v1783
        %v1871 = vunpack.c.l.b16 %v1784
        %v1872 = vunpack.c.l.b16 %v1785
        %v1873 = vunpack.c.l.b16 %v1786
        %v1874 = vunpack.c.l.b16 %v1787
        %v1875 = vunpack.c.l.b16 %v1788
        %v1876 = vunpack.c.l.b16 %v1789
        %v1877 = vunpack.c.l.b16 %v1790
        %v1878 = vunpack.c.l.b16 %v1791
        %v1879 = vunpack.c.l.b16 %v1792
        %v1880 = vunpack.c.l.b16 %v1793
        %v1881 = vunpack.c.l.b16 %v1794
        %v1882 = vunpack.c.l.b16 %v1795
        %v1883 = vunpack.c.l.b16 %v1796
        %v1884 = vunpack.c.l.b16 %v1797
        %v1885 = vunpack.c.l.b16 %v1798
        %v1886 = vunpack.c.l.b16 %v1799
        %v1887 = vunpack.c.l.b16 %v1800
        %v1888 = vunpack.c.l.b16 %v1801
        %v1889 = vunpack.c.l.b16 %v1802
        %v1890 = vunpack.c.l.b16 %v1803
        %v1891 = vunpack.c.l.b16 %v1804
        %v1892 = vunpack.c.l.b16 %v1805
        %v1893 = vunpack.c.l.b16 %v1806
        %v1894 = vunpack.c.l.b16 %v1807
        %v1895 = vunpack.c.l.b16 %v1808
        %v1896 = vunpack.c.l.b16 %v1809
        %v1897 = vunpack.c.l.b16 %v1810
        %v1898 = vunpack.c.l.b16 %v1811
        %v1899 = vunpack.c.l.b16 %v1812
        %v1900 = vunpack.c.l.b16 %v1813
        %v1901 = vunpack.c.l.b16 %v1814
        %v1902 = vpack.c.b16 %v1871, %v1870
        %v1903 = vpack.c.b16 %v1873, %v1872
        %v1904 = vpack.c.b16 %v1875, %v1874
        %v1905 = vpack.c.b16 %v1877, %v1876
        %v1906 = vpack.c.b16 %v1879, %v1878
        %v1907 = vpack.c.b16 %v1881, %v1880
        %v1908 = vpack.c.b16 %v1883, %v1882
        %v1909 = vpack.c.b16 %v1885, %v1884
        %v1910 = vpack.c.b16 %v1887, %v1886
        %v1911 = vpack.c.b16 %v1889, %v1888
        %v1912 = vpack.c.b16 %v1891, %v1890
        %v1913 = vpack.c.b16 %v1893, %v1892
        %v1914 = vpack.c.b16 %v1895, %v1894
        %v1915 = vpack.c.b16 %v1897, %v1896
        %v1916 = vpack.c.b16 %v1899, %v1898
        %v1917 = vpack.c.b16 %v1901, %v1900
        %v1950 = vunpack.c.l.b16 %v1815
        %v1951 = vunpack.c.l.b16 %v1816
        %v1952 = vunpack.c.l.b16 %v1817
        %v1953 = vunpack.c.l.b16 %v1818
        %v1954 = vunpack.c.l.b16 %v1819
        %v1955 = vunpack.c.l.b16 %v1820
        %v1956 = vunpack.c.l.b16 %v1821
        %v1957 = vunpack.c.l.b16 %v1822
        %v1958 = vunpack.c.l.b16 %v1823
        %v1959 = vunpack.c.l.b16 %v1824
        %v1960 = vunpack.c.l.b16 %v1825
        %v1961 = vunpack.c.l.b16 %v1826
        %v1962 = vunpack.c.l.b16 %v1827
        %v1963 = vunpack.c.l.b16 %v1828
        %v1964 = vunpack.c.l.b16 %v1829
        %v1965 = vunpack.c.l.b16 %v1830
        %v1966 = vpack.c.b16 %v1951, %v1950
        %v1967 = vpack.c.b16 %v1953, %v1952
        %v1968 = vpack.c.b16 %v1955, %v1954
        %v1969 = vpack.c.b16 %v1957, %v1956
        %v1970 = vpack.c.b16 %v1959, %v1958
        %v1971 = vpack.c.b16 %v1961, %v1960
        %v1972 = vpack.c.b16 %v1963, %v1962
        %v1973 = vpack.c.b16 %v1965, %v1964
        %1982 = vmatprep.subr.bf16.mxu0 0
        %1983 = vmatpush1.bf16.msra.mxu0 %v1966
        %1984 = vmatprep.subr.bf16.mxu0 0
        %1985 = vmatpush1.bf16.msra.mxu0 %v1967
        %1986 = vmatprep.subr.bf16.mxu0 0
        %1987 = vmatpush1.bf16.msra.mxu0 %v1968
        %1988 = vmatprep.subr.bf16.mxu0 0
        %1989 = vmatpush1.bf16.msra.mxu0 %v1969
        %1990 = vmatprep.subr.bf16.mxu0 0
        %1991 = vmatpush1.bf16.msra.mxu0 %v1970
        %1992 = vmatprep.subr.bf16.mxu0 0
        %1993 = vmatpush1.bf16.msra.mxu0 %v1971
        %1994 = vmatprep.subr.bf16.mxu0 0
        %1995 = vmatpush1.bf16.msra.mxu0 %v1972
        %1996 = vmatprep.subr.bf16.mxu0 0
        %1997 = vmatpush1.bf16.msra.mxu0 %v1973
        %1998 = vmatprep.subr.bf16.mxu0 0
        %1999 = vmatpush1.bf16.msra.mxu0 0
        %2000 = vmatprep.subr.bf16.mxu0 0
        %2001 = vmatpush1.bf16.msra.mxu0 0
        %2002 = vmatprep.subr.bf16.mxu0 0
        %2003 = vmatpush1.bf16.msra.mxu0 0
        %2004 = vmatprep.subr.bf16.mxu0 0
        %2005 = vmatpush1.bf16.msra.mxu0 0
        %2006 = vmatprep.subr.bf16.mxu0 0
        %2007 = vmatpush1.bf16.msra.mxu0 0
        %2008 = vmatprep.subr.bf16.mxu0 0
        %2009 = vmatpush1.bf16.msra.mxu0 0
        %2010 = vmatprep.subr.bf16.mxu0 0
        %2011 = vmatpush1.bf16.msra.mxu0 0
        %2012 = vmatprep.subr.bf16.mxu0 0
        %2013 = vmatpush1.bf16.msra.mxu0 0
        %2014 = vmatprep.mubr.bf16.mxu0 0
        %2015 = vmatmul.mubr.bf16.gmra.mrb[0].mxu0 %v1902
        %v2016 = vpop.f32.mrb[0].mxu0
        %v2017 = vadd.f32 %v1836, %v2016
        %v2018 = vpop.f32.mrb[0].mxu0
        %v2019 = vpop.f32.mrb[0].mxu0
        %v2020 = vadd.f32 %v1836, %v2019
        %v2021 = vpop.f32.mrb[0].mxu0
        %2022 = vmatprep.mubr.bf16.mxu0 0
        %2023 = vmatmul.mubr.bf16.gmra.mrb[0].mxu0 %v1903
        %v2024 = vpop.f32.mrb[0].mxu0
        %v2025 = vadd.f32 %v1836, %v2024
        %v2026 = vpop.f32.mrb[0].mxu0
        %v2027 = vpop.f32.mrb[0].mxu0
        %v2028 = vadd.f32 %v1836, %v2027
        %v2029 = vpop.f32.mrb[0].mxu0
        %2030 = vmatprep.mubr.bf16.mxu0 0
        %2031 = vmatmul.mubr.bf16.gmra.mrb[0].mxu0 %v1904
        %v2032 = vpop.f32.mrb[0].mxu0
        %v2033 = vadd.f32 %v1836, %v2032
        %v2034 = vpop.f32.mrb[0].mxu0
        %v2035 = vpop.f32.mrb[0].mxu0
        %v2036 = vadd.f32 %v1836, %v2035
        %v2037 = vpop.f32.mrb[0].mxu0
        %2038 = vmatprep.mubr.bf16.mxu0 0
        %2039 = vmatmul.mubr.bf16.gmra.mrb[0].mxu0 %v1905
        %v2040 = vpop.f32.mrb[0].mxu0
        %v2041 = vadd.f32 %v1836, %v2040
        %v2042 = vpop.f32.mrb[0].mxu0
        %v2043 = vpop.f32.mrb[0].mxu0
        %v2044 = vadd.f32 %v1836, %v2043
        %v2045 = vpop.f32.mrb[0].mxu0
        %2046 = vmatprep.mubr.bf16.mxu0 0
        %2047 = vmatmul.mubr.bf16.gmra.mrb[0].mxu0 %v1906
        %v2048 = vpop.f32.mrb[0].mxu0
        %v2049 = vadd.f32 %v1836, %v2048
        %v2050 = vpop.f32.mrb[0].mxu0
        %v2051 = vpop.f32.mrb[0].mxu0
        %v2052 = vadd.f32 %v1836, %v2051
        %v2053 = vpop.f32.mrb[0].mxu0
        %2054 = vmatprep.mubr.bf16.mxu0 0
        %2055 = vmatmul.mubr.bf16.gmra.mrb[0].mxu0 %v1907
        %v2056 = vpop.f32.mrb[0].mxu0
        %v2057 = vadd.f32 %v1836, %v2056
        %v2058 = vpop.f32.mrb[0].mxu0
        %v2059 = vpop.f32.mrb[0].mxu0
        %v2060 = vadd.f32 %v1836, %v2059
        %v2061 = vpop.f32.mrb[0].mxu0
        %2062 = vmatprep.mubr.bf16.mxu0 0
        %2063 = vmatmul.mubr.bf16.gmra.mrb[0].mxu0 %v1908
        %v2064 = vpop.f32.mrb[0].mxu0
        %v2065 = vadd.f32 %v1836, %v2064
        %v2066 = vpop.f32.mrb[0].mxu0
        %v2067 = vpop.f32.mrb[0].mxu0
        %v2068 = vadd.f32 %v1836, %v2067
        %v2069 = vpop.f32.mrb[0].mxu0
        %2070 = vmatprep.mubr.bf16.mxu0 0
        %2071 = vmatmul.mubr.bf16.gmra.mrb[0].mxu0 %v1909
        %v2072 = vpop.f32.mrb[0].mxu0
        %v2073 = vadd.f32 %v1836, %v2072
        %v2074 = vpop.f32.mrb[0].mxu0
        %v2075 = vpop.f32.mrb[0].mxu0
        %v2076 = vadd.f32 %v1836, %v2075
        %v2077 = vpop.f32.mrb[0].mxu0
        %2078 = vmatprep.mubr.bf16.mxu0 0
        %2079 = vmatmul.mubr.bf16.gmra.mrb[0].mxu0 %v1910
        %v2080 = vpop.f32.mrb[0].mxu0
        %v2081 = vadd.f32 %v1836, %v2080
        %v2082 = vpop.f32.mrb[0].mxu0
        %v2083 = vpop.f32.mrb[0].mxu0
        %v2084 = vadd.f32 %v1836, %v2083
        %v2085 = vpop.f32.mrb[0].mxu0
        %2086 = vmatprep.mubr.bf16.mxu0 0
        %2087 = vmatmul.mubr.bf16.gmra.mrb[0].mxu0 %v1911
        %v2088 = vpop.f32.mrb[0].mxu0
        %v2089 = vadd.f32 %v1836, %v2088
        %v2090 = vpop.f32.mrb[0].mxu0
        %v2091 = vpop.f32.mrb[0].mxu0
        %v2092 = vadd.f32 %v1836, %v2091
        %v2093 = vpop.f32.mrb[0].mxu0
        %2094 = vmatprep.mubr.bf16.mxu0 0
        %2095 = vmatmul.mubr.bf16.gmra.mrb[0].mxu0 %v1912
        %v2096 = vpop.f32.mrb[0].mxu0
        %v2097 = vadd.f32 %v1836, %v2096
        %v2098 = vpop.f32.mrb[0].mxu0
        %v2099 = vpop.f32.mrb[0].mxu0
        %v2100 = vadd.f32 %v1836, %v2099
        %v2101 = vpop.f32.mrb[0].mxu0
        %2102 = vmatprep.mubr.bf16.mxu0 0
        %2103 = vmatmul.mubr.bf16.gmra.mrb[0].mxu0 %v1913
        %v2104 = vpop.f32.mrb[0].mxu0
        %v2105 = vadd.f32 %v1836, %v2104
        %v2106 = vpop.f32.mrb[0].mxu0
        %v2107 = vpop.f32.mrb[0].mxu0
        %v2108 = vadd.f32 %v1836, %v2107
        %v2109 = vpop.f32.mrb[0].mxu0
        %2110 = vmatprep.mubr.bf16.mxu0 0
        %2111 = vmatmul.mubr.bf16.gmra.mrb[0].mxu0 %v1914
        %v2112 = vpop.f32.mrb[0].mxu0
        %v2113 = vadd.f32 %v1836, %v2112
        %v2114 = vpop.f32.mrb[0].mxu0
        %v2115 = vpop.f32.mrb[0].mxu0
        %v2116 = vadd.f32 %v1836, %v2115
        %v2117 = vpop.f32.mrb[0].mxu0
        %2118 = vmatprep.mubr.bf16.mxu0 0
        %2119 = vmatmul.mubr.bf16.gmra.mrb[0].mxu0 %v1915
        %v2120 = vpop.f32.mrb[0].mxu0
        %v2121 = vadd.f32 %v1836, %v2120
        %v2122 = vpop.f32.mrb[0].mxu0
        %v2123 = vpop.f32.mrb[0].mxu0
        %v2124 = vadd.f32 %v1836, %v2123
        %v2125 = vpop.f32.mrb[0].mxu0
        %2126 = vmatprep.mubr.bf16.mxu0 0
        %2127 = vmatmul.mubr.bf16.gmra.mrb[0].mxu0 %v1916
        %v2128 = vpop.f32.mrb[0].mxu0
        %v2129 = vadd.f32 %v1836, %v2128
        %v2130 = vpop.f32.mrb[0].mxu0
        %v2131 = vpop.f32.mrb[0].mxu0
        %v2132 = vadd.f32 %v1836, %v2131
        %v2133 = vpop.f32.mrb[0].mxu0
        %2134 = vmatprep.mubr.bf16.mxu0 0
        %2135 = vmatmul.mubr.bf16.gmra.mrb[0].mxu0 %v1917
        %v2136 = vpop.f32.mrb[0].mxu0
        %v2137 = vadd.f32 %v1836, %v2136
        %v2138 = vpop.f32.mrb[0].mxu0
        %v2139 = vpop.f32.mrb[0].mxu0
        %v2140 = vadd.f32 %v1836, %v2139
        %v2141 = vpop.f32.mrb[0].mxu0
        %2142 = vdwg.mxu0
        %s2143 = sld [smem:[#allocation3]]
        %v2144 = vstv %s2143
        %v2145 = vmul.f32 %v2144, %v1751
        %v2146 = vmul.f32 %v2144, %v1752
        %v2147 = vmul.f32 %v2144, %v1753
        %v2148 = vmul.f32 %v2144, %v1754
        %v2149 = vmul.f32 %v2144, %v1755
        %v2150 = vmul.f32 %v2144, %v1756
        %v2151 = vmul.f32 %v2144, %v1757
        %v2152 = vmul.f32 %v2144, %v1758
        %v2153 = vmul.f32 %v2144, %v1759
        %v2154 = vmul.f32 %v2144, %v1760
        %v2155 = vmul.f32 %v2144, %v1761
        %v2156 = vmul.f32 %v2144, %v1762
        %v2157 = vmul.f32 %v2144, %v1763
        %v2158 = vmul.f32 %v2144, %v1764
        %v2159 = vmul.f32 %v2144, %v1765
        %v2160 = vmul.f32 %v2144, %v1766
        %v2161 = vmul.f32 %v2144, %v1767
        %v2162 = vmul.f32 %v2144, %v1768
        %v2163 = vmul.f32 %v2144, %v1769
        %v2164 = vmul.f32 %v2144, %v1770
        %v2165 = vmul.f32 %v2144, %v1771
        %v2166 = vmul.f32 %v2144, %v1772
        %v2167 = vmul.f32 %v2144, %v1773
        %v2168 = vmul.f32 %v2144, %v1774
        %v2169 = vmul.f32 %v2144, %v1775
        %v2170 = vmul.f32 %v2144, %v1776
        %v2171 = vmul.f32 %v2144, %v1777
        %v2172 = vmul.f32 %v2144, %v1778
        %v2173 = vmul.f32 %v2144, %v1779
        %v2174 = vmul.f32 %v2144, %v1780
        %v2175 = vmul.f32 %v2144, %v1781
        %v2176 = vmul.f32 %v2144, %v1782
        %s2177 = ssub.f32 1.0, %s2143
        %v2178 = vstv %s2177
        %v2179 = vmul.f32 %v2178, %v2017
        %v2180 = vmul.f32 %v2178, %v2020
        %v2181 = vmul.f32 %v2178, %v2025
        %v2182 = vmul.f32 %v2178, %v2028
        %v2183 = vmul.f32 %v2178, %v2033
        %v2184 = vmul.f32 %v2178, %v2036
        %v2185 = vmul.f32 %v2178, %v2041
        %v2186 = vmul.f32 %v2178, %v2044
        %v2187 = vmul.f32 %v2178, %v2049
        %v2188 = vmul.f32 %v2178, %v2052
        %v2189 = vmul.f32 %v2178, %v2057
        %v2190 = vmul.f32 %v2178, %v2060
        %v2191 = vmul.f32 %v2178, %v2065
        %v2192 = vmul.f32 %v2178, %v2068
        %v2193 = vmul.f32 %v2178, %v2073
        %v2194 = vmul.f32 %v2178, %v2076
        %v2195 = vmul.f32 %v2178, %v2081
        %v2196 = vmul.f32 %v2178, %v2084
        %v2197 = vmul.f32 %v2178, %v2089
        %v2198 = vmul.f32 %v2178, %v2092
        %v2199 = vmul.f32 %v2178, %v2097
        %v2200 = vmul.f32 %v2178, %v2100
        %v2201 = vmul.f32 %v2178, %v2105
        %v2202 = vmul.f32 %v2178, %v2108
        %v2203 = vmul.f32 %v2178, %v2113
        %v2204 = vmul.f32 %v2178, %v2116
        %v2205 = vmul.f32 %v2178, %v2121
        %v2206 = vmul.f32 %v2178, %v2124
        %v2207 = vmul.f32 %v2178, %v2129
        %v2208 = vmul.f32 %v2178, %v2132
        %v2209 = vmul.f32 %v2178, %v2137
        %v2210 = vmul.f32 %v2178, %v2140
        %v2211 = vadd.f32 %v2145, %v2179
        %v2212 = vadd.f32 %v2146, %v2180
        %v2213 = vadd.f32 %v2147, %v2181
        %v2214 = vadd.f32 %v2148, %v2182
        %v2215 = vadd.f32 %v2149, %v2183
        %v2216 = vadd.f32 %v2150, %v2184
        %v2217 = vadd.f32 %v2151, %v2185
        %v2218 = vadd.f32 %v2152, %v2186
        %v2219 = vadd.f32 %v2153, %v2187
        %v2220 = vadd.f32 %v2154, %v2188
        %v2221 = vadd.f32 %v2155, %v2189
        %v2222 = vadd.f32 %v2156, %v2190
        %v2223 = vadd.f32 %v2157, %v2191
        %v2224 = vadd.f32 %v2158, %v2192
        %v2225 = vadd.f32 %v2159, %v2193
        %v2226 = vadd.f32 %v2160, %v2194
        %v2227 = vadd.f32 %v2161, %v2195
        %v2228 = vadd.f32 %v2162, %v2196
        %v2229 = vadd.f32 %v2163, %v2197
        %v2230 = vadd.f32 %v2164, %v2198
        %v2231 = vadd.f32 %v2165, %v2199
        %v2232 = vadd.f32 %v2166, %v2200
        %v2233 = vadd.f32 %v2167, %v2201
        %v2234 = vadd.f32 %v2168, %v2202
        %v2235 = vadd.f32 %v2169, %v2203
        %v2236 = vadd.f32 %v2170, %v2204
        %v2237 = vadd.f32 %v2171, %v2205
        %v2238 = vadd.f32 %v2172, %v2206
        %v2239 = vadd.f32 %v2173, %v2207
        %v2240 = vadd.f32 %v2174, %v2208
        %v2241 = vadd.f32 %v2175, %v2209
        %v2242 = vadd.f32 %v2176, %v2210
        %2243 = vst [vmem:[%s383] sm:$0xff] %v2211
        %2244 = vst [vmem:[%s383 + $0x8] sm:$0xff] %v2212
        %2245 = vst [vmem:[%s383 + $0x10] sm:$0xff] %v2213
        %2246 = vst [vmem:[%s383 + $0x18] sm:$0xff] %v2214
        %2247 = vst [vmem:[%s383 + $0x20] sm:$0xff] %v2215
        %2248 = vst [vmem:[%s383 + $0x28] sm:$0xff] %v2216
        %2249 = vst [vmem:[%s383 + $0x30] sm:$0xff] %v2217
        %2250 = vst [vmem:[%s383 + $0x38] sm:$0xff] %v2218
        %2251 = vst [vmem:[%s383 + $0x40] sm:$0xff] %v2219
        %2252 = vst [vmem:[%s383 + $0x48] sm:$0xff] %v2220
        %2253 = vst [vmem:[%s383 + $0x50] sm:$0xff] %v2221
        %2254 = vst [vmem:[%s383 + $0x58] sm:$0xff] %v2222
        %2255 = vst [vmem:[%s383 + $0x60] sm:$0xff] %v2223
        %2256 = vst [vmem:[%s383 + $0x68] sm:$0xff] %v2224
        %2257 = vst [vmem:[%s383 + $0x70] sm:$0xff] %v2225
        %2258 = vst [vmem:[%s383 + $0x78] sm:$0xff] %v2226
        %2259 = vst [vmem:[%s383 + $0x80] sm:$0xff] %v2227
        %2260 = vst [vmem:[%s383 + $0x88] sm:$0xff] %v2228
        %2261 = vst [vmem:[%s383 + $0x90] sm:$0xff] %v2229
        %2262 = vst [vmem:[%s383 + $0x98] sm:$0xff] %v2230
        %2263 = vst [vmem:[%s383 + $0xa0] sm:$0xff] %v2231
        %2264 = vst [vmem:[%s383 + $0xa8] sm:$0xff] %v2232
        %2265 = vst [vmem:[%s383 + $0xb0] sm:$0xff] %v2233
        %2266 = vst [vmem:[%s383 + $0xb8] sm:$0xff] %v2234
        %2267 = vst [vmem:[%s383 + $0xc0] sm:$0xff] %v2235
        %2268 = vst [vmem:[%s383 + $0xc8] sm:$0xff] %v2236
        %2269 = vst [vmem:[%s383 + $0xd0] sm:$0xff] %v2237
        %2270 = vst [vmem:[%s383 + $0xd8] sm:$0xff] %v2238
        %2271 = vst [vmem:[%s383 + $0xe0] sm:$0xff] %v2239
        %2272 = vst [vmem:[%s383 + $0xe8] sm:$0xff] %v2240
        %2273 = vst [vmem:[%s383 + $0xf0] sm:$0xff] %v2241
        %2274 = vst [vmem:[%s383 + $0xf8] sm:$0xff] %v2242
      $region60: #{simple_gcn_encoder.5} parent=51 // pred_fallthru
        _
      %s2275 = smul.u32 32, %s24
      %p2276 = scmp.lt.s32.totalorder %s2275, 63
      %s2277 = scalar_select %p2276, %s2275, 63
      %s2278 = smul.addr %s2277, 8
      %s2279 = scalar_lea.vmem %s8, %s2278
      // Predicated region
      $region61: #{simple_gcn_encoder.5} parent=51 // pred_check
        %p2280 = pneg %p235
      $region62: #{simple_gcn_encoder.5} parent=51 // pred_check_branch
        %2282 = sbr.rel (%p2280) target = $region64
      $region63: #{simple_gcn_encoder.5} parent=51 // pred_region
        %s2283 = smul.u32 32, %s24
      $region64: #{simple_gcn_encoder.5} parent=51 // pred_fallthru
        _
    $region52: #{simple_gcn_encoder.5} parent=5 // pred_fallthru
      _
    %p2284 = scmp.le.s32.totalorder 2, %s15
    // Predicated region
    $region65: #{simple_gcn_encoder.5} parent=5 // pred_check
      %p2285 = pneg %p2284
    $region66: #{simple_gcn_encoder.5} parent=5 // pred_check_branch
      %2287 = sbr.rel (%p2285) target = $region68
    $region67: #{simple_gcn_encoder.5} parent=5 // pred_region
      %s2288 = ssub.s32 %s15, 2
      // Predicated region
      $region69: #{simple_gcn_encoder.5} parent=67 // pred_check
        %p2289 = pneg %p241
      $region70: #{simple_gcn_encoder.5} parent=67 // pred_check_branch
        %2291 = sbr.rel (%p2289) target = $region72
      $region71: #{simple_gcn_encoder.5} parent=67 // pred_region
        %s2292 = smul.u32 32, %s26
        %p2293 = scmp.lt.s32.totalorder %s2292, 63
        %s2294 = scalar_select %p2293, %s2292, 63
        %s2295 = smul.addr %s2294, 8
        %s2296 = scalar_lea.vmem %s8, %s2295
      $region72: #{simple_gcn_encoder.5} parent=67 // pred_fallthru
        _
    $region68: #{simple_gcn_encoder.5} parent=5 // pred_fallthru
      _
  $region6: #{simple_gcn_encoder.5} parent=0 // loop_footer
    %s19 = sadd.s32 1, %s15
  $region7: #{simple_gcn_encoder.5} parent=0 // loop_footer_branch
    %14 = sbr.rel target = $region3
  $region8: #{simple_gcn_encoder.5} parent=0 // loop_exit
    _

</llo_original>
